<compile_context>
chip_gen: v5e
topology: v5e:2x2
jax: 0.10.0
libtpu: 0.0.40
codegen_flags: <defaults>
</compile_context>

<pallas_src>
import functools

import jax
import jax.numpy as jnp
from jax.experimental import pallas as pl
from jax.experimental.pallas import tpu as pltpu

_NEG_INF = -1e30


def _round_up(x, m):
    return ((x + m - 1) // m) * m


def _vmem_limit_bytes():
    """Generation-aware scoped-VMEM limit (v5e/v6e: 128 MiB physical, v7x: 64 MiB/TC)."""
    cap = None
    try:
        cap = getattr(pltpu.get_tpu_info(), "vmem_capacity_bytes", None)
    except Exception:
        cap = None
    if not cap:
        cap = 64 * 1024 * 1024            # conservative default (v7x per-core VMEM)
    return int(min(cap * 3 // 4, 96 * 1024 * 1024))


def _pick_tiles(S, H_pad, itemsize, vmem_limit):
    """Budget-driven (Bt, St): biggest seq tile whose live VMEM blocks fit the budget."""
    # Bt = 8 keeps B_pad // Bt >= 2 batch tiles whenever B >= 16, so the "parallel"
    # batch axis can be sharded across both v7x TensorCores (no effect on v5e/v6e).
    Bt = 8
    budget = int(vmem_limit * 0.7)
    # Blocks that do not scale with St (assume weights double-buffered, to be safe):
    fixed = 2 * 2 * H_pad * H_pad * itemsize          # W1^T, W2^T
    fixed += 2 * 2 * H_pad * 4                        # b1+b2, v (f32)
    fixed += 2 * Bt * H_pad * itemsize                # decoder block (double-buffered)
    fixed += 3 * Bt * H_pad * 4 + 4 * Bt * 4          # p2 / acc scratch, ctx out, m, l
    max_st = max(128, _round_up(S, 128))
    St = 128
    for cand in (2048, 1024, 512, 256, 128):
        if cand > max_st:
            continue
        s_pad = _round_up(S, cand)
        live = (fixed
                + 2 * Bt * cand * H_pad * itemsize    # enc tile (double-buffered)
                + 2 * Bt * s_pad * 4)                 # resident attn output block
        if live <= budget:
            St = cand
            break
    return Bt, St


def attention_kernel(enc_ref, dec_ref, w1t_ref, w2t_ref, b_ref, v_ref,
                     ctx_ref, attn_ref,
                     p2_ref, m_ref, l_ref, acc_ref,
                     *, seq_len):
    si = pl.program_id(1)
    n_seq = pl.num_programs(1)
    Bt, St, Hp = enc_ref.shape

    # ---- once per batch tile: decoder projection + folded biases, init online state
    @pl.when(si == 0)
    def _init():
        p2_ref[...] = (jnp.dot(dec_ref[...], w2t_ref[...],
                               preferred_element_type=jnp.float32)
                       + b_ref[...])                           # [Bt, Hp] f32 (b1+b2 folded)
        m_ref[...] = jnp.full_like(m_ref, _NEG_INF)
        l_ref[...] = jnp.zeros_like(l_ref)
        acc_ref[...] = jnp.zeros_like(acc_ref)

    # ---- encoder projection for this seq tile (MXU, f32 accumulation) ----
    enc = enc_ref[...]                                         # [Bt, St, Hp] compute dtype
    p1 = jnp.dot(enc.reshape(Bt * St, Hp), w1t_ref[...],
                 preferred_element_type=jnp.float32)           # [Bt*St, Hp] f32
    e = jnp.tanh(p1.reshape(Bt, St, Hp) + p2_ref[...][:, None, :])

    # scores = v . e  (VPU multiply + XLU lane reduce; N=1 so keep it off the MXU)
    scores = jnp.sum(e * v_ref[...], axis=-1)                  # [Bt, St] f32

    # Mask padded sequence positions — only emitted when padding can exist (static).
    if seq_len % St != 0:
        pos = si * St + jax.lax.broadcasted_iota(jnp.int32, (Bt, St), 1)
        scores = jnp.where(pos < seq_len, scores, _NEG_INF)

    # ---- online softmax + context accumulation ----
    tile_max = jnp.max(scores, axis=-1, keepdims=True)         # [Bt, 1]
    m_new = jnp.maximum(m_ref[...], tile_max)
    alpha = jnp.exp(m_ref[...] - m_new)
    p = jnp.exp(scores - m_new)                                 # [Bt, St] f32
    l_ref[...] = alpha * l_ref[...] + jnp.sum(p, axis=-1, keepdims=True)
    # Context partial: lane-broadcast multiply + sublane (XLU) reduce; overlaps with
    # the MXU work and avoids Bt tiny M=1 matmuls.
    ctx_part = jnp.sum(p[:, :, None] * enc, axis=1)             # [Bt, Hp] f32
    acc_ref[...] = alpha * acc_ref[...] + ctx_part
    m_ref[...] = m_new

    # Stash the raw (masked) scores directly in the resident attn output block.
    off = pl.multiple_of(si * St, St)
    attn_ref[:, pl.ds(off, St)] = scores.astype(attn_ref.dtype)

    # ---- once per batch tile, after the last seq tile ----
    @pl.when(si == n_seq - 1)
    def _finalize():
        inv_l = 1.0 / l_ref[...]                                # exact; epilogue-only
        s_all = attn_ref[...].astype(jnp.float32)
        attn_ref[...] = (jnp.exp(s_all - m_ref[...]) * inv_l).astype(attn_ref.dtype)
        ctx_ref[...] = (acc_ref[...] * inv_l).astype(ctx_ref.dtype)


def attention_forward(decoder_hidden, encoder_outputs, params,
                      *, compute_dtype=jnp.bfloat16):
    """Additive attention forward.

    params: dict with w1 [H,H], b1 [1,H], w2 [H,H], b2 [1,H], v [1,H]
    (PyTorch nn.Linear convention, y = x @ W.T + b).

    compute_dtype: dtype of the streamed matmul data path (default bf16 — the kernel
    is HBM-bound on the encoder stream, so bf16 halves the dominant DMA traffic).
    Accumulation, softmax state and outputs stay f32 / input dtype.
    Use compute_dtype=jnp.float32 for an exact (f32) data path.
    """
    B, S, H = encoder_outputs.shape
    out_dtype = encoder_outputs.dtype
    compute_dtype = jnp.dtype(compute_dtype)
    c_isz = compute_dtype.itemsize

    H_pad = _round_up(H, 128)
    vmem_limit = _vmem_limit_bytes()
    Bt, St = _pick_tiles(S, H_pad, c_isz, vmem_limit)
    S_pad = _round_up(S, St)
    B_pad = _round_up(B, Bt)

    # Zero-pad activations (padded H columns contribute nothing, padded S positions are
    # masked in-kernel, padded B rows are sliced off below) and cast the data path.
    enc_p = jnp.zeros((B_pad, S_pad, H_pad), compute_dtype
                      ).at[:B, :S, :H].set(encoder_outputs.astype(compute_dtype))
    dec_p = jnp.zeros((B_pad, H_pad), compute_dtype
                      ).at[:B, :H].set(decoder_hidden.astype(compute_dtype))
    w1t = jnp.zeros((H_pad, H_pad), compute_dtype
                    ).at[:H, :H].set(params["w1"].T.astype(compute_dtype))
    w2t = jnp.zeros((H_pad, H_pad), compute_dtype
                    ).at[:H, :H].set(params["w2"].T.astype(compute_dtype))
    b12 = jnp.zeros((1, H_pad), jnp.float32).at[:, :H].set(
        (params["b1"] + params["b2"]).astype(jnp.float32).reshape(1, H))
    v_p = jnp.zeros((1, H_pad), jnp.float32).at[:, :H].set(
        params["v"].astype(jnp.float32).reshape(1, H))

    grid = (B_pad // Bt, S_pad // St)
    kernel = functools.partial(attention_kernel, seq_len=S)

    o_isz = jnp.dtype(out_dtype).itemsize
    flops = (2 * B_pad * S_pad * H_pad * H_pad           # W1 projection
             + 2 * B_pad * H_pad * H_pad                  # W2 projection
             + 4 * B_pad * S_pad * H_pad)                 # scores + context
    transcendentals = B_pad * S_pad * H_pad + 2 * B_pad * S_pad
    bytes_accessed = (c_isz * (B_pad * S_pad * H_pad + B_pad * H_pad + 2 * H_pad * H_pad)
                      + 4 * 2 * H_pad
                      + o_isz * (B_pad * H_pad + B_pad * S_pad))
    cost = pl.CostEstimate(flops=flops, transcendentals=transcendentals,
                           bytes_accessed=bytes_accessed)

    def build(single_buffer_consts):
        const_kw = {"pipeline_mode": pl.Buffered(1)} if single_buffer_consts else {}
        return pl.pallas_call(
            kernel,
            out_shape=(
                jax.ShapeDtypeStruct((B_pad, H_pad), out_dtype),
                jax.ShapeDtypeStruct((B_pad, S_pad), out_dtype),
            ),
            grid_spec=pltpu.PrefetchScalarGridSpec(
                num_scalar_prefetch=0,
                grid=grid,
                in_specs=[
                    pl.BlockSpec((Bt, St, H_pad), lambda b, s: (b, s, 0)),        # enc (streamed)
                    pl.BlockSpec((Bt, H_pad), lambda b, s: (b, 0)),               # dec
                    pl.BlockSpec((H_pad, H_pad), lambda b, s: (0, 0), **const_kw),  # W1^T
                    pl.BlockSpec((H_pad, H_pad), lambda b, s: (0, 0), **const_kw),  # W2^T
                    pl.BlockSpec((1, H_pad), lambda b, s: (0, 0), **const_kw),      # b1+b2
                    pl.BlockSpec((1, H_pad), lambda b, s: (0, 0), **const_kw),      # v
                ],
                out_specs=(
                    pl.BlockSpec((Bt, H_pad), lambda b, s: (b, 0)),               # context
                    pl.BlockSpec((Bt, S_pad), lambda b, s: (b, 0)),               # attn weights
                ),
                scratch_shapes=[
                    pltpu.VMEM((Bt, H_pad), jnp.float32),   # decoder projection (+biases)
                    pltpu.VMEM((Bt, 1), jnp.float32),       # running max
                    pltpu.VMEM((Bt, 1), jnp.float32),       # running sum
                    pltpu.VMEM((Bt, H_pad), jnp.float32),   # context accumulator
                ]),
            compiler_params=pltpu.CompilerParams(
                dimension_semantics=("parallel", "arbitrary"),
                vmem_limit_bytes=vmem_limit),
            cost_estimate=cost,
        )

    args = (enc_p, dec_p, w1t, w2t, b12, v_p)
    try:
        ctx_p, attn_p = build(True)(*args)
    except Exception:
        # pipeline_mode=pl.Buffered(1) unsupported on this jax/backend combination:
        # fall back to default double-buffering of the constant operands.
        ctx_p, attn_p = build(False)(*args)

    return ctx_p[:B, :H], attn_p[:B, :S]


def attention_reference(decoder_hidden, encoder_outputs, params):
    """Pure-JAX reference matching the PyTorch forward."""
    dec_exp = jnp.broadcast_to(decoder_hidden[:, None, :], encoder_outputs.shape)
    e = jnp.tanh(encoder_outputs @ params["w1"].T + params["b1"]
                 + dec_exp @ params["w2"].T + params["b2"])
    scores = jnp.squeeze(e @ params["v"].T, axis=2)
    attn = jax.nn.softmax(scores, axis=1)
    context = jnp.squeeze(attn[:, None, :] @ encoder_outputs, axis=1)
    return context, attn


def init_params(key, hidden_dim):
    k1, k2, k3, k4, k5 = jax.random.split(key, 5)
    bound = 1.0 / jnp.sqrt(hidden_dim)
    return {
        "w1": jax.random.uniform(k1, (hidden_dim, hidden_dim), jnp.float32, -bound, bound),
        "b1": jax.random.uniform(k2, (1, hidden_dim), jnp.float32, -bound, bound),
        "w2": jax.random.uniform(k3, (hidden_dim, hidden_dim), jnp.float32, -bound, bound),
        "b2": jax.random.uniform(k4, (1, hidden_dim), jnp.float32, -bound, bound),
        "v":  jax.random.uniform(k5, (1, hidden_dim), jnp.float32, -bound, bound),
    }


if __name__ == "__main__":
    B, S, H = 2, 8, 32
    key = jax.random.PRNGKey(0)
    kp, ke, kd = jax.random.split(key, 3)

    params = init_params(kp, H)
    encoder_outputs = jax.random.normal(ke, (B, S, H), jnp.float32)
    decoder_hidden = jax.random.normal(kd, (B, H), jnp.float32)

    ctx_ref, attn_ref = attention_reference(decoder_hidden, encoder_outputs, params)

    # Exact f32 data path: tight check against the reference.
    ctx32, attn32 = attention_forward(decoder_hidden, encoder_outputs, params,
                                      compute_dtype=jnp.float32)
    jax.block_until_ready((ctx32, attn32))
    assert ctx32.shape == (B, H) and attn32.shape == (B, S)
    assert jnp.allclose(ctx32, ctx_ref, atol=1e-4, rtol=1e-4)
    assert jnp.allclose(attn32, attn_ref, atol=1e-4, rtol=1e-4)
    assert jnp.allclose(jnp.sum(attn32, axis=1), 1.0, atol=1e-3)

    # Default bf16 data path (f32 accumulation + f32 softmax normalization): looser
    # element-wise tolerance, but attention rows still sum to 1 (exact division).
    ctx16, attn16 = attention_forward(decoder_hidden, encoder_outputs, params)
    jax.block_until_ready((ctx16, attn16))
    assert ctx16.shape == (B, H) and attn16.shape == (B, S)
    assert jnp.allclose(ctx16, ctx_ref, atol=3e-2, rtol=3e-2)
    assert jnp.allclose(attn16, attn_ref, atol=3e-2, rtol=3e-2)
    assert jnp.allclose(jnp.sum(attn16, axis=1), 1.0, atol=1e-3)

    print("KERNEL_OK")
</pallas_src>

<mosaic_0001>
module attributes {stable_mosaic.version = 11 : i64} {
  func.func @attention_kernel(%arg0: i32, %arg1: i32, %arg2: memref<8x128x128xf32, #tpu.memory_space<vmem>>, %arg3: memref<8x128xf32, #tpu.memory_space<vmem>>, %arg4: memref<128x128xf32, #tpu.memory_space<vmem>>, %arg5: memref<128x128xf32, #tpu.memory_space<vmem>>, %arg6: memref<1x128xf32, #tpu.memory_space<vmem>>, %arg7: memref<1x128xf32, #tpu.memory_space<vmem>>, %arg8: memref<8x128xf32, #tpu.memory_space<vmem>>, %arg9: memref<8x128xf32, #tpu.memory_space<vmem>>, %arg10: memref<8x128xf32, #tpu.memory_space<vmem>>, %arg11: memref<8x1xf32, #tpu.memory_space<vmem>>, %arg12: memref<8x1xf32, #tpu.memory_space<vmem>>, %arg13: memref<8x128xf32, #tpu.memory_space<vmem>>) attributes {dimension_semantics = [#tpu.dimension_semantics<parallel>, #tpu.dimension_semantics<arbitrary>], iteration_bounds = array<i64: 1, 1>, scalar_prefetch = 0 : i64, scratch_operands = 4 : i64, tpu.core_type = #tpu.core_type<tc>, window_params = [{transform_indices = @transform_0, window_bounds = array<i64: 8, 128, 128>}, {transform_indices = @transform_1, window_bounds = array<i64: 8, 128>}, {pipeline_mode = #tpu.pipeline_mode<synchronous>, transform_indices = @transform_2, window_bounds = array<i64: 128, 128>}, {pipeline_mode = #tpu.pipeline_mode<synchronous>, transform_indices = @transform_3, window_bounds = array<i64: 128, 128>}, {pipeline_mode = #tpu.pipeline_mode<synchronous>, transform_indices = @transform_4, window_bounds = array<i64: 1, 128>}, {pipeline_mode = #tpu.pipeline_mode<synchronous>, transform_indices = @transform_5, window_bounds = array<i64: 1, 128>}, {transform_indices = @transform_6, window_bounds = array<i64: 8, 128>}, {transform_indices = @transform_7, window_bounds = array<i64: 8, 128>}]} {
    %c0_i32 = arith.constant 0 : i32
    %0 = arith.cmpi eq, %arg1, %c0_i32 : i32
    %1 = arith.extui %0 : i1 to i32
    %c0_i32_0 = arith.constant 0 : i32
    %2 = arith.cmpi ne, %1, %c0_i32_0 : i32
    scf.if %2 {
      %c0_32 = arith.constant 0 : index
      %c0_33 = arith.constant 0 : index
      %59 = vector.load %arg3[%c0_32, %c0_33] : memref<8x128xf32, #tpu.memory_space<vmem>>, vector<8x128xf32>
      %c0_34 = arith.constant 0 : index
      %c0_35 = arith.constant 0 : index
      %60 = vector.load %arg5[%c0_34, %c0_35] : memref<128x128xf32, #tpu.memory_space<vmem>>, vector<128x128xf32>
      %cst_36 = arith.constant dense<0.000000e+00> : vector<8x128xf32>
      %61 = tpu.matmul %59, %60, %cst_36 {dimension_numbers = #tpu.dot_dimension_numbers<[1], [0], [0], [1], [0, 0, 1, 1], [], []>} : vector<8x128xf32>, vector<128x128xf32>, vector<8x128xf32> -> vector<8x128xf32>
      %c0_37 = arith.constant 0 : index
      %c0_38 = arith.constant 0 : index
      %62 = vector.load %arg6[%c0_37, %c0_38] : memref<1x128xf32, #tpu.memory_space<vmem>>, vector<1x128xf32>
      %63 = vector.broadcast %62 : vector<1x128xf32> to vector<8x128xf32>
      %64 = arith.addf %61, %63 : vector<8x128xf32>
      %c0_39 = arith.constant 0 : index
      %c0_40 = arith.constant 0 : index
      %65 = vector.load %arg10[%c0_39, %c0_40] : memref<8x128xf32, #tpu.memory_space<vmem>>, vector<8x128xf32>
      tpu.vector_store %arg10[%c0_39, %c0_40], %64 {strides = array<i32>} : memref<8x128xf32, #tpu.memory_space<vmem>>, vector<8x128xf32>,
      %cst_41 = arith.constant -1.000000e+30 : f32
      %66 = vector.broadcast %cst_41 : f32 to vector<8x1xf32>
      %c0_42 = arith.constant 0 : index
      %c0_43 = arith.constant 0 : index
      %67 = vector.load %arg11[%c0_42, %c0_43] : memref<8x1xf32, #tpu.memory_space<vmem>>, vector<8x1xf32>
      tpu.vector_store %arg11[%c0_42, %c0_43], %66 {strides = array<i32>} : memref<8x1xf32, #tpu.memory_space<vmem>>, vector<8x1xf32>,
      %cst_44 = arith.constant 0.000000e+00 : f32
      %68 = vector.broadcast %cst_44 : f32 to vector<8x1xf32>
      %c0_45 = arith.constant 0 : index
      %c0_46 = arith.constant 0 : index
      %69 = vector.load %arg12[%c0_45, %c0_46] : memref<8x1xf32, #tpu.memory_space<vmem>>, vector<8x1xf32>
      tpu.vector_store %arg12[%c0_45, %c0_46], %68 {strides = array<i32>} : memref<8x1xf32, #tpu.memory_space<vmem>>, vector<8x1xf32>,
      %cst_47 = arith.constant 0.000000e+00 : f32
      %70 = vector.broadcast %cst_47 : f32 to vector<8x128xf32>
      %c0_48 = arith.constant 0 : index
      %c0_49 = arith.constant 0 : index
      %71 = vector.load %arg13[%c0_48, %c0_49] : memref<8x128xf32, #tpu.memory_space<vmem>>, vector<8x128xf32>
      tpu.vector_store %arg13[%c0_48, %c0_49], %70 {strides = array<i32>} : memref<8x128xf32, #tpu.memory_space<vmem>>, vector<8x128xf32>,
    } else {
    }
    %c0 = arith.constant 0 : index
    %c0_1 = arith.constant 0 : index
    %c0_2 = arith.constant 0 : index
    %3 = vector.load %arg2[%c0, %c0_1, %c0_2] : memref<8x128x128xf32, #tpu.memory_space<vmem>>, vector<8x128x128xf32>
    %4 = vector.shape_cast %3 : vector<8x128x128xf32> to vector<1024x128xf32>
    %c0_3 = arith.constant 0 : index
    %c0_4 = arith.constant 0 : index
    %5 = vector.load %arg4[%c0_3, %c0_4] : memref<128x128xf32, #tpu.memory_space<vmem>>, vector<128x128xf32>
    %cst = arith.constant dense<0.000000e+00> : vector<1024x128xf32>
    %6 = tpu.matmul %4, %5, %cst {dimension_numbers = #tpu.dot_dimension_numbers<[1], [0], [0], [1], [0, 0, 1, 1], [], []>} : vector<1024x128xf32>, vector<128x128xf32>, vector<1024x128xf32> -> vector<1024x128xf32>
    %7 = vector.shape_cast %6 : vector<1024x128xf32> to vector<8x128x128xf32>
    %c0_5 = arith.constant 0 : index
    %c0_6 = arith.constant 0 : index
    %8 = vector.load %arg10[%c0_5, %c0_6] : memref<8x128xf32, #tpu.memory_space<vmem>>, vector<8x128xf32>
    %9 = vector.shape_cast %8 : vector<8x128xf32> to vector<8x1x128xf32>
    %10 = vector.broadcast %9 : vector<8x1x128xf32> to vector<8x128x128xf32>
    %11 = arith.addf %7, %10 : vector<8x128x128xf32>
    %12 = math.tanh %11 : vector<8x128x128xf32>
    %c0_7 = arith.constant 0 : index
    %c0_8 = arith.constant 0 : index
    %13 = vector.load %arg7[%c0_7, %c0_8] : memref<1x128xf32, #tpu.memory_space<vmem>>, vector<1x128xf32>
    %14 = vector.shape_cast %13 : vector<1x128xf32> to vector<1x1x128xf32>
    %15 = vector.broadcast %14 : vector<1x1x128xf32> to vector<8x128x128xf32>
    %16 = arith.mulf %12, %15 : vector<8x128x128xf32>
    %cst_9 = arith.constant dense<0.000000e+00> : vector<8x128xf32>
    %17 = vector.multi_reduction <add>, %16, %cst_9 [2] : vector<8x128x128xf32> to vector<8x128xf32>
    %c128_i32 = arith.constant 128 : i32
    %18 = arith.muli %arg1, %c128_i32 : i32
    %19 = tpu.iota {dimensions = array<i32: 1>} : vector<8x128xi32>
    %20 = vector.broadcast %18 : i32 to vector<8x128xi32>
    %21 = arith.addi %20, %19 : vector<8x128xi32>
    %c8_i32 = arith.constant 8 : i32
    %22 = vector.broadcast %c8_i32 : i32 to vector<8x128xi32>
    %23 = arith.cmpi slt, %21, %22 : vector<8x128xi32>
    %cst_10 = arith.constant -1.000000e+30 : f32
    %24 = vector.broadcast %cst_10 : f32 to vector<8x128xf32>
    %25 = arith.select %23, %17, %24 : vector<8x128xi1>, vector<8x128xf32>
    %cst_11 = arith.constant dense<0xFF800000> : vector<8xf32>
    %26 = vector.multi_reduction <maximumf>, %25, %cst_11 [1] : vector<8x128xf32> to vector<8xf32>
    %27 = vector.shape_cast %26 : vector<8xf32> to vector<8x1xf32>
    %c0_12 = arith.constant 0 : index
    %c0_13 = arith.constant 0 : index
    %28 = vector.load %arg11[%c0_12, %c0_13] : memref<8x1xf32, #tpu.memory_space<vmem>>, vector<8x1xf32>
    %29 = arith.maximumf %28, %27 : vector<8x1xf32>
    %c0_14 = arith.constant 0 : index
    %c0_15 = arith.constant 0 : index
    %30 = vector.load %arg11[%c0_14, %c0_15] : memref<8x1xf32, #tpu.memory_space<vmem>>, vector<8x1xf32>
    %31 = arith.subf %30, %29 : vector<8x1xf32>
    %32 = math.exp %31 : vector<8x1xf32>
    %33 = vector.broadcast %29 : vector<8x1xf32> to vector<8x128xf32>
    %34 = arith.subf %25, %33 : vector<8x128xf32>
    %35 = math.exp %34 : vector<8x128xf32>
    %c0_16 = arith.constant 0 : index
    %c0_17 = arith.constant 0 : index
    %36 = vector.load %arg12[%c0_16, %c0_17] : memref<8x1xf32, #tpu.memory_space<vmem>>, vector<8x1xf32>
    %37 = arith.mulf %32, %36 : vector<8x1xf32>
    %cst_18 = arith.constant dense<0.000000e+00> : vector<8xf32>
    %38 = vector.multi_reduction <add>, %35, %cst_18 [1] : vector<8x128xf32> to vector<8xf32>
    %39 = vector.shape_cast %38 : vector<8xf32> to vector<8x1xf32>
    %40 = arith.addf %37, %39 : vector<8x1xf32>
    %c0_19 = arith.constant 0 : index
    %c0_20 = arith.constant 0 : index
    %41 = vector.load %arg12[%c0_19, %c0_20] : memref<8x1xf32, #tpu.memory_space<vmem>>, vector<8x1xf32>
    tpu.vector_store %arg12[%c0_19, %c0_20], %40 {strides = array<i32>} : memref<8x1xf32, #tpu.memory_space<vmem>>, vector<8x1xf32>,
    %42 = vector.shape_cast %35 : vector<8x128xf32> to vector<8x128x1xf32>
    %43 = vector.broadcast %42 : vector<8x128x1xf32> to vector<8x128x128xf32>
    %44 = arith.mulf %43, %3 : vector<8x128x128xf32>
    %cst_21 = arith.constant dense<0.000000e+00> : vector<8x128xf32>
    %45 = vector.multi_reduction <add>, %44, %cst_21 [1] : vector<8x128x128xf32> to vector<8x128xf32>
    %c0_22 = arith.constant 0 : index
    %c0_23 = arith.constant 0 : index
    %46 = vector.load %arg13[%c0_22, %c0_23] : memref<8x128xf32, #tpu.memory_space<vmem>>, vector<8x128xf32>
    %47 = vector.broadcast %32 : vector<8x1xf32> to vector<8x128xf32>
    %48 = arith.mulf %47, %46 : vector<8x128xf32>
    %49 = arith.addf %48, %45 : vector<8x128xf32>
    %c0_24 = arith.constant 0 : index
    %c0_25 = arith.constant 0 : index
    %50 = vector.load %arg13[%c0_24, %c0_25] : memref<8x128xf32, #tpu.memory_space<vmem>>, vector<8x128xf32>
    tpu.vector_store %arg13[%c0_24, %c0_25], %49 {strides = array<i32>} : memref<8x128xf32, #tpu.memory_space<vmem>>, vector<8x128xf32>,
    %c0_26 = arith.constant 0 : index
    %c0_27 = arith.constant 0 : index
    %51 = vector.load %arg11[%c0_26, %c0_27] : memref<8x1xf32, #tpu.memory_space<vmem>>, vector<8x1xf32>
    tpu.vector_store %arg11[%c0_26, %c0_27], %29 {strides = array<i32>} : memref<8x1xf32, #tpu.memory_space<vmem>>, vector<8x1xf32>,
    %c128_i32_28 = arith.constant 128 : i32
    %52 = arith.muli %arg1, %c128_i32_28 : i32
    %53 = tpu.assume_multiple %52, 128 : i32
    %c0_29 = arith.constant 0 : index
    %54 = arith.index_cast %53 : i32 to index
    %55 = vector.load %arg9[%c0_29, %54] : memref<8x128xf32, #tpu.memory_space<vmem>>, vector<8x128xf32>
    tpu.vector_store %arg9[%c0_29, %54], %25 {strides = array<i32>} : memref<8x128xf32, #tpu.memory_space<vmem>>, vector<8x128xf32>,
    %c0_i32_30 = arith.constant 0 : i32
    %56 = arith.cmpi eq, %arg1, %c0_i32_30 : i32
    %57 = arith.extui %56 : i1 to i32
    %c0_i32_31 = arith.constant 0 : i32
    %58 = arith.cmpi ne, %57, %c0_i32_31 : i32
    scf.if %58 {
      %c0_32 = arith.constant 0 : index
      %c0_33 = arith.constant 0 : index
      %59 = vector.load %arg12[%c0_32, %c0_33] : memref<8x1xf32, #tpu.memory_space<vmem>>, vector<8x1xf32>
      %cst_34 = arith.constant 1.000000e+00 : f32
      %60 = vector.broadcast %cst_34 : f32 to vector<8x1xf32>
      %61 = arith.divf %60, %59 : vector<8x1xf32>
      %c0_35 = arith.constant 0 : index
      %c0_36 = arith.constant 0 : index
      %62 = vector.load %arg9[%c0_35, %c0_36] : memref<8x128xf32, #tpu.memory_space<vmem>>, vector<8x128xf32>
      %c0_37 = arith.constant 0 : index
      %c0_38 = arith.constant 0 : index
      %63 = vector.load %arg11[%c0_37, %c0_38] : memref<8x1xf32, #tpu.memory_space<vmem>>, vector<8x1xf32>
      %64 = vector.broadcast %63 : vector<8x1xf32> to vector<8x128xf32>
      %65 = arith.subf %62, %64 : vector<8x128xf32>
      %66 = math.exp %65 : vector<8x128xf32>
      %67 = vector.broadcast %61 : vector<8x1xf32> to vector<8x128xf32>
      %68 = arith.mulf %66, %67 : vector<8x128xf32>
      %c0_39 = arith.constant 0 : index
      %c0_40 = arith.constant 0 : index
      %69 = vector.load %arg9[%c0_39, %c0_40] : memref<8x128xf32, #tpu.memory_space<vmem>>, vector<8x128xf32>
      tpu.vector_store %arg9[%c0_39, %c0_40], %68 {strides = array<i32>} : memref<8x128xf32, #tpu.memory_space<vmem>>, vector<8x128xf32>,
      %c0_41 = arith.constant 0 : index
      %c0_42 = arith.constant 0 : index
      %70 = vector.load %arg13[%c0_41, %c0_42] : memref<8x128xf32, #tpu.memory_space<vmem>>, vector<8x128xf32>
      %71 = vector.broadcast %61 : vector<8x1xf32> to vector<8x128xf32>
      %72 = arith.mulf %70, %71 : vector<8x128xf32>
      %c0_43 = arith.constant 0 : index
      %c0_44 = arith.constant 0 : index
      %73 = vector.load %arg8[%c0_43, %c0_44] : memref<8x128xf32, #tpu.memory_space<vmem>>, vector<8x128xf32>
      tpu.vector_store %arg8[%c0_43, %c0_44], %72 {strides = array<i32>} : memref<8x128xf32, #tpu.memory_space<vmem>>, vector<8x128xf32>,
    } else {
    }
    return
  }
  func.func @transform_0(%arg0: i32, %arg1: i32) -> (i32, i32, i32) {
    %c0_i32 = arith.constant 0 : i32
    %c0_i32_0 = arith.constant 0 : i32
    return %arg0, %arg1, %c0_i32 : i32, i32, i32
  }
  func.func @transform_1(%arg0: i32, %arg1: i32) -> (i32, i32) {
    %c0_i32 = arith.constant 0 : i32
    %c0_i32_0 = arith.constant 0 : i32
    return %arg0, %c0_i32 : i32, i32
  }
  func.func @transform_2(%arg0: i32, %arg1: i32) -> (i32, i32) {
    %c0_i32 = arith.constant 0 : i32
    %c0_i32_0 = arith.constant 0 : i32
    %c0_i32_1 = arith.constant 0 : i32
    return %c0_i32, %c0_i32_0 : i32, i32
  }
  func.func @transform_3(%arg0: i32, %arg1: i32) -> (i32, i32) {
    %c0_i32 = arith.constant 0 : i32
    %c0_i32_0 = arith.constant 0 : i32
    %c0_i32_1 = arith.constant 0 : i32
    return %c0_i32, %c0_i32_0 : i32, i32
  }
  func.func @transform_4(%arg0: i32, %arg1: i32) -> (i32, i32) {
    %c0_i32 = arith.constant 0 : i32
    %c0_i32_0 = arith.constant 0 : i32
    %c0_i32_1 = arith.constant 0 : i32
    return %c0_i32, %c0_i32_0 : i32, i32
  }
  func.func @transform_5(%arg0: i32, %arg1: i32) -> (i32, i32) {
    %c0_i32 = arith.constant 0 : i32
    %c0_i32_0 = arith.constant 0 : i32
    %c0_i32_1 = arith.constant 0 : i32
    return %c0_i32, %c0_i32_0 : i32, i32
  }
  func.func @transform_6(%arg0: i32, %arg1: i32) -> (i32, i32) {
    %c0_i32 = arith.constant 0 : i32
    %c0_i32_0 = arith.constant 0 : i32
    return %arg0, %c0_i32 : i32, i32
  }
  func.func @transform_7(%arg0: i32, %arg1: i32) -> (i32, i32) {
    %c0_i32 = arith.constant 0 : i32
    %c0_i32_0 = arith.constant 0 : i32
    return %arg0, %c0_i32 : i32, i32
  }
}

module attributes {stable_mosaic.version = 11 : i64} {
  func.func @attention_kernel(%arg0: i32, %arg1: i32, %arg2: memref<8x128x128xf32, #tpu.memory_space<vmem>>, %arg3: memref<8x128xf32, #tpu.memory_space<vmem>>, %arg4: memref<128x128xf32, #tpu.memory_space<vmem>>, %arg5: memref<128x128xf32, #tpu.memory_space<vmem>>, %arg6: memref<1x128xf32, #tpu.memory_space<vmem>>, %arg7: memref<1x128xf32, #tpu.memory_space<vmem>>, %arg8: memref<8x128xf32, #tpu.memory_space<vmem>>, %arg9: memref<8x128xf32, #tpu.memory_space<vmem>>, %arg10: memref<8x128xf32, #tpu.memory_space<vmem>>, %arg11: memref<8x1xf32, #tpu.memory_space<vmem>>, %arg12: memref<8x1xf32, #tpu.memory_space<vmem>>, %arg13: memref<8x128xf32, #tpu.memory_space<vmem>>) attributes {dimension_semantics = [#tpu.dimension_semantics<parallel>, #tpu.dimension_semantics<arbitrary>], iteration_bounds = array<i64: 1, 1>, scalar_prefetch = 0 : i64, scratch_operands = 4 : i64, tpu.core_type = #tpu.core_type<tc>, window_params = [{transform_indices = @transform_0, window_bounds = array<i64: 8, 128, 128>}, {transform_indices = @transform_1, window_bounds = array<i64: 8, 128>}, {pipeline_mode = #tpu.pipeline_mode<synchronous>, transform_indices = @transform_2, window_bounds = array<i64: 128, 128>}, {pipeline_mode = #tpu.pipeline_mode<synchronous>, transform_indices = @transform_3, window_bounds = array<i64: 128, 128>}, {pipeline_mode = #tpu.pipeline_mode<synchronous>, transform_indices = @transform_4, window_bounds = array<i64: 1, 128>}, {pipeline_mode = #tpu.pipeline_mode<synchronous>, transform_indices = @transform_5, window_bounds = array<i64: 1, 128>}, {transform_indices = @transform_6, window_bounds = array<i64: 8, 128>}, {transform_indices = @transform_7, window_bounds = array<i64: 8, 128>}]} {
    %c0_i32 = arith.constant 0 : i32
    %0 = arith.cmpi eq, %arg1, %c0_i32 : i32
    %1 = arith.extui %0 : i1 to i32
    %c0_i32_0 = arith.constant 0 : i32
    %2 = arith.cmpi ne, %1, %c0_i32_0 : i32
    scf.if %2 {
      %c0_32 = arith.constant 0 : index
      %c0_33 = arith.constant 0 : index
      %59 = vector.load %arg3[%c0_32, %c0_33] : memref<8x128xf32, #tpu.memory_space<vmem>>, vector<8x128xf32>
      %c0_34 = arith.constant 0 : index
      %c0_35 = arith.constant 0 : index
      %60 = vector.load %arg5[%c0_34, %c0_35] : memref<128x128xf32, #tpu.memory_space<vmem>>, vector<128x128xf32>
      %cst_36 = arith.constant dense<0.000000e+00> : vector<8x128xf32>
      %61 = tpu.matmul %59, %60, %cst_36 {dimension_numbers = #tpu.dot_dimension_numbers<[1], [0], [0], [1], [0, 0, 1, 1], [], []>} : vector<8x128xf32>, vector<128x128xf32>, vector<8x128xf32> -> vector<8x128xf32>
      %c0_37 = arith.constant 0 : index
      %c0_38 = arith.constant 0 : index
      %62 = vector.load %arg6[%c0_37, %c0_38] : memref<1x128xf32, #tpu.memory_space<vmem>>, vector<1x128xf32>
      %63 = vector.broadcast %62 : vector<1x128xf32> to vector<8x128xf32>
      %64 = arith.addf %61, %63 : vector<8x128xf32>
      %c0_39 = arith.constant 0 : index
      %c0_40 = arith.constant 0 : index
      %65 = vector.load %arg10[%c0_39, %c0_40] : memref<8x128xf32, #tpu.memory_space<vmem>>, vector<8x128xf32>
      tpu.vector_store %arg10[%c0_39, %c0_40], %64 {strides = array<i32>} : memref<8x128xf32, #tpu.memory_space<vmem>>, vector<8x128xf32>,
      %cst_41 = arith.constant -1.000000e+30 : f32
      %66 = vector.broadcast %cst_41 : f32 to vector<8x1xf32>
      %c0_42 = arith.constant 0 : index
      %c0_43 = arith.constant 0 : index
      %67 = vector.load %arg11[%c0_42, %c0_43] : memref<8x1xf32, #tpu.memory_space<vmem>>, vector<8x1xf32>
      tpu.vector_store %arg11[%c0_42, %c0_43], %66 {strides = array<i32>} : memref<8x1xf32, #tpu.memory_space<vmem>>, vector<8x1xf32>,
      %cst_44 = arith.constant 0.000000e+00 : f32
      %68 = vector.broadcast %cst_44 : f32 to vector<8x1xf32>
      %c0_45 = arith.constant 0 : index
      %c0_46 = arith.constant 0 : index
      %69 = vector.load %arg12[%c0_45, %c0_46] : memref<8x1xf32, #tpu.memory_space<vmem>>, vector<8x1xf32>
      tpu.vector_store %arg12[%c0_45, %c0_46], %68 {strides = array<i32>} : memref<8x1xf32, #tpu.memory_space<vmem>>, vector<8x1xf32>,
      %cst_47 = arith.constant 0.000000e+00 : f32
      %70 = vector.broadcast %cst_47 : f32 to vector<8x128xf32>
      %c0_48 = arith.constant 0 : index
      %c0_49 = arith.constant 0 : index
      %71 = vector.load %arg13[%c0_48, %c0_49] : memref<8x128xf32, #tpu.memory_space<vmem>>, vector<8x128xf32>
      tpu.vector_store %arg13[%c0_48, %c0_49], %70 {strides = array<i32>} : memref<8x128xf32, #tpu.memory_space<vmem>>, vector<8x128xf32>,
    } else {
    }
    %c0 = arith.constant 0 : index
    %c0_1 = arith.constant 0 : index
    %c0_2 = arith.constant 0 : index
    %3 = vector.load %arg2[%c0, %c0_1, %c0_2] : memref<8x128x128xf32, #tpu.memory_space<vmem>>, vector<8x128x128xf32>
    %4 = vector.shape_cast %3 : vector<8x128x128xf32> to vector<1024x128xf32>
    %c0_3 = arith.constant 0 : index
    %c0_4 = arith.constant 0 : index
    %5 = vector.load %arg4[%c0_3, %c0_4] : memref<128x128xf32, #tpu.memory_space<vmem>>, vector<128x128xf32>
    %cst = arith.constant dense<0.000000e+00> : vector<1024x128xf32>
    %6 = tpu.matmul %4, %5, %cst {dimension_numbers = #tpu.dot_dimension_numbers<[1], [0], [0], [1], [0, 0, 1, 1], [], []>} : vector<1024x128xf32>, vector<128x128xf32>, vector<1024x128xf32> -> vector<1024x128xf32>
    %7 = vector.shape_cast %6 : vector<1024x128xf32> to vector<8x128x128xf32>
    %c0_5 = arith.constant 0 : index
    %c0_6 = arith.constant 0 : index
    %8 = vector.load %arg10[%c0_5, %c0_6] : memref<8x128xf32, #tpu.memory_space<vmem>>, vector<8x128xf32>
    %9 = vector.shape_cast %8 : vector<8x128xf32> to vector<8x1x128xf32>
    %10 = vector.broadcast %9 : vector<8x1x128xf32> to vector<8x128x128xf32>
    %11 = arith.addf %7, %10 : vector<8x128x128xf32>
    %12 = math.tanh %11 : vector<8x128x128xf32>
    %c0_7 = arith.constant 0 : index
    %c0_8 = arith.constant 0 : index
    %13 = vector.load %arg7[%c0_7, %c0_8] : memref<1x128xf32, #tpu.memory_space<vmem>>, vector<1x128xf32>
    %14 = vector.shape_cast %13 : vector<1x128xf32> to vector<1x1x128xf32>
    %15 = vector.broadcast %14 : vector<1x1x128xf32> to vector<8x128x128xf32>
    %16 = arith.mulf %12, %15 : vector<8x128x128xf32>
    %cst_9 = arith.constant dense<0.000000e+00> : vector<8x128xf32>
    %17 = vector.multi_reduction <add>, %16, %cst_9 [2] : vector<8x128x128xf32> to vector<8x128xf32>
    %c128_i32 = arith.constant 128 : i32
    %18 = arith.muli %arg1, %c128_i32 : i32
    %19 = tpu.iota {dimensions = array<i32: 1>} : vector<8x128xi32>
    %20 = vector.broadcast %18 : i32 to vector<8x128xi32>
    %21 = arith.addi %20, %19 : vector<8x128xi32>
    %c8_i32 = arith.constant 8 : i32
    %22 = vector.broadcast %c8_i32 : i32 to vector<8x128xi32>
    %23 = arith.cmpi slt, %21, %22 : vector<8x128xi32>
    %cst_10 = arith.constant -1.000000e+30 : f32
    %24 = vector.broadcast %cst_10 : f32 to vector<8x128xf32>
    %25 = arith.select %23, %17, %24 : vector<8x128xi1>, vector<8x128xf32>
    %cst_11 = arith.constant dense<0xFF800000> : vector<8xf32>
    %26 = vector.multi_reduction <maximumf>, %25, %cst_11 [1] : vector<8x128xf32> to vector<8xf32>
    %27 = vector.shape_cast %26 : vector<8xf32> to vector<8x1xf32>
    %c0_12 = arith.constant 0 : index
    %c0_13 = arith.constant 0 : index
    %28 = vector.load %arg11[%c0_12, %c0_13] : memref<8x1xf32, #tpu.memory_space<vmem>>, vector<8x1xf32>
    %29 = arith.maximumf %28, %27 : vector<8x1xf32>
    %c0_14 = arith.constant 0 : index
    %c0_15 = arith.constant 0 : index
    %30 = vector.load %arg11[%c0_14, %c0_15] : memref<8x1xf32, #tpu.memory_space<vmem>>, vector<8x1xf32>
    %31 = arith.subf %30, %29 : vector<8x1xf32>
    %32 = math.exp %31 : vector<8x1xf32>
    %33 = vector.broadcast %29 : vector<8x1xf32> to vector<8x128xf32>
    %34 = arith.subf %25, %33 : vector<8x128xf32>
    %35 = math.exp %34 : vector<8x128xf32>
    %c0_16 = arith.constant 0 : index
    %c0_17 = arith.constant 0 : index
    %36 = vector.load %arg12[%c0_16, %c0_17] : memref<8x1xf32, #tpu.memory_space<vmem>>, vector<8x1xf32>
    %37 = arith.mulf %32, %36 : vector<8x1xf32>
    %cst_18 = arith.constant dense<0.000000e+00> : vector<8xf32>
    %38 = vector.multi_reduction <add>, %35, %cst_18 [1] : vector<8x128xf32> to vector<8xf32>
    %39 = vector.shape_cast %38 : vector<8xf32> to vector<8x1xf32>
    %40 = arith.addf %37, %39 : vector<8x1xf32>
    %c0_19 = arith.constant 0 : index
    %c0_20 = arith.constant 0 : index
    %41 = vector.load %arg12[%c0_19, %c0_20] : memref<8x1xf32, #tpu.memory_space<vmem>>, vector<8x1xf32>
    tpu.vector_store %arg12[%c0_19, %c0_20], %40 {strides = array<i32>} : memref<8x1xf32, #tpu.memory_space<vmem>>, vector<8x1xf32>,
    %42 = vector.shape_cast %35 : vector<8x128xf32> to vector<8x128x1xf32>
    %43 = vector.broadcast %42 : vector<8x128x1xf32> to vector<8x128x128xf32>
    %44 = arith.mulf %43, %3 : vector<8x128x128xf32>
    %cst_21 = arith.constant dense<0.000000e+00> : vector<8x128xf32>
    %45 = vector.multi_reduction <add>, %44, %cst_21 [1] : vector<8x128x128xf32> to vector<8x128xf32>
    %c0_22 = arith.constant 0 : index
    %c0_23 = arith.constant 0 : index
    %46 = vector.load %arg13[%c0_22, %c0_23] : memref<8x128xf32, #tpu.memory_space<vmem>>, vector<8x128xf32>
    %47 = vector.broadcast %32 : vector<8x1xf32> to vector<8x128xf32>
    %48 = arith.mulf %47, %46 : vector<8x128xf32>
    %49 = arith.addf %48, %45 : vector<8x128xf32>
    %c0_24 = arith.constant 0 : index
    %c0_25 = arith.constant 0 : index
    %50 = vector.load %arg13[%c0_24, %c0_25] : memref<8x128xf32, #tpu.memory_space<vmem>>, vector<8x128xf32>
    tpu.vector_store %arg13[%c0_24, %c0_25], %49 {strides = array<i32>} : memref<8x128xf32, #tpu.memory_space<vmem>>, vector<8x128xf32>,
    %c0_26 = arith.constant 0 : index
    %c0_27 = arith.constant 0 : index
    %51 = vector.load %arg11[%c0_26, %c0_27] : memref<8x1xf32, #tpu.memory_space<vmem>>, vector<8x1xf32>
    tpu.vector_store %arg11[%c0_26, %c0_27], %29 {strides = array<i32>} : memref<8x1xf32, #tpu.memory_space<vmem>>, vector<8x1xf32>,
    %c128_i32_28 = arith.constant 128 : i32
    %52 = arith.muli %arg1, %c128_i32_28 : i32
    %53 = tpu.assume_multiple %52, 128 : i32
    %c0_29 = arith.constant 0 : index
    %54 = arith.index_cast %53 : i32 to index
    %55 = vector.load %arg9[%c0_29, %54] : memref<8x128xf32, #tpu.memory_space<vmem>>, vector<8x128xf32>
    tpu.vector_store %arg9[%c0_29, %54], %25 {strides = array<i32>} : memref<8x128xf32, #tpu.memory_space<vmem>>, vector<8x128xf32>,
    %c0_i32_30 = arith.constant 0 : i32
    %56 = arith.cmpi eq, %arg1, %c0_i32_30 : i32
    %57 = arith.extui %56 : i1 to i32
    %c0_i32_31 = arith.constant 0 : i32
    %58 = arith.cmpi ne, %57, %c0_i32_31 : i32
    scf.if %58 {
      %c0_32 = arith.constant 0 : index
      %c0_33 = arith.constant 0 : index
      %59 = vector.load %arg12[%c0_32, %c0_33] : memref<8x1xf32, #tpu.memory_space<vmem>>, vector<8x1xf32>
      %cst_34 = arith.constant 1.000000e+00 : f32
      %60 = vector.broadcast %cst_34 : f32 to vector<8x1xf32>
      %61 = arith.divf %60, %59 : vector<8x1xf32>
      %c0_35 = arith.constant 0 : index
      %c0_36 = arith.constant 0 : index
      %62 = vector.load %arg9[%c0_35, %c0_36] : memref<8x128xf32, #tpu.memory_space<vmem>>, vector<8x128xf32>
      %c0_37 = arith.constant 0 : index
      %c0_38 = arith.constant 0 : index
      %63 = vector.load %arg11[%c0_37, %c0_38] : memref<8x1xf32, #tpu.memory_space<vmem>>, vector<8x1xf32>
      %64 = vector.broadcast %63 : vector<8x1xf32> to vector<8x128xf32>
      %65 = arith.subf %62, %64 : vector<8x128xf32>
      %66 = math.exp %65 : vector<8x128xf32>
      %67 = vector.broadcast %61 : vector<8x1xf32> to vector<8x128xf32>
      %68 = arith.mulf %66, %67 : vector<8x128xf32>
      %c0_39 = arith.constant 0 : index
      %c0_40 = arith.constant 0 : index
      %69 = vector.load %arg9[%c0_39, %c0_40] : memref<8x128xf32, #tpu.memory_space<vmem>>, vector<8x128xf32>
      tpu.vector_store %arg9[%c0_39, %c0_40], %68 {strides = array<i32>} : memref<8x128xf32, #tpu.memory_space<vmem>>, vector<8x128xf32>,
      %c0_41 = arith.constant 0 : index
      %c0_42 = arith.constant 0 : index
      %70 = vector.load %arg13[%c0_41, %c0_42] : memref<8x128xf32, #tpu.memory_space<vmem>>, vector<8x128xf32>
      %71 = vector.broadcast %61 : vector<8x1xf32> to vector<8x128xf32>
      %72 = arith.mulf %70, %71 : vector<8x128xf32>
      %c0_43 = arith.constant 0 : index
      %c0_44 = arith.constant 0 : index
      %73 = vector.load %arg8[%c0_43, %c0_44] : memref<8x128xf32, #tpu.memory_space<vmem>>, vector<8x128xf32>
      tpu.vector_store %arg8[%c0_43, %c0_44], %72 {strides = array<i32>} : memref<8x128xf32, #tpu.memory_space<vmem>>, vector<8x128xf32>,
    } else {
    }
    return
  }
  func.func @transform_0(%arg0: i32, %arg1: i32) -> (i32, i32, i32) {
    %c0_i32 = arith.constant 0 : i32
    %c0_i32_0 = arith.constant 0 : i32
    return %arg0, %arg1, %c0_i32 : i32, i32, i32
  }
  func.func @transform_1(%arg0: i32, %arg1: i32) -> (i32, i32) {
    %c0_i32 = arith.constant 0 : i32
    %c0_i32_0 = arith.constant 0 : i32
    return %arg0, %c0_i32 : i32, i32
  }
  func.func @transform_2(%arg0: i32, %arg1: i32) -> (i32, i32) {
    %c0_i32 = arith.constant 0 : i32
    %c0_i32_0 = arith.constant 0 : i32
    %c0_i32_1 = arith.constant 0 : i32
    return %c0_i32, %c0_i32_0 : i32, i32
  }
  func.func @transform_3(%arg0: i32, %arg1: i32) -> (i32, i32) {
    %c0_i32 = arith.constant 0 : i32
    %c0_i32_0 = arith.constant 0 : i32
    %c0_i32_1 = arith.constant 0 : i32
    return %c0_i32, %c0_i32_0 : i32, i32
  }
  func.func @transform_4(%arg0: i32, %arg1: i32) -> (i32, i32) {
    %c0_i32 = arith.constant 0 : i32
    %c0_i32_0 = arith.constant 0 : i32
    %c0_i32_1 = arith.constant 0 : i32
    return %c0_i32, %c0_i32_0 : i32, i32
  }
  func.func @transform_5(%arg0: i32, %arg1: i32) -> (i32, i32) {
    %c0_i32 = arith.constant 0 : i32
    %c0_i32_0 = arith.constant 0 : i32
    %c0_i32_1 = arith.constant 0 : i32
    return %c0_i32, %c0_i32_0 : i32, i32
  }
  func.func @transform_6(%arg0: i32, %arg1: i32) -> (i32, i32) {
    %c0_i32 = arith.constant 0 : i32
    %c0_i32_0 = arith.constant 0 : i32
    return %arg0, %c0_i32 : i32, i32
  }
  func.func @transform_7(%arg0: i32, %arg1: i32) -> (i32, i32) {
    %c0_i32 = arith.constant 0 : i32
    %c0_i32_0 = arith.constant 0 : i32
    return %arg0, %c0_i32 : i32, i32
  }
}

</mosaic_0001>

<llo_original>
// kernel: tpu_custom_call.1
$region0: #{tpu_custom_call.1}
  #allocation0 [shape = 'u32[]', space=smem, size = 0x4, offset = 0x4, fixed_abs, tag = 'smem constant byte address 0x4 - core index']
  #allocation1 [shape = 'u32[72,128]{1,0:T(1,128)}', space=vmem, size = 0x9000, scoped, tag = 'internal scratch']
  #allocation2 [shape = 'f32[8,128]{1,0:T(8,128)}', space=vmem, size = 0x1000, scoped, tag = 'scratch operand']
  #allocation3 [shape = 'f32[8,1]{1,0:T(8,128)}', space=vmem, size = 0x1000, scoped, tag = 'scratch operand']
  #allocation4 [shape = 'f32[8,1]{1,0:T(8,128)}', space=vmem, size = 0x1000, scoped, tag = 'scratch operand']
  #allocation5 [shape = 'f32[8,128]{1,0:T(8,128)}', space=vmem, size = 0x1000, scoped, tag = 'scratch operand']
  %s0 = inlined_call_operand.hbm [shape: f32[8,128,128], index: 0, kind: input, shape index: {}]
  %s1 = inlined_call_operand.hbm [shape: f32[8,128], index: 1, kind: input, shape index: {}]
  %s2 = inlined_call_operand.hbm [shape: f32[128,128], index: 2, kind: input, shape index: {}]
  %s3 = inlined_call_operand.hbm [shape: f32[128,128], index: 3, kind: input, shape index: {}]
  %s4 = inlined_call_operand.vmem [shape: f32[1,128], index: 4, kind: input, shape index: {}]
  %s5 = inlined_call_operand.vmem [shape: f32[1,128], index: 5, kind: input, shape index: {}]
  %s6 = inlined_call_operand.hbm [shape: f32[8,128], index: 6, kind: output, shape index: {0}]
  %s7 = inlined_call_operand.hbm [shape: f32[8,128], index: 7, kind: output, shape index: {1}]
  %8 = xla_tuple %s6, %s7
  %s9 = sld [smem:[#allocation0]]
  $region66: #{tpu_custom_call.1} parent=0
    _
  %s11 = ssub.s32 1, %s9
  %s12 = scalar_select 0, %s11, %s9
  $region1: #{tpu_custom_call.1} parent=0
    #allocation6 [shape = 'u8[524288]{0}', space=vmem, size = 0x80000, scoped, tag = 'input window, operand 0, single buffered']
    #allocation7 [shape = 's32[1]{0}', space=sflag, size = 0x4, scoped, tag = 'scoped memory for tpu_custom_call.1']
    #allocation8 [shape = 's32[1]{0}', space=sflag, size = 0x4, scoped, tag = 'scoped memory for tpu_custom_call.1']
    #allocation9 [shape = 'u8[4096]{0}', space=vmem, size = 0x1000, scoped, tag = 'input window, operand 1, single buffered']
    #allocation10 [shape = 's32[1]{0}', space=sflag, size = 0x4, scoped, tag = 'scoped memory for tpu_custom_call.1']
    #allocation11 [shape = 'u8[65536]{0}', space=vmem, size = 0x10000, scoped, tag = 'input window, operand 2, single buffered']
    #allocation12 [shape = 'u8[65536]{0}', space=vmem, size = 0x10000, scoped, tag = 'input window, operand 3, single buffered']
    #allocation13 [shape = 's32[1]{0}', space=sflag, size = 0x4, scoped, tag = 'scoped memory for tpu_custom_call.1']
    #allocation14 [shape = 'u8[4096]{0}', space=vmem, size = 0x1000, scoped, tag = 'output window, operand 0, single buffered']
    #allocation15 [shape = 'u8[4096]{0}', space=vmem, size = 0x1000, scoped, tag = 'output window, operand 1, single buffered']
    #allocation16 [shape = 's32[1]{0}', space=sflag, size = 0x4, scoped, tag = 'scoped memory for tpu_custom_call.1']
    %13 = vsyncpa [#allocation7], 0
    %14 = vsyncpa [#allocation10], 0
    %15 = vsyncpa [#allocation13], 0
    %16 = vsyncpa [#allocation8], 0
    %17 = vsyncpa [#allocation16], 0
    // Predicated region
    $region2: #{tpu_custom_call.1} parent=1 // pred_check
      _
    $region3: #{tpu_custom_call.1} parent=1 // pred_check_branch
      %19 = sbr.rel (0) target = $region5
    $region4: #{tpu_custom_call.1} parent=1 // pred_region
      %21 = vsyncadd [#allocation7], 0
      %s22 = sshll.u32 %s0, 4
      %s23 = int_to_ptr.hbm [resolvable:$true] %s22
      %s24 = sshll.u32 [#allocation6], 4
      %s25 = int_to_ptr.vmem [resolvable:$true] %s24
      %30 = dma.hbm_to_vmem [thread:$0]  %s23, 16384, %s25, [#allocation7], 128, 128, 8
    $region5: #{tpu_custom_call.1} parent=1 // pred_fallthru
      _
    // Predicated region
    $region6: #{tpu_custom_call.1} parent=1 // pred_check
      _
    $region7: #{tpu_custom_call.1} parent=1 // pred_check_branch
      %32 = sbr.rel (0) target = $region9
    $region8: #{tpu_custom_call.1} parent=1 // pred_region
      %34 = vsyncadd [#allocation10], 0
      %s36 = sshll.u32 %s1, 4
      %s37 = int_to_ptr.hbm [resolvable:$true] %s36
      %s38 = sshll.u32 [#allocation9], 4
      %s39 = int_to_ptr.vmem [resolvable:$true] %s38
      %41 = dma.hbm_to_vmem [thread:$0]  %s37, 128, %s39, [#allocation10]
    $region9: #{tpu_custom_call.1} parent=1 // pred_fallthru
      _
    // Predicated region
    $region10: #{tpu_custom_call.1} parent=1 // pred_check
      _
    $region11: #{tpu_custom_call.1} parent=1 // pred_check_branch
      %43 = sbr.rel (0) target = $region13
    $region12: #{tpu_custom_call.1} parent=1 // pred_region
      %45 = vsyncadd [#allocation10], 0
      %s46 = sshll.u32 %s2, 4
      %s47 = int_to_ptr.hbm [resolvable:$true] %s46
      %s48 = sshll.u32 [#allocation11], 4
      %s49 = int_to_ptr.vmem [resolvable:$true] %s48
      %54 = dma.hbm_to_vmem [thread:$0]  %s47, 2048, %s49, [#allocation10], 128, 128, 8
    $region13: #{tpu_custom_call.1} parent=1 // pred_fallthru
      _
    // Predicated region
    $region14: #{tpu_custom_call.1} parent=1 // pred_check
      _
    $region15: #{tpu_custom_call.1} parent=1 // pred_check_branch
      %56 = sbr.rel (0) target = $region17
    $region16: #{tpu_custom_call.1} parent=1 // pred_region
      %58 = vsyncadd [#allocation13], 0
      %s59 = sshll.u32 %s3, 4
      %s60 = int_to_ptr.hbm [resolvable:$true] %s59
      %s61 = sshll.u32 [#allocation12], 4
      %s62 = int_to_ptr.vmem [resolvable:$true] %s61
      %67 = dma.hbm_to_vmem [thread:$0]  %s60, 2048, %s62, [#allocation13], 128, 128, 8
    $region17: #{tpu_custom_call.1} parent=1 // pred_fallthru
      _
    // Predicated region
    $region18: #{tpu_custom_call.1} parent=1 // pred_check
      _
    $region19: #{tpu_custom_call.1} parent=1 // pred_check_branch
      %69 = sbr.rel (0) target = $region21
    $region20: #{tpu_custom_call.1} parent=1 // pred_region
      _
    $region21: #{tpu_custom_call.1} parent=1 // pred_fallthru
      _
    // Predicated region
    $region22: #{tpu_custom_call.1} parent=1 // pred_check
      _
    $region23: #{tpu_custom_call.1} parent=1 // pred_check_branch
      %71 = sbr.rel (0) target = $region25
    $region24: #{tpu_custom_call.1} parent=1 // pred_region
      _
    $region25: #{tpu_custom_call.1} parent=1 // pred_fallthru
      _
    // Predicated region
    $region26: #{tpu_custom_call.1} parent=1 // pred_check
      _
    $region27: #{tpu_custom_call.1} parent=1 // pred_check_branch
      %73 = sbr.rel (0) target = $region29
    $region28: #{tpu_custom_call.1} parent=1 // pred_region
      %75 = dma.done [#allocation7], 16384
    $region29: #{tpu_custom_call.1} parent=1 // pred_fallthru
      _
    // Predicated region
    $region30: #{tpu_custom_call.1} parent=1 // pred_check
      _
    $region31: #{tpu_custom_call.1} parent=1 // pred_check_branch
      %77 = sbr.rel (0) target = $region33
    $region32: #{tpu_custom_call.1} parent=1 // pred_region
      %79 = dma.done [#allocation10], 128
    $region33: #{tpu_custom_call.1} parent=1 // pred_fallthru
      _
    // Predicated region
    $region34: #{tpu_custom_call.1} parent=1 // pred_check
      _
    $region35: #{tpu_custom_call.1} parent=1 // pred_check_branch
      %81 = sbr.rel (0) target = $region37
    $region36: #{tpu_custom_call.1} parent=1 // pred_region
      %83 = dma.done [#allocation10], 2048
    $region37: #{tpu_custom_call.1} parent=1 // pred_fallthru
      _
    // Predicated region
    $region38: #{tpu_custom_call.1} parent=1 // pred_check
      _
    $region39: #{tpu_custom_call.1} parent=1 // pred_check_branch
      %85 = sbr.rel (0) target = $region41
    $region40: #{tpu_custom_call.1} parent=1 // pred_region
      %87 = dma.done [#allocation13], 2048
    $region41: #{tpu_custom_call.1} parent=1 // pred_fallthru
      _
    %p88 = scmp.eq.s32.totalorder 0, 0
    // Predicated region
    $region42: #{tpu_custom_call.1} parent=1 // pred_check
      %p89 = pneg %p88
    $region43: #{tpu_custom_call.1} parent=1 // pred_check_branch
      %91 = sbr.rel (%p89) target = $region45
    $region44: #{tpu_custom_call.1} parent=1 // pred_region
      %v92 = vld [vmem:[#allocation9] sm:$0xff]
      %v93 = vld [vmem:[#allocation12] sm:$0xff]
      %v94 = vld [vmem:[#allocation12 + $0x8] sm:$0xff]
      %v95 = vld [vmem:[#allocation12 + $0x10] sm:$0xff]
      %v96 = vld [vmem:[#allocation12 + $0x18] sm:$0xff]
      %v97 = vld [vmem:[#allocation12 + $0x20] sm:$0xff]
      %v98 = vld [vmem:[#allocation12 + $0x28] sm:$0xff]
      %v99 = vld [vmem:[#allocation12 + $0x30] sm:$0xff]
      %v100 = vld [vmem:[#allocation12 + $0x38] sm:$0xff]
      %v101 = vld [vmem:[#allocation12 + $0x40] sm:$0xff]
      %v102 = vld [vmem:[#allocation12 + $0x48] sm:$0xff]
      %v103 = vld [vmem:[#allocation12 + $0x50] sm:$0xff]
      %v104 = vld [vmem:[#allocation12 + $0x58] sm:$0xff]
      %v105 = vld [vmem:[#allocation12 + $0x60] sm:$0xff]
      %v106 = vld [vmem:[#allocation12 + $0x68] sm:$0xff]
      %v107 = vld [vmem:[#allocation12 + $0x70] sm:$0xff]
      %v108 = vld [vmem:[#allocation12 + $0x78] sm:$0xff]
      %v109 = vld [vmem:[%s4] sm:$0x1]
      %v111 = vperm.slane %v109, 0
      %113 = vmatpush.msra.mxu0 %v108
      %114 = vmatpush.msra.mxu0 %v107
      %115 = vmatpush.msra.mxu0 %v106
      %116 = vmatpush.msra.mxu0 %v105
      %117 = vmatpush.msra.mxu0 %v104
      %118 = vmatpush.msra.mxu0 %v103
      %119 = vmatpush.msra.mxu0 %v102
      %120 = vmatpush.msra.mxu0 %v101
      %121 = vmatpush.msra.mxu0 %v100
      %122 = vmatpush.msra.mxu0 %v99
      %123 = vmatpush.msra.mxu0 %v98
      %124 = vmatpush.msra.mxu0 %v97
      %125 = vmatpush.msra.mxu0 %v96
      %126 = vmatpush.msra.mxu0 %v95
      %127 = vmatpush.msra.mxu0 %v94
      %128 = vmatpush.msra.mxu0 %v93
      %129 = vmatmul.f32.gmra.mxu0 %v92
      %v130 = vpop.f32.mrf.mxu0
      %v131 = vadd.f32 %v111, %v130
      %132 = vdwg.mxu0
      %133 = vst [vmem:[#allocation2] sm:$0xff] %v131
      %vm134 = vcmask 7168
      %135 = vst.msk [vmem:[#allocation3] sm:$0xff] %vm134, -1e+30
      %136 = vst.msk [vmem:[#allocation4] sm:$0xff] %vm134, 0.0
      %137 = vst [vmem:[#allocation5] sm:$0xff] 0.0
    $region45: #{tpu_custom_call.1} parent=1 // pred_fallthru
      _
    %v138 = vld [vmem:[#allocation6] sm:$0xff]
    %v139 = vld [vmem:[#allocation6 + $0x8] sm:$0xff]
    %v140 = vld [vmem:[#allocation6 + $0x10] sm:$0xff]
    %v141 = vld [vmem:[#allocation6 + $0x18] sm:$0xff]
    %v142 = vld [vmem:[#allocation6 + $0x20] sm:$0xff]
    %v143 = vld [vmem:[#allocation6 + $0x28] sm:$0xff]
    %v144 = vld [vmem:[#allocation6 + $0x30] sm:$0xff]
    %v145 = vld [vmem:[#allocation6 + $0x38] sm:$0xff]
    %v146 = vld [vmem:[#allocation6 + $0x40] sm:$0xff]
    %v147 = vld [vmem:[#allocation6 + $0x48] sm:$0xff]
    %v148 = vld [vmem:[#allocation6 + $0x50] sm:$0xff]
    %v149 = vld [vmem:[#allocation6 + $0x58] sm:$0xff]
    %v150 = vld [vmem:[#allocation6 + $0x60] sm:$0xff]
    %v151 = vld [vmem:[#allocation6 + $0x68] sm:$0xff]
    %v152 = vld [vmem:[#allocation6 + $0x70] sm:$0xff]
    %v153 = vld [vmem:[#allocation6 + $0x78] sm:$0xff]
    %v154 = vld [vmem:[#allocation6 + $0x80] sm:$0xff]
    %v155 = vld [vmem:[#allocation6 + $0x88] sm:$0xff]
    %v156 = vld [vmem:[#allocation6 + $0x90] sm:$0xff]
    %v157 = vld [vmem:[#allocation6 + $0x98] sm:$0xff]
    %v158 = vld [vmem:[#allocation6 + $0xa0] sm:$0xff]
    %v159 = vld [vmem:[#allocation6 + $0xa8] sm:$0xff]
    %v160 = vld [vmem:[#allocation6 + $0xb0] sm:$0xff]
    %v161 = vld [vmem:[#allocation6 + $0xb8] sm:$0xff]
    %v162 = vld [vmem:[#allocation6 + $0xc0] sm:$0xff]
    %v163 = vld [vmem:[#allocation6 + $0xc8] sm:$0xff]
    %v164 = vld [vmem:[#allocation6 + $0xd0] sm:$0xff]
    %v165 = vld [vmem:[#allocation6 + $0xd8] sm:$0xff]
    %v166 = vld [vmem:[#allocation6 + $0xe0] sm:$0xff]
    %v167 = vld [vmem:[#allocation6 + $0xe8] sm:$0xff]
    %v168 = vld [vmem:[#allocation6 + $0xf0] sm:$0xff]
    %v169 = vld [vmem:[#allocation6 + $0xf8] sm:$0xff]
    %v170 = vld [vmem:[#allocation6 + $0x100] sm:$0xff]
    %v171 = vld [vmem:[#allocation6 + $0x108] sm:$0xff]
    %v172 = vld [vmem:[#allocation6 + $0x110] sm:$0xff]
    %v173 = vld [vmem:[#allocation6 + $0x118] sm:$0xff]
    %v174 = vld [vmem:[#allocation6 + $0x120] sm:$0xff]
    %v175 = vld [vmem:[#allocation6 + $0x128] sm:$0xff]
    %v176 = vld [vmem:[#allocation6 + $0x130] sm:$0xff]
    %v177 = vld [vmem:[#allocation6 + $0x138] sm:$0xff]
    %v178 = vld [vmem:[#allocation6 + $0x140] sm:$0xff]
    %v179 = vld [vmem:[#allocation6 + $0x148] sm:$0xff]
    %v180 = vld [vmem:[#allocation6 + $0x150] sm:$0xff]
    %v181 = vld [vmem:[#allocation6 + $0x158] sm:$0xff]
    %v182 = vld [vmem:[#allocation6 + $0x160] sm:$0xff]
    %v183 = vld [vmem:[#allocation6 + $0x168] sm:$0xff]
    %v184 = vld [vmem:[#allocation6 + $0x170] sm:$0xff]
    %v185 = vld [vmem:[#allocation6 + $0x178] sm:$0xff]
    %v186 = vld [vmem:[#allocation6 + $0x180] sm:$0xff]
    %v187 = vld [vmem:[#allocation6 + $0x188] sm:$0xff]
    %v188 = vld [vmem:[#allocation6 + $0x190] sm:$0xff]
    %v189 = vld [vmem:[#allocation6 + $0x198] sm:$0xff]
    %v190 = vld [vmem:[#allocation6 + $0x1a0] sm:$0xff]
    %v191 = vld [vmem:[#allocation6 + $0x1a8] sm:$0xff]
    %v192 = vld [vmem:[#allocation6 + $0x1b0] sm:$0xff]
    %v193 = vld [vmem:[#allocation6 + $0x1b8] sm:$0xff]
    %v194 = vld [vmem:[#allocation6 + $0x1c0] sm:$0xff]
    %v195 = vld [vmem:[#allocation6 + $0x1c8] sm:$0xff]
    %v196 = vld [vmem:[#allocation6 + $0x1d0] sm:$0xff]
    %v197 = vld [vmem:[#allocation6 + $0x1d8] sm:$0xff]
    %v198 = vld [vmem:[#allocation6 + $0x1e0] sm:$0xff]
    %v199 = vld [vmem:[#allocation6 + $0x1e8] sm:$0xff]
    %v200 = vld [vmem:[#allocation6 + $0x1f0] sm:$0xff]
    %v201 = vld [vmem:[#allocation6 + $0x1f8] sm:$0xff]
    %v202 = vld [vmem:[#allocation6 + $0x200] sm:$0xff]
    %v203 = vld [vmem:[#allocation6 + $0x208] sm:$0xff]
    %v204 = vld [vmem:[#allocation6 + $0x210] sm:$0xff]
    %v205 = vld [vmem:[#allocation6 + $0x218] sm:$0xff]
    %v206 = vld [vmem:[#allocation6 + $0x220] sm:$0xff]
    %v207 = vld [vmem:[#allocation6 + $0x228] sm:$0xff]
    %v208 = vld [vmem:[#allocation6 + $0x230] sm:$0xff]
    %v209 = vld [vmem:[#allocation6 + $0x238] sm:$0xff]
    %v210 = vld [vmem:[#allocation6 + $0x240] sm:$0xff]
    %v211 = vld [vmem:[#allocation6 + $0x248] sm:$0xff]
    %v212 = vld [vmem:[#allocation6 + $0x250] sm:$0xff]
    %v213 = vld [vmem:[#allocation6 + $0x258] sm:$0xff]
    %v214 = vld [vmem:[#allocation6 + $0x260] sm:$0xff]
    %v215 = vld [vmem:[#allocation6 + $0x268] sm:$0xff]
    %v216 = vld [vmem:[#allocation6 + $0x270] sm:$0xff]
    %v217 = vld [vmem:[#allocation6 + $0x278] sm:$0xff]
    %v218 = vld [vmem:[#allocation6 + $0x280] sm:$0xff]
    %v219 = vld [vmem:[#allocation6 + $0x288] sm:$0xff]
    %v220 = vld [vmem:[#allocation6 + $0x290] sm:$0xff]
    %v221 = vld [vmem:[#allocation6 + $0x298] sm:$0xff]
    %v222 = vld [vmem:[#allocation6 + $0x2a0] sm:$0xff]
    %v223 = vld [vmem:[#allocation6 + $0x2a8] sm:$0xff]
    %v224 = vld [vmem:[#allocation6 + $0x2b0] sm:$0xff]
    %v225 = vld [vmem:[#allocation6 + $0x2b8] sm:$0xff]
    %v226 = vld [vmem:[#allocation6 + $0x2c0] sm:$0xff]
    %v227 = vld [vmem:[#allocation6 + $0x2c8] sm:$0xff]
    %v228 = vld [vmem:[#allocation6 + $0x2d0] sm:$0xff]
    %v229 = vld [vmem:[#allocation6 + $0x2d8] sm:$0xff]
    %v230 = vld [vmem:[#allocation6 + $0x2e0] sm:$0xff]
    %v231 = vld [vmem:[#allocation6 + $0x2e8] sm:$0xff]
    %v232 = vld [vmem:[#allocation6 + $0x2f0] sm:$0xff]
    %v233 = vld [vmem:[#allocation6 + $0x2f8] sm:$0xff]
    %v234 = vld [vmem:[#allocation6 + $0x300] sm:$0xff]
    %v235 = vld [vmem:[#allocation6 + $0x308] sm:$0xff]
    %v236 = vld [vmem:[#allocation6 + $0x310] sm:$0xff]
    %v237 = vld [vmem:[#allocation6 + $0x318] sm:$0xff]
    %v238 = vld [vmem:[#allocation6 + $0x320] sm:$0xff]
    %v239 = vld [vmem:[#allocation6 + $0x328] sm:$0xff]
    %v240 = vld [vmem:[#allocation6 + $0x330] sm:$0xff]
    %v241 = vld [vmem:[#allocation6 + $0x338] sm:$0xff]
    %v242 = vld [vmem:[#allocation6 + $0x340] sm:$0xff]
    %v243 = vld [vmem:[#allocation6 + $0x348] sm:$0xff]
    %v244 = vld [vmem:[#allocation6 + $0x350] sm:$0xff]
    %v245 = vld [vmem:[#allocation6 + $0x358] sm:$0xff]
    %v246 = vld [vmem:[#allocation6 + $0x360] sm:$0xff]
    %v247 = vld [vmem:[#allocation6 + $0x368] sm:$0xff]
    %v248 = vld [vmem:[#allocation6 + $0x370] sm:$0xff]
    %v249 = vld [vmem:[#allocation6 + $0x378] sm:$0xff]
    %v250 = vld [vmem:[#allocation6 + $0x380] sm:$0xff]
    %v251 = vld [vmem:[#allocation6 + $0x388] sm:$0xff]
    %v252 = vld [vmem:[#allocation6 + $0x390] sm:$0xff]
    %v253 = vld [vmem:[#allocation6 + $0x398] sm:$0xff]
    %v254 = vld [vmem:[#allocation6 + $0x3a0] sm:$0xff]
    %v255 = vld [vmem:[#allocation6 + $0x3a8] sm:$0xff]
    %v256 = vld [vmem:[#allocation6 + $0x3b0] sm:$0xff]
    %v257 = vld [vmem:[#allocation6 + $0x3b8] sm:$0xff]
    %v258 = vld [vmem:[#allocation6 + $0x3c0] sm:$0xff]
    %v259 = vld [vmem:[#allocation6 + $0x3c8] sm:$0xff]
    %v260 = vld [vmem:[#allocation6 + $0x3d0] sm:$0xff]
    %v261 = vld [vmem:[#allocation6 + $0x3d8] sm:$0xff]
    %v262 = vld [vmem:[#allocation6 + $0x3e0] sm:$0xff]
    %v263 = vld [vmem:[#allocation6 + $0x3e8] sm:$0xff]
    %v264 = vld [vmem:[#allocation6 + $0x3f0] sm:$0xff]
    %v265 = vld [vmem:[#allocation6 + $0x3f8] sm:$0xff]
    %v266 = vld [vmem:[#allocation11] sm:$0xff]
    %v267 = vld [vmem:[#allocation11 + $0x8] sm:$0xff]
    %v268 = vld [vmem:[#allocation11 + $0x10] sm:$0xff]
    %v269 = vld [vmem:[#allocation11 + $0x18] sm:$0xff]
    %v270 = vld [vmem:[#allocation11 + $0x20] sm:$0xff]
    %v271 = vld [vmem:[#allocation11 + $0x28] sm:$0xff]
    %v272 = vld [vmem:[#allocation11 + $0x30] sm:$0xff]
    %v273 = vld [vmem:[#allocation11 + $0x38] sm:$0xff]
    %v274 = vld [vmem:[#allocation11 + $0x40] sm:$0xff]
    %v275 = vld [vmem:[#allocation11 + $0x48] sm:$0xff]
    %v276 = vld [vmem:[#allocation11 + $0x50] sm:$0xff]
    %v277 = vld [vmem:[#allocation11 + $0x58] sm:$0xff]
    %v278 = vld [vmem:[#allocation11 + $0x60] sm:$0xff]
    %v279 = vld [vmem:[#allocation11 + $0x68] sm:$0xff]
    %v280 = vld [vmem:[#allocation11 + $0x70] sm:$0xff]
    %v281 = vld [vmem:[#allocation11 + $0x78] sm:$0xff]
    %282 = vmatpush.msra.mxu0 %v281
    %283 = vmatpush.msra.mxu0 %v280
    %284 = vmatpush.msra.mxu0 %v279
    %285 = vmatpush.msra.mxu0 %v278
    %286 = vmatpush.msra.mxu0 %v277
    %287 = vmatpush.msra.mxu0 %v276
    %288 = vmatpush.msra.mxu0 %v275
    %289 = vmatpush.msra.mxu0 %v274
    %290 = vmatpush.msra.mxu0 %v273
    %291 = vmatpush.msra.mxu0 %v272
    %292 = vmatpush.msra.mxu0 %v271
    %293 = vmatpush.msra.mxu0 %v270
    %294 = vmatpush.msra.mxu0 %v269
    %295 = vmatpush.msra.mxu0 %v268
    %296 = vmatpush.msra.mxu0 %v267
    %297 = vmatpush.msra.mxu0 %v266
    %298 = vmatmul.f32.gmra.mxu0 %v138
    %v299 = vpop.f32.mrf.mxu0
    %v300 = vadd.f32 0.0, %v299
    %301 = vmatmul.f32.gmra.mxu0 %v139
    %v302 = vpop.f32.mrf.mxu0
    %v303 = vadd.f32 0.0, %v302
    %304 = vmatmul.f32.gmra.mxu0 %v140
    %v305 = vpop.f32.mrf.mxu0
    %v306 = vadd.f32 0.0, %v305
    %307 = vmatmul.f32.gmra.mxu0 %v141
    %v308 = vpop.f32.mrf.mxu0
    %v309 = vadd.f32 0.0, %v308
    %310 = vmatmul.f32.gmra.mxu0 %v142
    %v311 = vpop.f32.mrf.mxu0
    %v312 = vadd.f32 0.0, %v311
    %313 = vmatmul.f32.gmra.mxu0 %v143
    %v314 = vpop.f32.mrf.mxu0
    %v315 = vadd.f32 0.0, %v314
    %316 = vmatmul.f32.gmra.mxu0 %v144
    %v317 = vpop.f32.mrf.mxu0
    %v318 = vadd.f32 0.0, %v317
    %319 = vmatmul.f32.gmra.mxu0 %v145
    %v320 = vpop.f32.mrf.mxu0
    %v321 = vadd.f32 0.0, %v320
    %322 = vmatmul.f32.gmra.mxu0 %v146
    %v323 = vpop.f32.mrf.mxu0
    %v324 = vadd.f32 0.0, %v323
    %325 = vmatmul.f32.gmra.mxu0 %v147
    %v326 = vpop.f32.mrf.mxu0
    %v327 = vadd.f32 0.0, %v326
    %328 = vmatmul.f32.gmra.mxu0 %v148
    %v329 = vpop.f32.mrf.mxu0
    %v330 = vadd.f32 0.0, %v329
    %331 = vmatmul.f32.gmra.mxu0 %v149
    %v332 = vpop.f32.mrf.mxu0
    %v333 = vadd.f32 0.0, %v332
    %334 = vmatmul.f32.gmra.mxu0 %v150
    %v335 = vpop.f32.mrf.mxu0
    %v336 = vadd.f32 0.0, %v335
    %337 = vmatmul.f32.gmra.mxu0 %v151
    %v338 = vpop.f32.mrf.mxu0
    %v339 = vadd.f32 0.0, %v338
    %340 = vmatmul.f32.gmra.mxu0 %v152
    %v341 = vpop.f32.mrf.mxu0
    %v342 = vadd.f32 0.0, %v341
    %343 = vmatmul.f32.gmra.mxu0 %v153
    %v344 = vpop.f32.mrf.mxu0
    %v345 = vadd.f32 0.0, %v344
    %346 = vmatmul.f32.gmra.mxu0 %v154
    %v347 = vpop.f32.mrf.mxu0
    %v348 = vadd.f32 0.0, %v347
    %349 = vmatmul.f32.gmra.mxu0 %v155
    %v350 = vpop.f32.mrf.mxu0
    %v351 = vadd.f32 0.0, %v350
    %352 = vmatmul.f32.gmra.mxu0 %v156
    %v353 = vpop.f32.mrf.mxu0
    %v354 = vadd.f32 0.0, %v353
    %355 = vmatmul.f32.gmra.mxu0 %v157
    %v356 = vpop.f32.mrf.mxu0
    %v357 = vadd.f32 0.0, %v356
    %358 = vmatmul.f32.gmra.mxu0 %v158
    %v359 = vpop.f32.mrf.mxu0
    %v360 = vadd.f32 0.0, %v359
    %361 = vmatmul.f32.gmra.mxu0 %v159
    %v362 = vpop.f32.mrf.mxu0
    %v363 = vadd.f32 0.0, %v362
    %364 = vmatmul.f32.gmra.mxu0 %v160
    %v365 = vpop.f32.mrf.mxu0
    %v366 = vadd.f32 0.0, %v365
    %367 = vmatmul.f32.gmra.mxu0 %v161
    %v368 = vpop.f32.mrf.mxu0
    %v369 = vadd.f32 0.0, %v368
    %370 = vmatmul.f32.gmra.mxu0 %v162
    %v371 = vpop.f32.mrf.mxu0
    %v372 = vadd.f32 0.0, %v371
    %373 = vmatmul.f32.gmra.mxu0 %v163
    %v374 = vpop.f32.mrf.mxu0
    %v375 = vadd.f32 0.0, %v374
    %376 = vmatmul.f32.gmra.mxu0 %v164
    %v377 = vpop.f32.mrf.mxu0
    %v378 = vadd.f32 0.0, %v377
    %379 = vmatmul.f32.gmra.mxu0 %v165
    %v380 = vpop.f32.mrf.mxu0
    %v381 = vadd.f32 0.0, %v380
    %382 = vmatmul.f32.gmra.mxu0 %v166
    %v383 = vpop.f32.mrf.mxu0
    %v384 = vadd.f32 0.0, %v383
    %385 = vmatmul.f32.gmra.mxu0 %v167
    %v386 = vpop.f32.mrf.mxu0
    %v387 = vadd.f32 0.0, %v386
    %388 = vmatmul.f32.gmra.mxu0 %v168
    %v389 = vpop.f32.mrf.mxu0
    %v390 = vadd.f32 0.0, %v389
    %391 = vmatmul.f32.gmra.mxu0 %v169
    %v392 = vpop.f32.mrf.mxu0
    %v393 = vadd.f32 0.0, %v392
    %394 = vmatmul.f32.gmra.mxu0 %v170
    %v395 = vpop.f32.mrf.mxu0
    %v396 = vadd.f32 0.0, %v395
    %397 = vmatmul.f32.gmra.mxu0 %v171
    %v398 = vpop.f32.mrf.mxu0
    %v399 = vadd.f32 0.0, %v398
    %400 = vmatmul.f32.gmra.mxu0 %v172
    %v401 = vpop.f32.mrf.mxu0
    %v402 = vadd.f32 0.0, %v401
    %403 = vmatmul.f32.gmra.mxu0 %v173
    %v404 = vpop.f32.mrf.mxu0
    %v405 = vadd.f32 0.0, %v404
    %406 = vmatmul.f32.gmra.mxu0 %v174
    %v407 = vpop.f32.mrf.mxu0
    %v408 = vadd.f32 0.0, %v407
    %409 = vmatmul.f32.gmra.mxu0 %v175
    %v410 = vpop.f32.mrf.mxu0
    %v411 = vadd.f32 0.0, %v410
    %412 = vmatmul.f32.gmra.mxu0 %v176
    %v413 = vpop.f32.mrf.mxu0
    %v414 = vadd.f32 0.0, %v413
    %415 = vmatmul.f32.gmra.mxu0 %v177
    %v416 = vpop.f32.mrf.mxu0
    %v417 = vadd.f32 0.0, %v416
    %418 = vmatmul.f32.gmra.mxu0 %v178
    %v419 = vpop.f32.mrf.mxu0
    %v420 = vadd.f32 0.0, %v419
    %421 = vmatmul.f32.gmra.mxu0 %v179
    %v422 = vpop.f32.mrf.mxu0
    %v423 = vadd.f32 0.0, %v422
    %424 = vmatmul.f32.gmra.mxu0 %v180
    %v425 = vpop.f32.mrf.mxu0
    %v426 = vadd.f32 0.0, %v425
    %427 = vmatmul.f32.gmra.mxu0 %v181
    %v428 = vpop.f32.mrf.mxu0
    %v429 = vadd.f32 0.0, %v428
    %430 = vmatmul.f32.gmra.mxu0 %v182
    %v431 = vpop.f32.mrf.mxu0
    %v432 = vadd.f32 0.0, %v431
    %433 = vmatmul.f32.gmra.mxu0 %v183
    %v434 = vpop.f32.mrf.mxu0
    %v435 = vadd.f32 0.0, %v434
    %436 = vmatmul.f32.gmra.mxu0 %v184
    %v437 = vpop.f32.mrf.mxu0
    %v438 = vadd.f32 0.0, %v437
    %439 = vmatmul.f32.gmra.mxu0 %v185
    %v440 = vpop.f32.mrf.mxu0
    %v441 = vadd.f32 0.0, %v440
    %442 = vmatmul.f32.gmra.mxu0 %v186
    %v443 = vpop.f32.mrf.mxu0
    %v444 = vadd.f32 0.0, %v443
    %445 = vmatmul.f32.gmra.mxu0 %v187
    %v446 = vpop.f32.mrf.mxu0
    %v447 = vadd.f32 0.0, %v446
    %448 = vmatmul.f32.gmra.mxu0 %v188
    %v449 = vpop.f32.mrf.mxu0
    %v450 = vadd.f32 0.0, %v449
    %451 = vmatmul.f32.gmra.mxu0 %v189
    %v452 = vpop.f32.mrf.mxu0
    %v453 = vadd.f32 0.0, %v452
    %454 = vmatmul.f32.gmra.mxu0 %v190
    %v455 = vpop.f32.mrf.mxu0
    %v456 = vadd.f32 0.0, %v455
    %457 = vmatmul.f32.gmra.mxu0 %v191
    %v458 = vpop.f32.mrf.mxu0
    %v459 = vadd.f32 0.0, %v458
    %460 = vmatmul.f32.gmra.mxu0 %v192
    %v461 = vpop.f32.mrf.mxu0
    %v462 = vadd.f32 0.0, %v461
    %463 = vmatmul.f32.gmra.mxu0 %v193
    %v464 = vpop.f32.mrf.mxu0
    %v465 = vadd.f32 0.0, %v464
    %466 = vmatmul.f32.gmra.mxu0 %v194
    %v467 = vpop.f32.mrf.mxu0
    %v468 = vadd.f32 0.0, %v467
    %469 = vmatmul.f32.gmra.mxu0 %v195
    %v470 = vpop.f32.mrf.mxu0
    %v471 = vadd.f32 0.0, %v470
    %472 = vmatmul.f32.gmra.mxu0 %v196
    %v473 = vpop.f32.mrf.mxu0
    %v474 = vadd.f32 0.0, %v473
    %475 = vmatmul.f32.gmra.mxu0 %v197
    %v476 = vpop.f32.mrf.mxu0
    %v477 = vadd.f32 0.0, %v476
    %478 = vmatmul.f32.gmra.mxu0 %v198
    %v479 = vpop.f32.mrf.mxu0
    %v480 = vadd.f32 0.0, %v479
    %481 = vmatmul.f32.gmra.mxu0 %v199
    %v482 = vpop.f32.mrf.mxu0
    %v483 = vadd.f32 0.0, %v482
    %484 = vmatmul.f32.gmra.mxu0 %v200
    %v485 = vpop.f32.mrf.mxu0
    %v486 = vadd.f32 0.0, %v485
    %487 = vmatmul.f32.gmra.mxu0 %v201
    %v488 = vpop.f32.mrf.mxu0
    %v489 = vadd.f32 0.0, %v488
    %490 = vmatmul.f32.gmra.mxu0 %v202
    %v491 = vpop.f32.mrf.mxu0
    %v492 = vadd.f32 0.0, %v491
    %493 = vmatmul.f32.gmra.mxu0 %v203
    %v494 = vpop.f32.mrf.mxu0
    %v495 = vadd.f32 0.0, %v494
    %496 = vmatmul.f32.gmra.mxu0 %v204
    %v497 = vpop.f32.mrf.mxu0
    %v498 = vadd.f32 0.0, %v497
    %499 = vmatmul.f32.gmra.mxu0 %v205
    %v500 = vpop.f32.mrf.mxu0
    %v501 = vadd.f32 0.0, %v500
    %502 = vmatmul.f32.gmra.mxu0 %v206
    %v503 = vpop.f32.mrf.mxu0
    %v504 = vadd.f32 0.0, %v503
    %505 = vmatmul.f32.gmra.mxu0 %v207
    %v506 = vpop.f32.mrf.mxu0
    %v507 = vadd.f32 0.0, %v506
    %508 = vmatmul.f32.gmra.mxu0 %v208
    %v509 = vpop.f32.mrf.mxu0
    %v510 = vadd.f32 0.0, %v509
    %511 = vmatmul.f32.gmra.mxu0 %v209
    %v512 = vpop.f32.mrf.mxu0
    %v513 = vadd.f32 0.0, %v512
    %514 = vmatmul.f32.gmra.mxu0 %v210
    %v515 = vpop.f32.mrf.mxu0
    %v516 = vadd.f32 0.0, %v515
    %517 = vmatmul.f32.gmra.mxu0 %v211
    %v518 = vpop.f32.mrf.mxu0
    %v519 = vadd.f32 0.0, %v518
    %520 = vmatmul.f32.gmra.mxu0 %v212
    %v521 = vpop.f32.mrf.mxu0
    %v522 = vadd.f32 0.0, %v521
    %523 = vmatmul.f32.gmra.mxu0 %v213
    %v524 = vpop.f32.mrf.mxu0
    %v525 = vadd.f32 0.0, %v524
    %526 = vmatmul.f32.gmra.mxu0 %v214
    %v527 = vpop.f32.mrf.mxu0
    %v528 = vadd.f32 0.0, %v527
    %529 = vmatmul.f32.gmra.mxu0 %v215
    %v530 = vpop.f32.mrf.mxu0
    %v531 = vadd.f32 0.0, %v530
    %532 = vmatmul.f32.gmra.mxu0 %v216
    %v533 = vpop.f32.mrf.mxu0
    %v534 = vadd.f32 0.0, %v533
    %535 = vmatmul.f32.gmra.mxu0 %v217
    %v536 = vpop.f32.mrf.mxu0
    %v537 = vadd.f32 0.0, %v536
    %538 = vmatmul.f32.gmra.mxu0 %v218
    %v539 = vpop.f32.mrf.mxu0
    %v540 = vadd.f32 0.0, %v539
    %541 = vmatmul.f32.gmra.mxu0 %v219
    %v542 = vpop.f32.mrf.mxu0
    %v543 = vadd.f32 0.0, %v542
    %544 = vmatmul.f32.gmra.mxu0 %v220
    %v545 = vpop.f32.mrf.mxu0
    %v546 = vadd.f32 0.0, %v545
    %547 = vmatmul.f32.gmra.mxu0 %v221
    %v548 = vpop.f32.mrf.mxu0
    %v549 = vadd.f32 0.0, %v548
    %550 = vmatmul.f32.gmra.mxu0 %v222
    %v551 = vpop.f32.mrf.mxu0
    %v552 = vadd.f32 0.0, %v551
    %553 = vmatmul.f32.gmra.mxu0 %v223
    %v554 = vpop.f32.mrf.mxu0
    %v555 = vadd.f32 0.0, %v554
    %556 = vmatmul.f32.gmra.mxu0 %v224
    %v557 = vpop.f32.mrf.mxu0
    %v558 = vadd.f32 0.0, %v557
    %559 = vmatmul.f32.gmra.mxu0 %v225
    %v560 = vpop.f32.mrf.mxu0
    %v561 = vadd.f32 0.0, %v560
    %562 = vmatmul.f32.gmra.mxu0 %v226
    %v563 = vpop.f32.mrf.mxu0
    %v564 = vadd.f32 0.0, %v563
    %565 = vmatmul.f32.gmra.mxu0 %v227
    %v566 = vpop.f32.mrf.mxu0
    %v567 = vadd.f32 0.0, %v566
    %568 = vmatmul.f32.gmra.mxu0 %v228
    %v569 = vpop.f32.mrf.mxu0
    %v570 = vadd.f32 0.0, %v569
    %571 = vmatmul.f32.gmra.mxu0 %v229
    %v572 = vpop.f32.mrf.mxu0
    %v573 = vadd.f32 0.0, %v572
    %574 = vmatmul.f32.gmra.mxu0 %v230
    %v575 = vpop.f32.mrf.mxu0
    %v576 = vadd.f32 0.0, %v575
    %577 = vmatmul.f32.gmra.mxu0 %v231
    %v578 = vpop.f32.mrf.mxu0
    %v579 = vadd.f32 0.0, %v578
    %580 = vmatmul.f32.gmra.mxu0 %v232
    %v581 = vpop.f32.mrf.mxu0
    %v582 = vadd.f32 0.0, %v581
    %583 = vmatmul.f32.gmra.mxu0 %v233
    %v584 = vpop.f32.mrf.mxu0
    %v585 = vadd.f32 0.0, %v584
    %586 = vmatmul.f32.gmra.mxu0 %v234
    %v587 = vpop.f32.mrf.mxu0
    %v588 = vadd.f32 0.0, %v587
    %589 = vmatmul.f32.gmra.mxu0 %v235
    %v590 = vpop.f32.mrf.mxu0
    %v591 = vadd.f32 0.0, %v590
    %592 = vmatmul.f32.gmra.mxu0 %v236
    %v593 = vpop.f32.mrf.mxu0
    %v594 = vadd.f32 0.0, %v593
    %595 = vmatmul.f32.gmra.mxu0 %v237
    %v596 = vpop.f32.mrf.mxu0
    %v597 = vadd.f32 0.0, %v596
    %598 = vmatmul.f32.gmra.mxu0 %v238
    %v599 = vpop.f32.mrf.mxu0
    %v600 = vadd.f32 0.0, %v599
    %601 = vmatmul.f32.gmra.mxu0 %v239
    %v602 = vpop.f32.mrf.mxu0
    %v603 = vadd.f32 0.0, %v602
    %604 = vmatmul.f32.gmra.mxu0 %v240
    %v605 = vpop.f32.mrf.mxu0
    %v606 = vadd.f32 0.0, %v605
    %607 = vmatmul.f32.gmra.mxu0 %v241
    %v608 = vpop.f32.mrf.mxu0
    %v609 = vadd.f32 0.0, %v608
    %610 = vmatmul.f32.gmra.mxu0 %v242
    %v611 = vpop.f32.mrf.mxu0
    %v612 = vadd.f32 0.0, %v611
    %613 = vmatmul.f32.gmra.mxu0 %v243
    %v614 = vpop.f32.mrf.mxu0
    %v615 = vadd.f32 0.0, %v614
    %616 = vmatmul.f32.gmra.mxu0 %v244
    %v617 = vpop.f32.mrf.mxu0
    %v618 = vadd.f32 0.0, %v617
    %619 = vmatmul.f32.gmra.mxu0 %v245
    %v620 = vpop.f32.mrf.mxu0
    %v621 = vadd.f32 0.0, %v620
    %622 = vmatmul.f32.gmra.mxu0 %v246
    %v623 = vpop.f32.mrf.mxu0
    %v624 = vadd.f32 0.0, %v623
    %625 = vmatmul.f32.gmra.mxu0 %v247
    %v626 = vpop.f32.mrf.mxu0
    %v627 = vadd.f32 0.0, %v626
    %628 = vmatmul.f32.gmra.mxu0 %v248
    %v629 = vpop.f32.mrf.mxu0
    %v630 = vadd.f32 0.0, %v629
    %631 = vmatmul.f32.gmra.mxu0 %v249
    %v632 = vpop.f32.mrf.mxu0
    %v633 = vadd.f32 0.0, %v632
    %634 = vmatmul.f32.gmra.mxu0 %v250
    %v635 = vpop.f32.mrf.mxu0
    %v636 = vadd.f32 0.0, %v635
    %637 = vmatmul.f32.gmra.mxu0 %v251
    %v638 = vpop.f32.mrf.mxu0
    %v639 = vadd.f32 0.0, %v638
    %640 = vmatmul.f32.gmra.mxu0 %v252
    %v641 = vpop.f32.mrf.mxu0
    %v642 = vadd.f32 0.0, %v641
    %643 = vmatmul.f32.gmra.mxu0 %v253
    %v644 = vpop.f32.mrf.mxu0
    %v645 = vadd.f32 0.0, %v644
    %646 = vmatmul.f32.gmra.mxu0 %v254
    %v647 = vpop.f32.mrf.mxu0
    %v648 = vadd.f32 0.0, %v647
    %649 = vmatmul.f32.gmra.mxu0 %v255
    %v650 = vpop.f32.mrf.mxu0
    %v651 = vadd.f32 0.0, %v650
    %652 = vmatmul.f32.gmra.mxu0 %v256
    %v653 = vpop.f32.mrf.mxu0
    %v654 = vadd.f32 0.0, %v653
    %655 = vmatmul.f32.gmra.mxu0 %v257
    %v656 = vpop.f32.mrf.mxu0
    %v657 = vadd.f32 0.0, %v656
    %658 = vmatmul.f32.gmra.mxu0 %v258
    %v659 = vpop.f32.mrf.mxu0
    %v660 = vadd.f32 0.0, %v659
    %661 = vmatmul.f32.gmra.mxu0 %v259
    %v662 = vpop.f32.mrf.mxu0
    %v663 = vadd.f32 0.0, %v662
    %664 = vmatmul.f32.gmra.mxu0 %v260
    %v665 = vpop.f32.mrf.mxu0
    %v666 = vadd.f32 0.0, %v665
    %667 = vmatmul.f32.gmra.mxu0 %v261
    %v668 = vpop.f32.mrf.mxu0
    %v669 = vadd.f32 0.0, %v668
    %670 = vmatmul.f32.gmra.mxu0 %v262
    %v671 = vpop.f32.mrf.mxu0
    %v672 = vadd.f32 0.0, %v671
    %673 = vmatmul.f32.gmra.mxu0 %v263
    %v674 = vpop.f32.mrf.mxu0
    %v675 = vadd.f32 0.0, %v674
    %676 = vmatmul.f32.gmra.mxu0 %v264
    %v677 = vpop.f32.mrf.mxu0
    %v678 = vadd.f32 0.0, %v677
    %679 = vmatmul.f32.gmra.mxu0 %v265
    %v680 = vpop.f32.mrf.mxu0
    %v681 = vadd.f32 0.0, %v680
    %682 = vdwg.mxu0
    %v683 = vld [vmem:[#allocation2] sm:$0xff]
    %v685 = vrot.slane %v683, 1
    %v686 = vrot.slane %v683, 2
    %v687 = vrot.slane %v683, 3
    %v688 = vrot.slane %v683, 4
    %v689 = vrot.slane %v683, 5
    %v690 = vrot.slane %v683, 6
    %v691 = vrot.slane %v683, 7
    %v692 = vperm.slane %v683, 0
    %v693 = vperm.slane %v685, 0
    %v694 = vperm.slane %v686, 0
    %v695 = vperm.slane %v687, 0
    %v696 = vperm.slane %v688, 0
    %v697 = vperm.slane %v689, 0
    %v698 = vperm.slane %v690, 0
    %v699 = vperm.slane %v691, 0
    %v708 = vadd.f32 %v300, %v692
    %v709 = vadd.f32 %v303, %v692
    %v710 = vadd.f32 %v306, %v692
    %v711 = vadd.f32 %v309, %v692
    %v712 = vadd.f32 %v312, %v692
    %v713 = vadd.f32 %v315, %v692
    %v714 = vadd.f32 %v318, %v692
    %v715 = vadd.f32 %v321, %v692
    %v716 = vadd.f32 %v324, %v692
    %v717 = vadd.f32 %v327, %v692
    %v718 = vadd.f32 %v330, %v692
    %v719 = vadd.f32 %v333, %v692
    %v720 = vadd.f32 %v336, %v692
    %v721 = vadd.f32 %v339, %v692
    %v722 = vadd.f32 %v342, %v692
    %v723 = vadd.f32 %v345, %v692
    %v724 = vadd.f32 %v348, %v693
    %v725 = vadd.f32 %v351, %v693
    %v726 = vadd.f32 %v354, %v693
    %v727 = vadd.f32 %v357, %v693
    %v728 = vadd.f32 %v360, %v693
    %v729 = vadd.f32 %v363, %v693
    %v730 = vadd.f32 %v366, %v693
    %v731 = vadd.f32 %v369, %v693
    %v732 = vadd.f32 %v372, %v693
    %v733 = vadd.f32 %v375, %v693
    %v734 = vadd.f32 %v378, %v693
    %v735 = vadd.f32 %v381, %v693
    %v736 = vadd.f32 %v384, %v693
    %v737 = vadd.f32 %v387, %v693
    %v738 = vadd.f32 %v390, %v693
    %v739 = vadd.f32 %v393, %v693
    %v740 = vadd.f32 %v396, %v694
    %v741 = vadd.f32 %v399, %v694
    %v742 = vadd.f32 %v402, %v694
    %v743 = vadd.f32 %v405, %v694
    %v744 = vadd.f32 %v408, %v694
    %v745 = vadd.f32 %v411, %v694
    %v746 = vadd.f32 %v414, %v694
    %v747 = vadd.f32 %v417, %v694
    %v748 = vadd.f32 %v420, %v694
    %v749 = vadd.f32 %v423, %v694
    %v750 = vadd.f32 %v426, %v694
    %v751 = vadd.f32 %v429, %v694
    %v752 = vadd.f32 %v432, %v694
    %v753 = vadd.f32 %v435, %v694
    %v754 = vadd.f32 %v438, %v694
    %v755 = vadd.f32 %v441, %v694
    %v756 = vadd.f32 %v444, %v695
    %v757 = vadd.f32 %v447, %v695
    %v758 = vadd.f32 %v450, %v695
    %v759 = vadd.f32 %v453, %v695
    %v760 = vadd.f32 %v456, %v695
    %v761 = vadd.f32 %v459, %v695
    %v762 = vadd.f32 %v462, %v695
    %v763 = vadd.f32 %v465, %v695
    %v764 = vadd.f32 %v468, %v695
    %v765 = vadd.f32 %v471, %v695
    %v766 = vadd.f32 %v474, %v695
    %v767 = vadd.f32 %v477, %v695
    %v768 = vadd.f32 %v480, %v695
    %v769 = vadd.f32 %v483, %v695
    %v770 = vadd.f32 %v486, %v695
    %v771 = vadd.f32 %v489, %v695
    %v772 = vadd.f32 %v492, %v696
    %v773 = vadd.f32 %v495, %v696
    %v774 = vadd.f32 %v498, %v696
    %v775 = vadd.f32 %v501, %v696
    %v776 = vadd.f32 %v504, %v696
    %v777 = vadd.f32 %v507, %v696
    %v778 = vadd.f32 %v510, %v696
    %v779 = vadd.f32 %v513, %v696
    %v780 = vadd.f32 %v516, %v696
    %v781 = vadd.f32 %v519, %v696
    %v782 = vadd.f32 %v522, %v696
    %v783 = vadd.f32 %v525, %v696
    %v784 = vadd.f32 %v528, %v696
    %v785 = vadd.f32 %v531, %v696
    %v786 = vadd.f32 %v534, %v696
    %v787 = vadd.f32 %v537, %v696
    %v788 = vadd.f32 %v540, %v697
    %v789 = vadd.f32 %v543, %v697
    %v790 = vadd.f32 %v546, %v697
    %v791 = vadd.f32 %v549, %v697
    %v792 = vadd.f32 %v552, %v697
    %v793 = vadd.f32 %v555, %v697
    %v794 = vadd.f32 %v558, %v697
    %v795 = vadd.f32 %v561, %v697
    %v796 = vadd.f32 %v564, %v697
    %v797 = vadd.f32 %v567, %v697
    %v798 = vadd.f32 %v570, %v697
    %v799 = vadd.f32 %v573, %v697
    %v800 = vadd.f32 %v576, %v697
    %v801 = vadd.f32 %v579, %v697
    %v802 = vadd.f32 %v582, %v697
    %v803 = vadd.f32 %v585, %v697
    %v804 = vadd.f32 %v588, %v698
    %v805 = vadd.f32 %v591, %v698
    %v806 = vadd.f32 %v594, %v698
    %v807 = vadd.f32 %v597, %v698
    %v808 = vadd.f32 %v600, %v698
    %v809 = vadd.f32 %v603, %v698
    %v810 = vadd.f32 %v606, %v698
    %v811 = vadd.f32 %v609, %v698
    %v812 = vadd.f32 %v612, %v698
    %v813 = vadd.f32 %v615, %v698
    %v814 = vadd.f32 %v618, %v698
    %v815 = vadd.f32 %v621, %v698
    %v816 = vadd.f32 %v624, %v698
    %v817 = vadd.f32 %v627, %v698
    %v818 = vadd.f32 %v630, %v698
    %v819 = vadd.f32 %v633, %v698
    %v820 = vadd.f32 %v636, %v699
    %v821 = vadd.f32 %v639, %v699
    %v822 = vadd.f32 %v642, %v699
    %v823 = vadd.f32 %v645, %v699
    %v824 = vadd.f32 %v648, %v699
    %v825 = vadd.f32 %v651, %v699
    %v826 = vadd.f32 %v654, %v699
    %v827 = vadd.f32 %v657, %v699
    %v828 = vadd.f32 %v660, %v699
    %v829 = vadd.f32 %v663, %v699
    %v830 = vadd.f32 %v666, %v699
    %v831 = vadd.f32 %v669, %v699
    %v832 = vadd.f32 %v672, %v699
    %v833 = vadd.f32 %v675, %v699
    %v834 = vadd.f32 %v678, %v699
    %v835 = vadd.f32 %v681, %v699
    %v836 = vtanh.pop %v708
    %v837 = vtanh.pop %v709
    %v838 = vtanh.pop %v710
    %v839 = vtanh.pop %v711
    %v840 = vtanh.pop %v712
    %v841 = vtanh.pop %v713
    %v842 = vtanh.pop %v714
    %v843 = vtanh.pop %v715
    %v844 = vtanh.pop %v716
    %v845 = vtanh.pop %v717
    %v846 = vtanh.pop %v718
    %v847 = vtanh.pop %v719
    %v848 = vtanh.pop %v720
    %v849 = vtanh.pop %v721
    %v850 = vtanh.pop %v722
    %v851 = vtanh.pop %v723
    %v852 = vtanh.pop %v724
    %v853 = vtanh.pop %v725
    %v854 = vtanh.pop %v726
    %v855 = vtanh.pop %v727
    %v856 = vtanh.pop %v728
    %v857 = vtanh.pop %v729
    %v858 = vtanh.pop %v730
    %v859 = vtanh.pop %v731
    %v860 = vtanh.pop %v732
    %v861 = vtanh.pop %v733
    %v862 = vtanh.pop %v734
    %v863 = vtanh.pop %v735
    %v864 = vtanh.pop %v736
    %v865 = vtanh.pop %v737
    %v866 = vtanh.pop %v738
    %v867 = vtanh.pop %v739
    %v868 = vtanh.pop %v740
    %v869 = vtanh.pop %v741
    %v870 = vtanh.pop %v742
    %v871 = vtanh.pop %v743
    %v872 = vtanh.pop %v744
    %v873 = vtanh.pop %v745
    %v874 = vtanh.pop %v746
    %v875 = vtanh.pop %v747
    %v876 = vtanh.pop %v748
    %v877 = vtanh.pop %v749
    %v878 = vtanh.pop %v750
    %v879 = vtanh.pop %v751
    %v880 = vtanh.pop %v752
    %v881 = vtanh.pop %v753
    %v882 = vtanh.pop %v754
    %v883 = vtanh.pop %v755
    %v884 = vtanh.pop %v756
    %v885 = vtanh.pop %v757
    %v886 = vtanh.pop %v758
    %v887 = vtanh.pop %v759
    %v888 = vtanh.pop %v760
    %v889 = vtanh.pop %v761
    %v890 = vtanh.pop %v762
    %v891 = vtanh.pop %v763
    %v892 = vtanh.pop %v764
    %v893 = vtanh.pop %v765
    %v894 = vtanh.pop %v766
    %v895 = vtanh.pop %v767
    %v896 = vtanh.pop %v768
    %v897 = vtanh.pop %v769
    %v898 = vtanh.pop %v770
    %v899 = vtanh.pop %v771
    %v900 = vtanh.pop %v772
    %v901 = vtanh.pop %v773
    %v902 = vtanh.pop %v774
    %v903 = vtanh.pop %v775
    %v904 = vtanh.pop %v776
    %v905 = vtanh.pop %v777
    %v906 = vtanh.pop %v778
    %v907 = vtanh.pop %v779
    %v908 = vtanh.pop %v780
    %v909 = vtanh.pop %v781
    %v910 = vtanh.pop %v782
    %v911 = vtanh.pop %v783
    %v912 = vtanh.pop %v784
    %v913 = vtanh.pop %v785
    %v914 = vtanh.pop %v786
    %v915 = vtanh.pop %v787
    %v916 = vtanh.pop %v788
    %v917 = vtanh.pop %v789
    %v918 = vtanh.pop %v790
    %v919 = vtanh.pop %v791
    %v920 = vtanh.pop %v792
    %v921 = vtanh.pop %v793
    %v922 = vtanh.pop %v794
    %v923 = vtanh.pop %v795
    %v924 = vtanh.pop %v796
    %v925 = vtanh.pop %v797
    %v926 = vtanh.pop %v798
    %v927 = vtanh.pop %v799
    %v928 = vtanh.pop %v800
    %v929 = vtanh.pop %v801
    %v930 = vtanh.pop %v802
    %v931 = vtanh.pop %v803
    %v932 = vtanh.pop %v804
    %v933 = vtanh.pop %v805
    %v934 = vtanh.pop %v806
    %v935 = vtanh.pop %v807
    %v936 = vtanh.pop %v808
    %v937 = vtanh.pop %v809
    %v938 = vtanh.pop %v810
    %v939 = vtanh.pop %v811
    %v940 = vtanh.pop %v812
    %v941 = vtanh.pop %v813
    %v942 = vtanh.pop %v814
    %v943 = vtanh.pop %v815
    %v944 = vtanh.pop %v816
    %v945 = vtanh.pop %v817
    %v946 = vtanh.pop %v818
    %v947 = vtanh.pop %v819
    %v948 = vtanh.pop %v820
    %v949 = vtanh.pop %v821
    %v950 = vtanh.pop %v822
    %v951 = vtanh.pop %v823
    %v952 = vtanh.pop %v824
    %v953 = vtanh.pop %v825
    %v954 = vtanh.pop %v826
    %v955 = vtanh.pop %v827
    %v956 = vtanh.pop %v828
    %v957 = vtanh.pop %v829
    %v958 = vtanh.pop %v830
    %v959 = vtanh.pop %v831
    %v960 = vtanh.pop %v832
    %v961 = vtanh.pop %v833
    %v962 = vtanh.pop %v834
    %v963 = vtanh.pop %v835
    %v964 = vld [vmem:[%s5] sm:$0x1]
    %v966 = vperm.slane %v964, 0
    %v968 = vmul.f32 %v836, %v966
    %v969 = vmul.f32 %v837, %v966
    %v970 = vmul.f32 %v838, %v966
    %v971 = vmul.f32 %v839, %v966
    %v972 = vmul.f32 %v840, %v966
    %v973 = vmul.f32 %v841, %v966
    %v974 = vmul.f32 %v842, %v966
    %v975 = vmul.f32 %v843, %v966
    %v976 = vmul.f32 %v844, %v966
    %v977 = vmul.f32 %v845, %v966
    %v978 = vmul.f32 %v846, %v966
    %v979 = vmul.f32 %v847, %v966
    %v980 = vmul.f32 %v848, %v966
    %v981 = vmul.f32 %v849, %v966
    %v982 = vmul.f32 %v850, %v966
    %v983 = vmul.f32 %v851, %v966
    %v984 = vmul.f32 %v852, %v966
    %v985 = vmul.f32 %v853, %v966
    %v986 = vmul.f32 %v854, %v966
    %v987 = vmul.f32 %v855, %v966
    %v988 = vmul.f32 %v856, %v966
    %v989 = vmul.f32 %v857, %v966
    %v990 = vmul.f32 %v858, %v966
    %v991 = vmul.f32 %v859, %v966
    %v992 = vmul.f32 %v860, %v966
    %v993 = vmul.f32 %v861, %v966
    %v994 = vmul.f32 %v862, %v966
    %v995 = vmul.f32 %v863, %v966
    %v996 = vmul.f32 %v864, %v966
    %v997 = vmul.f32 %v865, %v966
    %v998 = vmul.f32 %v866, %v966
    %v999 = vmul.f32 %v867, %v966
    %v1000 = vmul.f32 %v868, %v966
    %v1001 = vmul.f32 %v869, %v966
    %v1002 = vmul.f32 %v870, %v966
    %v1003 = vmul.f32 %v871, %v966
    %v1004 = vmul.f32 %v872, %v966
    %v1005 = vmul.f32 %v873, %v966
    %v1006 = vmul.f32 %v874, %v966
    %v1007 = vmul.f32 %v875, %v966
    %v1008 = vmul.f32 %v876, %v966
    %v1009 = vmul.f32 %v877, %v966
    %v1010 = vmul.f32 %v878, %v966
    %v1011 = vmul.f32 %v879, %v966
    %v1012 = vmul.f32 %v880, %v966
    %v1013 = vmul.f32 %v881, %v966
    %v1014 = vmul.f32 %v882, %v966
    %v1015 = vmul.f32 %v883, %v966
    %v1016 = vmul.f32 %v884, %v966
    %v1017 = vmul.f32 %v885, %v966
    %v1018 = vmul.f32 %v886, %v966
    %v1019 = vmul.f32 %v887, %v966
    %v1020 = vmul.f32 %v888, %v966
    %v1021 = vmul.f32 %v889, %v966
    %v1022 = vmul.f32 %v890, %v966
    %v1023 = vmul.f32 %v891, %v966
    %v1024 = vmul.f32 %v892, %v966
    %v1025 = vmul.f32 %v893, %v966
    %v1026 = vmul.f32 %v894, %v966
    %v1027 = vmul.f32 %v895, %v966
    %v1028 = vmul.f32 %v896, %v966
    %v1029 = vmul.f32 %v897, %v966
    %v1030 = vmul.f32 %v898, %v966
    %v1031 = vmul.f32 %v899, %v966
    %v1032 = vmul.f32 %v900, %v966
    %v1033 = vmul.f32 %v901, %v966
    %v1034 = vmul.f32 %v902, %v966
    %v1035 = vmul.f32 %v903, %v966
    %v1036 = vmul.f32 %v904, %v966
    %v1037 = vmul.f32 %v905, %v966
    %v1038 = vmul.f32 %v906, %v966
    %v1039 = vmul.f32 %v907, %v966
    %v1040 = vmul.f32 %v908, %v966
    %v1041 = vmul.f32 %v909, %v966
    %v1042 = vmul.f32 %v910, %v966
    %v1043 = vmul.f32 %v911, %v966
    %v1044 = vmul.f32 %v912, %v966
    %v1045 = vmul.f32 %v913, %v966
    %v1046 = vmul.f32 %v914, %v966
    %v1047 = vmul.f32 %v915, %v966
    %v1048 = vmul.f32 %v916, %v966
    %v1049 = vmul.f32 %v917, %v966
    %v1050 = vmul.f32 %v918, %v966
    %v1051 = vmul.f32 %v919, %v966
    %v1052 = vmul.f32 %v920, %v966
    %v1053 = vmul.f32 %v921, %v966
    %v1054 = vmul.f32 %v922, %v966
    %v1055 = vmul.f32 %v923, %v966
    %v1056 = vmul.f32 %v924, %v966
    %v1057 = vmul.f32 %v925, %v966
    %v1058 = vmul.f32 %v926, %v966
    %v1059 = vmul.f32 %v927, %v966
    %v1060 = vmul.f32 %v928, %v966
    %v1061 = vmul.f32 %v929, %v966
    %v1062 = vmul.f32 %v930, %v966
    %v1063 = vmul.f32 %v931, %v966
    %v1064 = vmul.f32 %v932, %v966
    %v1065 = vmul.f32 %v933, %v966
    %v1066 = vmul.f32 %v934, %v966
    %v1067 = vmul.f32 %v935, %v966
    %v1068 = vmul.f32 %v936, %v966
    %v1069 = vmul.f32 %v937, %v966
    %v1070 = vmul.f32 %v938, %v966
    %v1071 = vmul.f32 %v939, %v966
    %v1072 = vmul.f32 %v940, %v966
    %v1073 = vmul.f32 %v941, %v966
    %v1074 = vmul.f32 %v942, %v966
    %v1075 = vmul.f32 %v943, %v966
    %v1076 = vmul.f32 %v944, %v966
    %v1077 = vmul.f32 %v945, %v966
    %v1078 = vmul.f32 %v946, %v966
    %v1079 = vmul.f32 %v947, %v966
    %v1080 = vmul.f32 %v948, %v966
    %v1081 = vmul.f32 %v949, %v966
    %v1082 = vmul.f32 %v950, %v966
    %v1083 = vmul.f32 %v951, %v966
    %v1084 = vmul.f32 %v952, %v966
    %v1085 = vmul.f32 %v953, %v966
    %v1086 = vmul.f32 %v954, %v966
    %v1087 = vmul.f32 %v955, %v966
    %v1088 = vmul.f32 %v956, %v966
    %v1089 = vmul.f32 %v957, %v966
    %v1090 = vmul.f32 %v958, %v966
    %v1091 = vmul.f32 %v959, %v966
    %v1092 = vmul.f32 %v960, %v966
    %v1093 = vmul.f32 %v961, %v966
    %v1094 = vmul.f32 %v962, %v966
    %v1095 = vmul.f32 %v963, %v966
    %1096 = vadd.xlane.f32.xlu0 %v968
    %v1097 = vpop.xlane.xlu0 %1096
    %1098 = vadd.xlane.f32.xlu0 %v969
    %v1099 = vpop.xlane.xlu0 %1098
    %1100 = vadd.xlane.f32.xlu0 %v970
    %v1101 = vpop.xlane.xlu0 %1100
    %1102 = vadd.xlane.f32.xlu0 %v971
    %v1103 = vpop.xlane.xlu0 %1102
    %1104 = vadd.xlane.f32.xlu0 %v972
    %v1105 = vpop.xlane.xlu0 %1104
    %1106 = vadd.xlane.f32.xlu0 %v973
    %v1107 = vpop.xlane.xlu0 %1106
    %1108 = vadd.xlane.f32.xlu0 %v974
    %v1109 = vpop.xlane.xlu0 %1108
    %1110 = vadd.xlane.f32.xlu0 %v975
    %v1111 = vpop.xlane.xlu0 %1110
    %1112 = vadd.xlane.f32.xlu0 %v976
    %v1113 = vpop.xlane.xlu0 %1112
    %1114 = vadd.xlane.f32.xlu0 %v977
    %v1115 = vpop.xlane.xlu0 %1114
    %1116 = vadd.xlane.f32.xlu0 %v978
    %v1117 = vpop.xlane.xlu0 %1116
    %1118 = vadd.xlane.f32.xlu0 %v979
    %v1119 = vpop.xlane.xlu0 %1118
    %1120 = vadd.xlane.f32.xlu0 %v980
    %v1121 = vpop.xlane.xlu0 %1120
    %1122 = vadd.xlane.f32.xlu0 %v981
    %v1123 = vpop.xlane.xlu0 %1122
    %1124 = vadd.xlane.f32.xlu0 %v982
    %v1125 = vpop.xlane.xlu0 %1124
    %1126 = vadd.xlane.f32.xlu0 %v983
    %v1127 = vpop.xlane.xlu0 %1126
    %1128 = vadd.xlane.f32.xlu0 %v984
    %v1129 = vpop.xlane.xlu0 %1128
    %1130 = vadd.xlane.f32.xlu0 %v985
    %v1131 = vpop.xlane.xlu0 %1130
    %1132 = vadd.xlane.f32.xlu0 %v986
    %v1133 = vpop.xlane.xlu0 %1132
    %1134 = vadd.xlane.f32.xlu0 %v987
    %v1135 = vpop.xlane.xlu0 %1134
    %1136 = vadd.xlane.f32.xlu0 %v988
    %v1137 = vpop.xlane.xlu0 %1136
    %1138 = vadd.xlane.f32.xlu0 %v989
    %v1139 = vpop.xlane.xlu0 %1138
    %1140 = vadd.xlane.f32.xlu0 %v990
    %v1141 = vpop.xlane.xlu0 %1140
    %1142 = vadd.xlane.f32.xlu0 %v991
    %v1143 = vpop.xlane.xlu0 %1142
    %1144 = vadd.xlane.f32.xlu0 %v992
    %v1145 = vpop.xlane.xlu0 %1144
    %1146 = vadd.xlane.f32.xlu0 %v993
    %v1147 = vpop.xlane.xlu0 %1146
    %1148 = vadd.xlane.f32.xlu0 %v994
    %v1149 = vpop.xlane.xlu0 %1148
    %1150 = vadd.xlane.f32.xlu0 %v995
    %v1151 = vpop.xlane.xlu0 %1150
    %1152 = vadd.xlane.f32.xlu0 %v996
    %v1153 = vpop.xlane.xlu0 %1152
    %1154 = vadd.xlane.f32.xlu0 %v997
    %v1155 = vpop.xlane.xlu0 %1154
    %1156 = vadd.xlane.f32.xlu0 %v998
    %v1157 = vpop.xlane.xlu0 %1156
    %1158 = vadd.xlane.f32.xlu0 %v999
    %v1159 = vpop.xlane.xlu0 %1158
    %1160 = vadd.xlane.f32.xlu0 %v1000
    %v1161 = vpop.xlane.xlu0 %1160
    %1162 = vadd.xlane.f32.xlu0 %v1001
    %v1163 = vpop.xlane.xlu0 %1162
    %1164 = vadd.xlane.f32.xlu0 %v1002
    %v1165 = vpop.xlane.xlu0 %1164
    %1166 = vadd.xlane.f32.xlu0 %v1003
    %v1167 = vpop.xlane.xlu0 %1166
    %1168 = vadd.xlane.f32.xlu0 %v1004
    %v1169 = vpop.xlane.xlu0 %1168
    %1170 = vadd.xlane.f32.xlu0 %v1005
    %v1171 = vpop.xlane.xlu0 %1170
    %1172 = vadd.xlane.f32.xlu0 %v1006
    %v1173 = vpop.xlane.xlu0 %1172
    %1174 = vadd.xlane.f32.xlu0 %v1007
    %v1175 = vpop.xlane.xlu0 %1174
    %1176 = vadd.xlane.f32.xlu0 %v1008
    %v1177 = vpop.xlane.xlu0 %1176
    %1178 = vadd.xlane.f32.xlu0 %v1009
    %v1179 = vpop.xlane.xlu0 %1178
    %1180 = vadd.xlane.f32.xlu0 %v1010
    %v1181 = vpop.xlane.xlu0 %1180
    %1182 = vadd.xlane.f32.xlu0 %v1011
    %v1183 = vpop.xlane.xlu0 %1182
    %1184 = vadd.xlane.f32.xlu0 %v1012
    %v1185 = vpop.xlane.xlu0 %1184
    %1186 = vadd.xlane.f32.xlu0 %v1013
    %v1187 = vpop.xlane.xlu0 %1186
    %1188 = vadd.xlane.f32.xlu0 %v1014
    %v1189 = vpop.xlane.xlu0 %1188
    %1190 = vadd.xlane.f32.xlu0 %v1015
    %v1191 = vpop.xlane.xlu0 %1190
    %1192 = vadd.xlane.f32.xlu0 %v1016
    %v1193 = vpop.xlane.xlu0 %1192
    %1194 = vadd.xlane.f32.xlu0 %v1017
    %v1195 = vpop.xlane.xlu0 %1194
    %1196 = vadd.xlane.f32.xlu0 %v1018
    %v1197 = vpop.xlane.xlu0 %1196
    %1198 = vadd.xlane.f32.xlu0 %v1019
    %v1199 = vpop.xlane.xlu0 %1198
    %1200 = vadd.xlane.f32.xlu0 %v1020
    %v1201 = vpop.xlane.xlu0 %1200
    %1202 = vadd.xlane.f32.xlu0 %v1021
    %v1203 = vpop.xlane.xlu0 %1202
    %1204 = vadd.xlane.f32.xlu0 %v1022
    %v1205 = vpop.xlane.xlu0 %1204
    %1206 = vadd.xlane.f32.xlu0 %v1023
    %v1207 = vpop.xlane.xlu0 %1206
    %1208 = vadd.xlane.f32.xlu0 %v1024
    %v1209 = vpop.xlane.xlu0 %1208
    %1210 = vadd.xlane.f32.xlu0 %v1025
    %v1211 = vpop.xlane.xlu0 %1210
    %1212 = vadd.xlane.f32.xlu0 %v1026
    %v1213 = vpop.xlane.xlu0 %1212
    %1214 = vadd.xlane.f32.xlu0 %v1027
    %v1215 = vpop.xlane.xlu0 %1214
    %1216 = vadd.xlane.f32.xlu0 %v1028
    %v1217 = vpop.xlane.xlu0 %1216
    %1218 = vadd.xlane.f32.xlu0 %v1029
    %v1219 = vpop.xlane.xlu0 %1218
    %1220 = vadd.xlane.f32.xlu0 %v1030
    %v1221 = vpop.xlane.xlu0 %1220
    %1222 = vadd.xlane.f32.xlu0 %v1031
    %v1223 = vpop.xlane.xlu0 %1222
    %1224 = vadd.xlane.f32.xlu0 %v1032
    %v1225 = vpop.xlane.xlu0 %1224
    %1226 = vadd.xlane.f32.xlu0 %v1033
    %v1227 = vpop.xlane.xlu0 %1226
    %1228 = vadd.xlane.f32.xlu0 %v1034
    %v1229 = vpop.xlane.xlu0 %1228
    %1230 = vadd.xlane.f32.xlu0 %v1035
    %v1231 = vpop.xlane.xlu0 %1230
    %1232 = vadd.xlane.f32.xlu0 %v1036
    %v1233 = vpop.xlane.xlu0 %1232
    %1234 = vadd.xlane.f32.xlu0 %v1037
    %v1235 = vpop.xlane.xlu0 %1234
    %1236 = vadd.xlane.f32.xlu0 %v1038
    %v1237 = vpop.xlane.xlu0 %1236
    %1238 = vadd.xlane.f32.xlu0 %v1039
    %v1239 = vpop.xlane.xlu0 %1238
    %1240 = vadd.xlane.f32.xlu0 %v1040
    %v1241 = vpop.xlane.xlu0 %1240
    %1242 = vadd.xlane.f32.xlu0 %v1041
    %v1243 = vpop.xlane.xlu0 %1242
    %1244 = vadd.xlane.f32.xlu0 %v1042
    %v1245 = vpop.xlane.xlu0 %1244
    %1246 = vadd.xlane.f32.xlu0 %v1043
    %v1247 = vpop.xlane.xlu0 %1246
    %1248 = vadd.xlane.f32.xlu0 %v1044
    %v1249 = vpop.xlane.xlu0 %1248
    %1250 = vadd.xlane.f32.xlu0 %v1045
    %v1251 = vpop.xlane.xlu0 %1250
    %1252 = vadd.xlane.f32.xlu0 %v1046
    %v1253 = vpop.xlane.xlu0 %1252
    %1254 = vadd.xlane.f32.xlu0 %v1047
    %v1255 = vpop.xlane.xlu0 %1254
    %1256 = vadd.xlane.f32.xlu0 %v1048
    %v1257 = vpop.xlane.xlu0 %1256
    %1258 = vadd.xlane.f32.xlu0 %v1049
    %v1259 = vpop.xlane.xlu0 %1258
    %1260 = vadd.xlane.f32.xlu0 %v1050
    %v1261 = vpop.xlane.xlu0 %1260
    %1262 = vadd.xlane.f32.xlu0 %v1051
    %v1263 = vpop.xlane.xlu0 %1262
    %1264 = vadd.xlane.f32.xlu0 %v1052
    %v1265 = vpop.xlane.xlu0 %1264
    %1266 = vadd.xlane.f32.xlu0 %v1053
    %v1267 = vpop.xlane.xlu0 %1266
    %1268 = vadd.xlane.f32.xlu0 %v1054
    %v1269 = vpop.xlane.xlu0 %1268
    %1270 = vadd.xlane.f32.xlu0 %v1055
    %v1271 = vpop.xlane.xlu0 %1270
    %1272 = vadd.xlane.f32.xlu0 %v1056
    %v1273 = vpop.xlane.xlu0 %1272
    %1274 = vadd.xlane.f32.xlu0 %v1057
    %v1275 = vpop.xlane.xlu0 %1274
    %1276 = vadd.xlane.f32.xlu0 %v1058
    %v1277 = vpop.xlane.xlu0 %1276
    %1278 = vadd.xlane.f32.xlu0 %v1059
    %v1279 = vpop.xlane.xlu0 %1278
    %1280 = vadd.xlane.f32.xlu0 %v1060
    %v1281 = vpop.xlane.xlu0 %1280
    %1282 = vadd.xlane.f32.xlu0 %v1061
    %v1283 = vpop.xlane.xlu0 %1282
    %1284 = vadd.xlane.f32.xlu0 %v1062
    %v1285 = vpop.xlane.xlu0 %1284
    %1286 = vadd.xlane.f32.xlu0 %v1063
    %v1287 = vpop.xlane.xlu0 %1286
    %1288 = vadd.xlane.f32.xlu0 %v1064
    %v1289 = vpop.xlane.xlu0 %1288
    %1290 = vadd.xlane.f32.xlu0 %v1065
    %v1291 = vpop.xlane.xlu0 %1290
    %1292 = vadd.xlane.f32.xlu0 %v1066
    %v1293 = vpop.xlane.xlu0 %1292
    %1294 = vadd.xlane.f32.xlu0 %v1067
    %v1295 = vpop.xlane.xlu0 %1294
    %1296 = vadd.xlane.f32.xlu0 %v1068
    %v1297 = vpop.xlane.xlu0 %1296
    %1298 = vadd.xlane.f32.xlu0 %v1069
    %v1299 = vpop.xlane.xlu0 %1298
    %1300 = vadd.xlane.f32.xlu0 %v1070
    %v1301 = vpop.xlane.xlu0 %1300
    %1302 = vadd.xlane.f32.xlu0 %v1071
    %v1303 = vpop.xlane.xlu0 %1302
    %1304 = vadd.xlane.f32.xlu0 %v1072
    %v1305 = vpop.xlane.xlu0 %1304
    %1306 = vadd.xlane.f32.xlu0 %v1073
    %v1307 = vpop.xlane.xlu0 %1306
    %1308 = vadd.xlane.f32.xlu0 %v1074
    %v1309 = vpop.xlane.xlu0 %1308
    %1310 = vadd.xlane.f32.xlu0 %v1075
    %v1311 = vpop.xlane.xlu0 %1310
    %1312 = vadd.xlane.f32.xlu0 %v1076
    %v1313 = vpop.xlane.xlu0 %1312
    %1314 = vadd.xlane.f32.xlu0 %v1077
    %v1315 = vpop.xlane.xlu0 %1314
    %1316 = vadd.xlane.f32.xlu0 %v1078
    %v1317 = vpop.xlane.xlu0 %1316
    %1318 = vadd.xlane.f32.xlu0 %v1079
    %v1319 = vpop.xlane.xlu0 %1318
    %1320 = vadd.xlane.f32.xlu0 %v1080
    %v1321 = vpop.xlane.xlu0 %1320
    %1322 = vadd.xlane.f32.xlu0 %v1081
    %v1323 = vpop.xlane.xlu0 %1322
    %1324 = vadd.xlane.f32.xlu0 %v1082
    %v1325 = vpop.xlane.xlu0 %1324
    %1326 = vadd.xlane.f32.xlu0 %v1083
    %v1327 = vpop.xlane.xlu0 %1326
    %1328 = vadd.xlane.f32.xlu0 %v1084
    %v1329 = vpop.xlane.xlu0 %1328
    %1330 = vadd.xlane.f32.xlu0 %v1085
    %v1331 = vpop.xlane.xlu0 %1330
    %1332 = vadd.xlane.f32.xlu0 %v1086
    %v1333 = vpop.xlane.xlu0 %1332
    %1334 = vadd.xlane.f32.xlu0 %v1087
    %v1335 = vpop.xlane.xlu0 %1334
    %1336 = vadd.xlane.f32.xlu0 %v1088
    %v1337 = vpop.xlane.xlu0 %1336
    %1338 = vadd.xlane.f32.xlu0 %v1089
    %v1339 = vpop.xlane.xlu0 %1338
    %1340 = vadd.xlane.f32.xlu0 %v1090
    %v1341 = vpop.xlane.xlu0 %1340
    %1342 = vadd.xlane.f32.xlu0 %v1091
    %v1343 = vpop.xlane.xlu0 %1342
    %1344 = vadd.xlane.f32.xlu0 %v1092
    %v1345 = vpop.xlane.xlu0 %1344
    %1346 = vadd.xlane.f32.xlu0 %v1093
    %v1347 = vpop.xlane.xlu0 %1346
    %1348 = vadd.xlane.f32.xlu0 %v1094
    %v1349 = vpop.xlane.xlu0 %1348
    %1350 = vadd.xlane.f32.xlu0 %v1095
    %v1351 = vpop.xlane.xlu0 %1350
    %s1352 = smul.u32 0, 128
    %v1353 = vlaneseq
    %v1354 = vand.u32 %v1353, 127
    %v1355 = vstv %s1352
    %v1356 = vadd.s32 %v1355, %v1354
    %vm1357 = vcmp.lt.s32.totalorder %v1356, 8
    %v1486 = vperm.slane %v1097, %v1354
    %v1487 = vadd.s32 %v1354, 4294967288
    %v1488 = vperm.slane %v1099, %v1487
    %vm1489 = vcmask 130112
    %v1490 = vsel %vm1489, %v1488, %v1486
    %v1491 = vadd.s32 %v1354, 4294967280
    %v1492 = vperm.slane %v1101, %v1491
    %vm1493 = vcmask 195712
    %v1494 = vsel %vm1493, %v1492, %v1490
    %v1495 = vadd.s32 %v1354, 4294967272
    %v1496 = vperm.slane %v1103, %v1495
    %vm1497 = vcmask 261312
    %v1498 = vsel %vm1497, %v1496, %v1494
    %v1499 = vadd.s32 %v1354, 4294967264
    %v1500 = vperm.slane %v1105, %v1499
    %vm1501 = vcmask 326912
    %v1502 = vsel %vm1501, %v1500, %v1498
    %v1503 = vadd.s32 %v1354, 4294967256
    %v1504 = vperm.slane %v1107, %v1503
    %vm1505 = vcmask 392512
    %v1506 = vsel %vm1505, %v1504, %v1502
    %v1507 = vadd.s32 %v1354, 4294967248
    %v1508 = vperm.slane %v1109, %v1507
    %vm1509 = vcmask 458112
    %v1510 = vsel %vm1509, %v1508, %v1506
    %v1511 = vadd.s32 %v1354, 4294967240
    %v1512 = vperm.slane %v1111, %v1511
    %vm1513 = vcmask 523712
    %v1514 = vsel %vm1513, %v1512, %v1510
    %v1515 = vadd.s32 %v1354, 4294967232
    %v1516 = vperm.slane %v1113, %v1515
    %vm1517 = vcmask 589312
    %v1518 = vsel %vm1517, %v1516, %v1514
    %v1519 = vadd.s32 %v1354, 4294967224
    %v1520 = vperm.slane %v1115, %v1519
    %vm1521 = vcmask 654912
    %v1522 = vsel %vm1521, %v1520, %v1518
    %v1523 = vadd.s32 %v1354, 4294967216
    %v1524 = vperm.slane %v1117, %v1523
    %vm1525 = vcmask 720512
    %v1526 = vsel %vm1525, %v1524, %v1522
    %v1527 = vadd.s32 %v1354, 4294967208
    %v1528 = vperm.slane %v1119, %v1527
    %vm1529 = vcmask 786112
    %v1530 = vsel %vm1529, %v1528, %v1526
    %v1531 = vadd.s32 %v1354, 4294967200
    %v1532 = vperm.slane %v1121, %v1531
    %vm1533 = vcmask 851712
    %v1534 = vsel %vm1533, %v1532, %v1530
    %v1535 = vadd.s32 %v1354, 4294967192
    %v1536 = vperm.slane %v1123, %v1535
    %vm1537 = vcmask 917312
    %v1538 = vsel %vm1537, %v1536, %v1534
    %v1539 = vadd.s32 %v1354, 4294967184
    %v1540 = vperm.slane %v1125, %v1539
    %vm1541 = vcmask 982912
    %v1542 = vsel %vm1541, %v1540, %v1538
    %v1543 = vadd.s32 %v1354, 4294967176
    %v1544 = vperm.slane %v1127, %v1543
    %vm1545 = vcmask 1048512
    %v1546 = vsel %vm1545, %v1544, %v1542
    %v1547 = vperm.slane %v1129, %v1354
    %v1548 = vperm.slane %v1131, %v1487
    %v1549 = vsel %vm1489, %v1548, %v1547
    %v1550 = vperm.slane %v1133, %v1491
    %v1551 = vsel %vm1493, %v1550, %v1549
    %v1552 = vperm.slane %v1135, %v1495
    %v1553 = vsel %vm1497, %v1552, %v1551
    %v1554 = vperm.slane %v1137, %v1499
    %v1555 = vsel %vm1501, %v1554, %v1553
    %v1556 = vperm.slane %v1139, %v1503
    %v1557 = vsel %vm1505, %v1556, %v1555
    %v1558 = vperm.slane %v1141, %v1507
    %v1559 = vsel %vm1509, %v1558, %v1557
    %v1560 = vperm.slane %v1143, %v1511
    %v1561 = vsel %vm1513, %v1560, %v1559
    %v1562 = vperm.slane %v1145, %v1515
    %v1563 = vsel %vm1517, %v1562, %v1561
    %v1564 = vperm.slane %v1147, %v1519
    %v1565 = vsel %vm1521, %v1564, %v1563
    %v1566 = vperm.slane %v1149, %v1523
    %v1567 = vsel %vm1525, %v1566, %v1565
    %v1568 = vperm.slane %v1151, %v1527
    %v1569 = vsel %vm1529, %v1568, %v1567
    %v1570 = vperm.slane %v1153, %v1531
    %v1571 = vsel %vm1533, %v1570, %v1569
    %v1572 = vperm.slane %v1155, %v1535
    %v1573 = vsel %vm1537, %v1572, %v1571
    %v1574 = vperm.slane %v1157, %v1539
    %v1575 = vsel %vm1541, %v1574, %v1573
    %v1576 = vperm.slane %v1159, %v1543
    %v1577 = vsel %vm1545, %v1576, %v1575
    %v1578 = vperm.slane %v1161, %v1354
    %v1579 = vperm.slane %v1163, %v1487
    %v1580 = vsel %vm1489, %v1579, %v1578
    %v1581 = vperm.slane %v1165, %v1491
    %v1582 = vsel %vm1493, %v1581, %v1580
    %v1583 = vperm.slane %v1167, %v1495
    %v1584 = vsel %vm1497, %v1583, %v1582
    %v1585 = vperm.slane %v1169, %v1499
    %v1586 = vsel %vm1501, %v1585, %v1584
    %v1587 = vperm.slane %v1171, %v1503
    %v1588 = vsel %vm1505, %v1587, %v1586
    %v1589 = vperm.slane %v1173, %v1507
    %v1590 = vsel %vm1509, %v1589, %v1588
    %v1591 = vperm.slane %v1175, %v1511
    %v1592 = vsel %vm1513, %v1591, %v1590
    %v1593 = vperm.slane %v1177, %v1515
    %v1594 = vsel %vm1517, %v1593, %v1592
    %v1595 = vperm.slane %v1179, %v1519
    %v1596 = vsel %vm1521, %v1595, %v1594
    %v1597 = vperm.slane %v1181, %v1523
    %v1598 = vsel %vm1525, %v1597, %v1596
    %v1599 = vperm.slane %v1183, %v1527
    %v1600 = vsel %vm1529, %v1599, %v1598
    %v1601 = vperm.slane %v1185, %v1531
    %v1602 = vsel %vm1533, %v1601, %v1600
    %v1603 = vperm.slane %v1187, %v1535
    %v1604 = vsel %vm1537, %v1603, %v1602
    %v1605 = vperm.slane %v1189, %v1539
    %v1606 = vsel %vm1541, %v1605, %v1604
    %v1607 = vperm.slane %v1191, %v1543
    %v1608 = vsel %vm1545, %v1607, %v1606
    %v1609 = vperm.slane %v1193, %v1354
    %v1610 = vperm.slane %v1195, %v1487
    %v1611 = vsel %vm1489, %v1610, %v1609
    %v1612 = vperm.slane %v1197, %v1491
    %v1613 = vsel %vm1493, %v1612, %v1611
    %v1614 = vperm.slane %v1199, %v1495
    %v1615 = vsel %vm1497, %v1614, %v1613
    %v1616 = vperm.slane %v1201, %v1499
    %v1617 = vsel %vm1501, %v1616, %v1615
    %v1618 = vperm.slane %v1203, %v1503
    %v1619 = vsel %vm1505, %v1618, %v1617
    %v1620 = vperm.slane %v1205, %v1507
    %v1621 = vsel %vm1509, %v1620, %v1619
    %v1622 = vperm.slane %v1207, %v1511
    %v1623 = vsel %vm1513, %v1622, %v1621
    %v1624 = vperm.slane %v1209, %v1515
    %v1625 = vsel %vm1517, %v1624, %v1623
    %v1626 = vperm.slane %v1211, %v1519
    %v1627 = vsel %vm1521, %v1626, %v1625
    %v1628 = vperm.slane %v1213, %v1523
    %v1629 = vsel %vm1525, %v1628, %v1627
    %v1630 = vperm.slane %v1215, %v1527
    %v1631 = vsel %vm1529, %v1630, %v1629
    %v1632 = vperm.slane %v1217, %v1531
    %v1633 = vsel %vm1533, %v1632, %v1631
    %v1634 = vperm.slane %v1219, %v1535
    %v1635 = vsel %vm1537, %v1634, %v1633
    %v1636 = vperm.slane %v1221, %v1539
    %v1637 = vsel %vm1541, %v1636, %v1635
    %v1638 = vperm.slane %v1223, %v1543
    %v1639 = vsel %vm1545, %v1638, %v1637
    %v1640 = vperm.slane %v1225, %v1354
    %v1641 = vperm.slane %v1227, %v1487
    %v1642 = vsel %vm1489, %v1641, %v1640
    %v1643 = vperm.slane %v1229, %v1491
    %v1644 = vsel %vm1493, %v1643, %v1642
    %v1645 = vperm.slane %v1231, %v1495
    %v1646 = vsel %vm1497, %v1645, %v1644
    %v1647 = vperm.slane %v1233, %v1499
    %v1648 = vsel %vm1501, %v1647, %v1646
    %v1649 = vperm.slane %v1235, %v1503
    %v1650 = vsel %vm1505, %v1649, %v1648
    %v1651 = vperm.slane %v1237, %v1507
    %v1652 = vsel %vm1509, %v1651, %v1650
    %v1653 = vperm.slane %v1239, %v1511
    %v1654 = vsel %vm1513, %v1653, %v1652
    %v1655 = vperm.slane %v1241, %v1515
    %v1656 = vsel %vm1517, %v1655, %v1654
    %v1657 = vperm.slane %v1243, %v1519
    %v1658 = vsel %vm1521, %v1657, %v1656
    %v1659 = vperm.slane %v1245, %v1523
    %v1660 = vsel %vm1525, %v1659, %v1658
    %v1661 = vperm.slane %v1247, %v1527
    %v1662 = vsel %vm1529, %v1661, %v1660
    %v1663 = vperm.slane %v1249, %v1531
    %v1664 = vsel %vm1533, %v1663, %v1662
    %v1665 = vperm.slane %v1251, %v1535
    %v1666 = vsel %vm1537, %v1665, %v1664
    %v1667 = vperm.slane %v1253, %v1539
    %v1668 = vsel %vm1541, %v1667, %v1666
    %v1669 = vperm.slane %v1255, %v1543
    %v1670 = vsel %vm1545, %v1669, %v1668
    %v1671 = vperm.slane %v1257, %v1354
    %v1672 = vperm.slane %v1259, %v1487
    %v1673 = vsel %vm1489, %v1672, %v1671
    %v1674 = vperm.slane %v1261, %v1491
    %v1675 = vsel %vm1493, %v1674, %v1673
    %v1676 = vperm.slane %v1263, %v1495
    %v1677 = vsel %vm1497, %v1676, %v1675
    %v1678 = vperm.slane %v1265, %v1499
    %v1679 = vsel %vm1501, %v1678, %v1677
    %v1680 = vperm.slane %v1267, %v1503
    %v1681 = vsel %vm1505, %v1680, %v1679
    %v1682 = vperm.slane %v1269, %v1507
    %v1683 = vsel %vm1509, %v1682, %v1681
    %v1684 = vperm.slane %v1271, %v1511
    %v1685 = vsel %vm1513, %v1684, %v1683
    %v1686 = vperm.slane %v1273, %v1515
    %v1687 = vsel %vm1517, %v1686, %v1685
    %v1688 = vperm.slane %v1275, %v1519
    %v1689 = vsel %vm1521, %v1688, %v1687
    %v1690 = vperm.slane %v1277, %v1523
    %v1691 = vsel %vm1525, %v1690, %v1689
    %v1692 = vperm.slane %v1279, %v1527
    %v1693 = vsel %vm1529, %v1692, %v1691
    %v1694 = vperm.slane %v1281, %v1531
    %v1695 = vsel %vm1533, %v1694, %v1693
    %v1696 = vperm.slane %v1283, %v1535
    %v1697 = vsel %vm1537, %v1696, %v1695
    %v1698 = vperm.slane %v1285, %v1539
    %v1699 = vsel %vm1541, %v1698, %v1697
    %v1700 = vperm.slane %v1287, %v1543
    %v1701 = vsel %vm1545, %v1700, %v1699
    %v1702 = vperm.slane %v1289, %v1354
    %v1703 = vperm.slane %v1291, %v1487
    %v1704 = vsel %vm1489, %v1703, %v1702
    %v1705 = vperm.slane %v1293, %v1491
    %v1706 = vsel %vm1493, %v1705, %v1704
    %v1707 = vperm.slane %v1295, %v1495
    %v1708 = vsel %vm1497, %v1707, %v1706
    %v1709 = vperm.slane %v1297, %v1499
    %v1710 = vsel %vm1501, %v1709, %v1708
    %v1711 = vperm.slane %v1299, %v1503
    %v1712 = vsel %vm1505, %v1711, %v1710
    %v1713 = vperm.slane %v1301, %v1507
    %v1714 = vsel %vm1509, %v1713, %v1712
    %v1715 = vperm.slane %v1303, %v1511
    %v1716 = vsel %vm1513, %v1715, %v1714
    %v1717 = vperm.slane %v1305, %v1515
    %v1718 = vsel %vm1517, %v1717, %v1716
    %v1719 = vperm.slane %v1307, %v1519
    %v1720 = vsel %vm1521, %v1719, %v1718
    %v1721 = vperm.slane %v1309, %v1523
    %v1722 = vsel %vm1525, %v1721, %v1720
    %v1723 = vperm.slane %v1311, %v1527
    %v1724 = vsel %vm1529, %v1723, %v1722
    %v1725 = vperm.slane %v1313, %v1531
    %v1726 = vsel %vm1533, %v1725, %v1724
    %v1727 = vperm.slane %v1315, %v1535
    %v1728 = vsel %vm1537, %v1727, %v1726
    %v1729 = vperm.slane %v1317, %v1539
    %v1730 = vsel %vm1541, %v1729, %v1728
    %v1731 = vperm.slane %v1319, %v1543
    %v1732 = vsel %vm1545, %v1731, %v1730
    %v1733 = vperm.slane %v1321, %v1354
    %v1734 = vperm.slane %v1323, %v1487
    %v1735 = vsel %vm1489, %v1734, %v1733
    %v1736 = vperm.slane %v1325, %v1491
    %v1737 = vsel %vm1493, %v1736, %v1735
    %v1738 = vperm.slane %v1327, %v1495
    %v1739 = vsel %vm1497, %v1738, %v1737
    %v1740 = vperm.slane %v1329, %v1499
    %v1741 = vsel %vm1501, %v1740, %v1739
    %v1742 = vperm.slane %v1331, %v1503
    %v1743 = vsel %vm1505, %v1742, %v1741
    %v1744 = vperm.slane %v1333, %v1507
    %v1745 = vsel %vm1509, %v1744, %v1743
    %v1746 = vperm.slane %v1335, %v1511
    %v1747 = vsel %vm1513, %v1746, %v1745
    %v1748 = vperm.slane %v1337, %v1515
    %v1749 = vsel %vm1517, %v1748, %v1747
    %v1750 = vperm.slane %v1339, %v1519
    %v1751 = vsel %vm1521, %v1750, %v1749
    %v1752 = vperm.slane %v1341, %v1523
    %v1753 = vsel %vm1525, %v1752, %v1751
    %v1754 = vperm.slane %v1343, %v1527
    %v1755 = vsel %vm1529, %v1754, %v1753
    %v1756 = vperm.slane %v1345, %v1531
    %v1757 = vsel %vm1533, %v1756, %v1755
    %v1758 = vperm.slane %v1347, %v1535
    %v1759 = vsel %vm1537, %v1758, %v1757
    %v1760 = vperm.slane %v1349, %v1539
    %v1761 = vsel %vm1541, %v1760, %v1759
    %v1762 = vperm.slane %v1351, %v1543
    %v1763 = vsel %vm1545, %v1762, %v1761
    %vm1764 = vcmask 1041409
    %v1765 = vsel %vm1764, %v1577, %v1546
    %vm1766 = vcmask 1042434
    %v1767 = vsel %vm1766, %v1608, %v1765
    %vm1768 = vcmask 1043459
    %v1769 = vsel %vm1768, %v1639, %v1767
    %vm1770 = vcmask 1044484
    %v1771 = vsel %vm1770, %v1670, %v1769
    %vm1772 = vcmask 1045509
    %v1773 = vsel %vm1772, %v1701, %v1771
    %vm1774 = vcmask 1046534
    %v1775 = vsel %vm1774, %v1732, %v1773
    %vm1776 = vcmask 1047559
    %v1777 = vsel %vm1776, %v1763, %v1775
    %v1779 = vsel %vm1357, %v1777, -1e+30
    %1780 = vmax.xlane.f32.xlu0 %v1779
    %v1781 = vpop.xlane.xlu0 %1780
    %v1782 = vld [vmem:[#allocation3] sm:$0xff]
    %v1783 = vmax.f32 %v1782, %v1781
    %v1784 = vsub.f32 %v1782, %v1783
    %v1785 = vmul.f32 %v1784, 1.442695
    %v1786 = vpow.pop %v1785
    %1788 = vset.pattern.permute.xlu0 0
    %1789 = vperm.xlu0 %1788, %v1783
    %v1790 = vpop.permute.xlu0 %1789
    %v1792 = vsub.f32 %v1779, %v1790
    %v1793 = vmul.f32 %v1792, 1.442695
    %v1794 = vpow.pop %v1793
    %v1795 = vld [vmem:[#allocation4] sm:$0xff]
    %v1796 = vmul.f32 %v1786, %v1795
    %1797 = vadd.xlane.f32.xlu0 %v1794
    %v1798 = vpop.xlane.xlu0 %1797
    %v1799 = vadd.f32 %v1796, %v1798
    %vm1800 = vcmask 7168
    %1801 = vst.msk [vmem:[#allocation4] sm:$0xff] %vm1800, %v1799
    %v1802 = vperm.slane %v1794, 0
    %v1803 = vlaneseq
    %v1804 = vshrl.u32 %v1803, 7
    %1806 = vset.pattern.permute.xlu0 %v1804
    %1807 = vperm.xlu0 %1806, %v1802
    %v1808 = vpop.permute.xlu0 %1807
    %v1809 = vlaneseq
    %v1810 = vshrl.u32 %v1809, 7
    %v1811 = vadd.s32 %v1810, 8
    %1812 = vset.pattern.permute.xlu0 %v1811
    %1813 = vperm.xlu0 %1812, %v1802
    %v1814 = vpop.permute.xlu0 %1813
    %v1815 = vlaneseq
    %v1816 = vshrl.u32 %v1815, 7
    %v1817 = vadd.s32 %v1816, 16
    %1818 = vset.pattern.permute.xlu0 %v1817
    %1819 = vperm.xlu0 %1818, %v1802
    %v1820 = vpop.permute.xlu0 %1819
    %v1821 = vlaneseq
    %v1822 = vshrl.u32 %v1821, 7
    %v1823 = vadd.s32 %v1822, 24
    %1824 = vset.pattern.permute.xlu0 %v1823
    %1825 = vperm.xlu0 %1824, %v1802
    %v1826 = vpop.permute.xlu0 %1825
    %v1827 = vlaneseq
    %v1828 = vshrl.u32 %v1827, 7
    %v1829 = vadd.s32 %v1828, 32
    %1830 = vset.pattern.permute.xlu0 %v1829
    %1831 = vperm.xlu0 %1830, %v1802
    %v1832 = vpop.permute.xlu0 %1831
    %v1833 = vlaneseq
    %v1834 = vshrl.u32 %v1833, 7
    %v1835 = vadd.s32 %v1834, 40
    %1836 = vset.pattern.permute.xlu0 %v1835
    %1837 = vperm.xlu0 %1836, %v1802
    %v1838 = vpop.permute.xlu0 %1837
    %v1839 = vlaneseq
    %v1840 = vshrl.u32 %v1839, 7
    %v1841 = vadd.s32 %v1840, 48
    %1842 = vset.pattern.permute.xlu0 %v1841
    %1843 = vperm.xlu0 %1842, %v1802
    %v1844 = vpop.permute.xlu0 %1843
    %v1845 = vlaneseq
    %v1846 = vshrl.u32 %v1845, 7
    %v1847 = vadd.s32 %v1846, 56
    %1848 = vset.pattern.permute.xlu0 %v1847
    %1849 = vperm.xlu0 %1848, %v1802
    %v1850 = vpop.permute.xlu0 %1849
    %v1851 = vlaneseq
    %v1852 = vshrl.u32 %v1851, 7
    %v1853 = vadd.s32 %v1852, 64
    %1854 = vset.pattern.permute.xlu0 %v1853
    %1855 = vperm.xlu0 %1854, %v1802
    %v1856 = vpop.permute.xlu0 %1855
    %v1857 = vlaneseq
    %v1858 = vshrl.u32 %v1857, 7
    %v1859 = vadd.s32 %v1858, 72
    %1860 = vset.pattern.permute.xlu0 %v1859
    %1861 = vperm.xlu0 %1860, %v1802
    %v1862 = vpop.permute.xlu0 %1861
    %v1863 = vlaneseq
    %v1864 = vshrl.u32 %v1863, 7
    %v1865 = vadd.s32 %v1864, 80
    %1866 = vset.pattern.permute.xlu0 %v1865
    %1867 = vperm.xlu0 %1866, %v1802
    %v1868 = vpop.permute.xlu0 %1867
    %v1869 = vlaneseq
    %v1870 = vshrl.u32 %v1869, 7
    %v1871 = vadd.s32 %v1870, 88
    %1872 = vset.pattern.permute.xlu0 %v1871
    %1873 = vperm.xlu0 %1872, %v1802
    %v1874 = vpop.permute.xlu0 %1873
    %v1875 = vlaneseq
    %v1876 = vshrl.u32 %v1875, 7
    %v1877 = vadd.s32 %v1876, 96
    %1878 = vset.pattern.permute.xlu0 %v1877
    %1879 = vperm.xlu0 %1878, %v1802
    %v1880 = vpop.permute.xlu0 %1879
    %v1881 = vlaneseq
    %v1882 = vshrl.u32 %v1881, 7
    %v1883 = vadd.s32 %v1882, 104
    %1884 = vset.pattern.permute.xlu0 %v1883
    %1885 = vperm.xlu0 %1884, %v1802
    %v1886 = vpop.permute.xlu0 %1885
    %v1887 = vlaneseq
    %v1888 = vshrl.u32 %v1887, 7
    %v1889 = vadd.s32 %v1888, 112
    %1890 = vset.pattern.permute.xlu0 %v1889
    %1891 = vperm.xlu0 %1890, %v1802
    %v1892 = vpop.permute.xlu0 %1891
    %v1893 = vlaneseq
    %v1894 = vshrl.u32 %v1893, 7
    %v1895 = vadd.s32 %v1894, 120
    %1896 = vset.pattern.permute.xlu0 %v1895
    %1897 = vperm.xlu0 %1896, %v1802
    %v1898 = vpop.permute.xlu0 %1897
    %v1899 = vperm.slane %v1794, 1
    %v1900 = vlaneseq
    %v1901 = vshrl.u32 %v1900, 7
    %1903 = vset.pattern.permute.xlu0 %v1901
    %1904 = vperm.xlu0 %1903, %v1899
    %v1905 = vpop.permute.xlu0 %1904
    %v1906 = vlaneseq
    %v1907 = vshrl.u32 %v1906, 7
    %v1908 = vadd.s32 %v1907, 8
    %1909 = vset.pattern.permute.xlu0 %v1908
    %1910 = vperm.xlu0 %1909, %v1899
    %v1911 = vpop.permute.xlu0 %1910
    %v1912 = vlaneseq
    %v1913 = vshrl.u32 %v1912, 7
    %v1914 = vadd.s32 %v1913, 16
    %1915 = vset.pattern.permute.xlu0 %v1914
    %1916 = vperm.xlu0 %1915, %v1899
    %v1917 = vpop.permute.xlu0 %1916
    %v1918 = vlaneseq
    %v1919 = vshrl.u32 %v1918, 7
    %v1920 = vadd.s32 %v1919, 24
    %1921 = vset.pattern.permute.xlu0 %v1920
    %1922 = vperm.xlu0 %1921, %v1899
    %v1923 = vpop.permute.xlu0 %1922
    %v1924 = vlaneseq
    %v1925 = vshrl.u32 %v1924, 7
    %v1926 = vadd.s32 %v1925, 32
    %1927 = vset.pattern.permute.xlu0 %v1926
    %1928 = vperm.xlu0 %1927, %v1899
    %v1929 = vpop.permute.xlu0 %1928
    %v1930 = vlaneseq
    %v1931 = vshrl.u32 %v1930, 7
    %v1932 = vadd.s32 %v1931, 40
    %1933 = vset.pattern.permute.xlu0 %v1932
    %1934 = vperm.xlu0 %1933, %v1899
    %v1935 = vpop.permute.xlu0 %1934
    %v1936 = vlaneseq
    %v1937 = vshrl.u32 %v1936, 7
    %v1938 = vadd.s32 %v1937, 48
    %1939 = vset.pattern.permute.xlu0 %v1938
    %1940 = vperm.xlu0 %1939, %v1899
    %v1941 = vpop.permute.xlu0 %1940
    %v1942 = vlaneseq
    %v1943 = vshrl.u32 %v1942, 7
    %v1944 = vadd.s32 %v1943, 56
    %1945 = vset.pattern.permute.xlu0 %v1944
    %1946 = vperm.xlu0 %1945, %v1899
    %v1947 = vpop.permute.xlu0 %1946
    %v1948 = vlaneseq
    %v1949 = vshrl.u32 %v1948, 7
    %v1950 = vadd.s32 %v1949, 64
    %1951 = vset.pattern.permute.xlu0 %v1950
    %1952 = vperm.xlu0 %1951, %v1899
    %v1953 = vpop.permute.xlu0 %1952
    %v1954 = vlaneseq
    %v1955 = vshrl.u32 %v1954, 7
    %v1956 = vadd.s32 %v1955, 72
    %1957 = vset.pattern.permute.xlu0 %v1956
    %1958 = vperm.xlu0 %1957, %v1899
    %v1959 = vpop.permute.xlu0 %1958
    %v1960 = vlaneseq
    %v1961 = vshrl.u32 %v1960, 7
    %v1962 = vadd.s32 %v1961, 80
    %1963 = vset.pattern.permute.xlu0 %v1962
    %1964 = vperm.xlu0 %1963, %v1899
    %v1965 = vpop.permute.xlu0 %1964
    %v1966 = vlaneseq
    %v1967 = vshrl.u32 %v1966, 7
    %v1968 = vadd.s32 %v1967, 88
    %1969 = vset.pattern.permute.xlu0 %v1968
    %1970 = vperm.xlu0 %1969, %v1899
    %v1971 = vpop.permute.xlu0 %1970
    %v1972 = vlaneseq
    %v1973 = vshrl.u32 %v1972, 7
    %v1974 = vadd.s32 %v1973, 96
    %1975 = vset.pattern.permute.xlu0 %v1974
    %1976 = vperm.xlu0 %1975, %v1899
    %v1977 = vpop.permute.xlu0 %1976
    %v1978 = vlaneseq
    %v1979 = vshrl.u32 %v1978, 7
    %v1980 = vadd.s32 %v1979, 104
    %1981 = vset.pattern.permute.xlu0 %v1980
    %1982 = vperm.xlu0 %1981, %v1899
    %v1983 = vpop.permute.xlu0 %1982
    %v1984 = vlaneseq
    %v1985 = vshrl.u32 %v1984, 7
    %v1986 = vadd.s32 %v1985, 112
    %1987 = vset.pattern.permute.xlu0 %v1986
    %1988 = vperm.xlu0 %1987, %v1899
    %v1989 = vpop.permute.xlu0 %1988
    %v1990 = vlaneseq
    %v1991 = vshrl.u32 %v1990, 7
    %v1992 = vadd.s32 %v1991, 120
    %1993 = vset.pattern.permute.xlu0 %v1992
    %1994 = vperm.xlu0 %1993, %v1899
    %v1995 = vpop.permute.xlu0 %1994
    %v1996 = vperm.slane %v1794, 2
    %v1997 = vlaneseq
    %v1998 = vshrl.u32 %v1997, 7
    %2000 = vset.pattern.permute.xlu0 %v1998
    %2001 = vperm.xlu0 %2000, %v1996
    %v2002 = vpop.permute.xlu0 %2001
    %v2003 = vlaneseq
    %v2004 = vshrl.u32 %v2003, 7
    %v2005 = vadd.s32 %v2004, 8
    %2006 = vset.pattern.permute.xlu0 %v2005
    %2007 = vperm.xlu0 %2006, %v1996
    %v2008 = vpop.permute.xlu0 %2007
    %v2009 = vlaneseq
    %v2010 = vshrl.u32 %v2009, 7
    %v2011 = vadd.s32 %v2010, 16
    %2012 = vset.pattern.permute.xlu0 %v2011
    %2013 = vperm.xlu0 %2012, %v1996
    %v2014 = vpop.permute.xlu0 %2013
    %v2015 = vlaneseq
    %v2016 = vshrl.u32 %v2015, 7
    %v2017 = vadd.s32 %v2016, 24
    %2018 = vset.pattern.permute.xlu0 %v2017
    %2019 = vperm.xlu0 %2018, %v1996
    %v2020 = vpop.permute.xlu0 %2019
    %v2021 = vlaneseq
    %v2022 = vshrl.u32 %v2021, 7
    %v2023 = vadd.s32 %v2022, 32
    %2024 = vset.pattern.permute.xlu0 %v2023
    %2025 = vperm.xlu0 %2024, %v1996
    %v2026 = vpop.permute.xlu0 %2025
    %v2027 = vlaneseq
    %v2028 = vshrl.u32 %v2027, 7
    %v2029 = vadd.s32 %v2028, 40
    %2030 = vset.pattern.permute.xlu0 %v2029
    %2031 = vperm.xlu0 %2030, %v1996
    %v2032 = vpop.permute.xlu0 %2031
    %v2033 = vlaneseq
    %v2034 = vshrl.u32 %v2033, 7
    %v2035 = vadd.s32 %v2034, 48
    %2036 = vset.pattern.permute.xlu0 %v2035
    %2037 = vperm.xlu0 %2036, %v1996
    %v2038 = vpop.permute.xlu0 %2037
    %v2039 = vlaneseq
    %v2040 = vshrl.u32 %v2039, 7
    %v2041 = vadd.s32 %v2040, 56
    %2042 = vset.pattern.permute.xlu0 %v2041
    %2043 = vperm.xlu0 %2042, %v1996
    %v2044 = vpop.permute.xlu0 %2043
    %v2045 = vlaneseq
    %v2046 = vshrl.u32 %v2045, 7
    %v2047 = vadd.s32 %v2046, 64
    %2048 = vset.pattern.permute.xlu0 %v2047
    %2049 = vperm.xlu0 %2048, %v1996
    %v2050 = vpop.permute.xlu0 %2049
    %v2051 = vlaneseq
    %v2052 = vshrl.u32 %v2051, 7
    %v2053 = vadd.s32 %v2052, 72
    %2054 = vset.pattern.permute.xlu0 %v2053
    %2055 = vperm.xlu0 %2054, %v1996
    %v2056 = vpop.permute.xlu0 %2055
    %v2057 = vlaneseq
    %v2058 = vshrl.u32 %v2057, 7
    %v2059 = vadd.s32 %v2058, 80
    %2060 = vset.pattern.permute.xlu0 %v2059
    %2061 = vperm.xlu0 %2060, %v1996
    %v2062 = vpop.permute.xlu0 %2061
    %v2063 = vlaneseq
    %v2064 = vshrl.u32 %v2063, 7
    %v2065 = vadd.s32 %v2064, 88
    %2066 = vset.pattern.permute.xlu0 %v2065
    %2067 = vperm.xlu0 %2066, %v1996
    %v2068 = vpop.permute.xlu0 %2067
    %v2069 = vlaneseq
    %v2070 = vshrl.u32 %v2069, 7
    %v2071 = vadd.s32 %v2070, 96
    %2072 = vset.pattern.permute.xlu0 %v2071
    %2073 = vperm.xlu0 %2072, %v1996
    %v2074 = vpop.permute.xlu0 %2073
    %v2075 = vlaneseq
    %v2076 = vshrl.u32 %v2075, 7
    %v2077 = vadd.s32 %v2076, 104
    %2078 = vset.pattern.permute.xlu0 %v2077
    %2079 = vperm.xlu0 %2078, %v1996
    %v2080 = vpop.permute.xlu0 %2079
    %v2081 = vlaneseq
    %v2082 = vshrl.u32 %v2081, 7
    %v2083 = vadd.s32 %v2082, 112
    %2084 = vset.pattern.permute.xlu0 %v2083
    %2085 = vperm.xlu0 %2084, %v1996
    %v2086 = vpop.permute.xlu0 %2085
    %v2087 = vlaneseq
    %v2088 = vshrl.u32 %v2087, 7
    %v2089 = vadd.s32 %v2088, 120
    %2090 = vset.pattern.permute.xlu0 %v2089
    %2091 = vperm.xlu0 %2090, %v1996
    %v2092 = vpop.permute.xlu0 %2091
    %v2093 = vperm.slane %v1794, 3
    %v2094 = vlaneseq
    %v2095 = vshrl.u32 %v2094, 7
    %2097 = vset.pattern.permute.xlu0 %v2095
    %2098 = vperm.xlu0 %2097, %v2093
    %v2099 = vpop.permute.xlu0 %2098
    %v2100 = vlaneseq
    %v2101 = vshrl.u32 %v2100, 7
    %v2102 = vadd.s32 %v2101, 8
    %2103 = vset.pattern.permute.xlu0 %v2102
    %2104 = vperm.xlu0 %2103, %v2093
    %v2105 = vpop.permute.xlu0 %2104
    %v2106 = vlaneseq
    %v2107 = vshrl.u32 %v2106, 7
    %v2108 = vadd.s32 %v2107, 16
    %2109 = vset.pattern.permute.xlu0 %v2108
    %2110 = vperm.xlu0 %2109, %v2093
    %v2111 = vpop.permute.xlu0 %2110
    %v2112 = vlaneseq
    %v2113 = vshrl.u32 %v2112, 7
    %v2114 = vadd.s32 %v2113, 24
    %2115 = vset.pattern.permute.xlu0 %v2114
    %2116 = vperm.xlu0 %2115, %v2093
    %v2117 = vpop.permute.xlu0 %2116
    %v2118 = vlaneseq
    %v2119 = vshrl.u32 %v2118, 7
    %v2120 = vadd.s32 %v2119, 32
    %2121 = vset.pattern.permute.xlu0 %v2120
    %2122 = vperm.xlu0 %2121, %v2093
    %v2123 = vpop.permute.xlu0 %2122
    %v2124 = vlaneseq
    %v2125 = vshrl.u32 %v2124, 7
    %v2126 = vadd.s32 %v2125, 40
    %2127 = vset.pattern.permute.xlu0 %v2126
    %2128 = vperm.xlu0 %2127, %v2093
    %v2129 = vpop.permute.xlu0 %2128
    %v2130 = vlaneseq
    %v2131 = vshrl.u32 %v2130, 7
    %v2132 = vadd.s32 %v2131, 48
    %2133 = vset.pattern.permute.xlu0 %v2132
    %2134 = vperm.xlu0 %2133, %v2093
    %v2135 = vpop.permute.xlu0 %2134
    %v2136 = vlaneseq
    %v2137 = vshrl.u32 %v2136, 7
    %v2138 = vadd.s32 %v2137, 56
    %2139 = vset.pattern.permute.xlu0 %v2138
    %2140 = vperm.xlu0 %2139, %v2093
    %v2141 = vpop.permute.xlu0 %2140
    %v2142 = vlaneseq
    %v2143 = vshrl.u32 %v2142, 7
    %v2144 = vadd.s32 %v2143, 64
    %2145 = vset.pattern.permute.xlu0 %v2144
    %2146 = vperm.xlu0 %2145, %v2093
    %v2147 = vpop.permute.xlu0 %2146
    %v2148 = vlaneseq
    %v2149 = vshrl.u32 %v2148, 7
    %v2150 = vadd.s32 %v2149, 72
    %2151 = vset.pattern.permute.xlu0 %v2150
    %2152 = vperm.xlu0 %2151, %v2093
    %v2153 = vpop.permute.xlu0 %2152
    %v2154 = vlaneseq
    %v2155 = vshrl.u32 %v2154, 7
    %v2156 = vadd.s32 %v2155, 80
    %2157 = vset.pattern.permute.xlu0 %v2156
    %2158 = vperm.xlu0 %2157, %v2093
    %v2159 = vpop.permute.xlu0 %2158
    %v2160 = vlaneseq
    %v2161 = vshrl.u32 %v2160, 7
    %v2162 = vadd.s32 %v2161, 88
    %2163 = vset.pattern.permute.xlu0 %v2162
    %2164 = vperm.xlu0 %2163, %v2093
    %v2165 = vpop.permute.xlu0 %2164
    %v2166 = vlaneseq
    %v2167 = vshrl.u32 %v2166, 7
    %v2168 = vadd.s32 %v2167, 96
    %2169 = vset.pattern.permute.xlu0 %v2168
    %2170 = vperm.xlu0 %2169, %v2093
    %v2171 = vpop.permute.xlu0 %2170
    %v2172 = vlaneseq
    %v2173 = vshrl.u32 %v2172, 7
    %v2174 = vadd.s32 %v2173, 104
    %2175 = vset.pattern.permute.xlu0 %v2174
    %2176 = vperm.xlu0 %2175, %v2093
    %v2177 = vpop.permute.xlu0 %2176
    %v2178 = vlaneseq
    %v2179 = vshrl.u32 %v2178, 7
    %v2180 = vadd.s32 %v2179, 112
    %2181 = vset.pattern.permute.xlu0 %v2180
    %2182 = vperm.xlu0 %2181, %v2093
    %v2183 = vpop.permute.xlu0 %2182
    %v2184 = vlaneseq
    %v2185 = vshrl.u32 %v2184, 7
    %v2186 = vadd.s32 %v2185, 120
    %2187 = vset.pattern.permute.xlu0 %v2186
    %2188 = vperm.xlu0 %2187, %v2093
    %v2189 = vpop.permute.xlu0 %2188
    %v2190 = vperm.slane %v1794, 4
    %v2191 = vlaneseq
    %v2192 = vshrl.u32 %v2191, 7
    %2194 = vset.pattern.permute.xlu0 %v2192
    %2195 = vperm.xlu0 %2194, %v2190
    %v2196 = vpop.permute.xlu0 %2195
    %v2197 = vlaneseq
    %v2198 = vshrl.u32 %v2197, 7
    %v2199 = vadd.s32 %v2198, 8
    %2200 = vset.pattern.permute.xlu0 %v2199
    %2201 = vperm.xlu0 %2200, %v2190
    %v2202 = vpop.permute.xlu0 %2201
    %v2203 = vlaneseq
    %v2204 = vshrl.u32 %v2203, 7
    %v2205 = vadd.s32 %v2204, 16
    %2206 = vset.pattern.permute.xlu0 %v2205
    %2207 = vperm.xlu0 %2206, %v2190
    %v2208 = vpop.permute.xlu0 %2207
    %v2209 = vlaneseq
    %v2210 = vshrl.u32 %v2209, 7
    %v2211 = vadd.s32 %v2210, 24
    %2212 = vset.pattern.permute.xlu0 %v2211
    %2213 = vperm.xlu0 %2212, %v2190
    %v2214 = vpop.permute.xlu0 %2213
    %v2215 = vlaneseq
    %v2216 = vshrl.u32 %v2215, 7
    %v2217 = vadd.s32 %v2216, 32
    %2218 = vset.pattern.permute.xlu0 %v2217
    %2219 = vperm.xlu0 %2218, %v2190
    %v2220 = vpop.permute.xlu0 %2219
    %v2221 = vlaneseq
    %v2222 = vshrl.u32 %v2221, 7
    %v2223 = vadd.s32 %v2222, 40
    %2224 = vset.pattern.permute.xlu0 %v2223
    %2225 = vperm.xlu0 %2224, %v2190
    %v2226 = vpop.permute.xlu0 %2225
    %v2227 = vlaneseq
    %v2228 = vshrl.u32 %v2227, 7
    %v2229 = vadd.s32 %v2228, 48
    %2230 = vset.pattern.permute.xlu0 %v2229
    %2231 = vperm.xlu0 %2230, %v2190
    %v2232 = vpop.permute.xlu0 %2231
    %v2233 = vlaneseq
    %v2234 = vshrl.u32 %v2233, 7
    %v2235 = vadd.s32 %v2234, 56
    %2236 = vset.pattern.permute.xlu0 %v2235
    %2237 = vperm.xlu0 %2236, %v2190
    %v2238 = vpop.permute.xlu0 %2237
    %v2239 = vlaneseq
    %v2240 = vshrl.u32 %v2239, 7
    %v2241 = vadd.s32 %v2240, 64
    %2242 = vset.pattern.permute.xlu0 %v2241
    %2243 = vperm.xlu0 %2242, %v2190
    %v2244 = vpop.permute.xlu0 %2243
    %v2245 = vlaneseq
    %v2246 = vshrl.u32 %v2245, 7
    %v2247 = vadd.s32 %v2246, 72
    %2248 = vset.pattern.permute.xlu0 %v2247
    %2249 = vperm.xlu0 %2248, %v2190
    %v2250 = vpop.permute.xlu0 %2249
    %v2251 = vlaneseq
    %v2252 = vshrl.u32 %v2251, 7
    %v2253 = vadd.s32 %v2252, 80
    %2254 = vset.pattern.permute.xlu0 %v2253
    %2255 = vperm.xlu0 %2254, %v2190
    %v2256 = vpop.permute.xlu0 %2255
    %v2257 = vlaneseq
    %v2258 = vshrl.u32 %v2257, 7
    %v2259 = vadd.s32 %v2258, 88
    %2260 = vset.pattern.permute.xlu0 %v2259
    %2261 = vperm.xlu0 %2260, %v2190
    %v2262 = vpop.permute.xlu0 %2261
    %v2263 = vlaneseq
    %v2264 = vshrl.u32 %v2263, 7
    %v2265 = vadd.s32 %v2264, 96
    %2266 = vset.pattern.permute.xlu0 %v2265
    %2267 = vperm.xlu0 %2266, %v2190
    %v2268 = vpop.permute.xlu0 %2267
    %v2269 = vlaneseq
    %v2270 = vshrl.u32 %v2269, 7
    %v2271 = vadd.s32 %v2270, 104
    %2272 = vset.pattern.permute.xlu0 %v2271
    %2273 = vperm.xlu0 %2272, %v2190
    %v2274 = vpop.permute.xlu0 %2273
    %v2275 = vlaneseq
    %v2276 = vshrl.u32 %v2275, 7
    %v2277 = vadd.s32 %v2276, 112
    %2278 = vset.pattern.permute.xlu0 %v2277
    %2279 = vperm.xlu0 %2278, %v2190
    %v2280 = vpop.permute.xlu0 %2279
    %v2281 = vlaneseq
    %v2282 = vshrl.u32 %v2281, 7
    %v2283 = vadd.s32 %v2282, 120
    %2284 = vset.pattern.permute.xlu0 %v2283
    %2285 = vperm.xlu0 %2284, %v2190
    %v2286 = vpop.permute.xlu0 %2285
    %v2287 = vperm.slane %v1794, 5
    %v2288 = vlaneseq
    %v2289 = vshrl.u32 %v2288, 7
    %2291 = vset.pattern.permute.xlu0 %v2289
    %2292 = vperm.xlu0 %2291, %v2287
    %v2293 = vpop.permute.xlu0 %2292
    %v2294 = vlaneseq
    %v2295 = vshrl.u32 %v2294, 7
    %v2296 = vadd.s32 %v2295, 8
    %2297 = vset.pattern.permute.xlu0 %v2296
    %2298 = vperm.xlu0 %2297, %v2287
    %v2299 = vpop.permute.xlu0 %2298
    %v2300 = vlaneseq
    %v2301 = vshrl.u32 %v2300, 7
    %v2302 = vadd.s32 %v2301, 16
    %2303 = vset.pattern.permute.xlu0 %v2302
    %2304 = vperm.xlu0 %2303, %v2287
    %v2305 = vpop.permute.xlu0 %2304
    %v2306 = vlaneseq
    %v2307 = vshrl.u32 %v2306, 7
    %v2308 = vadd.s32 %v2307, 24
    %2309 = vset.pattern.permute.xlu0 %v2308
    %2310 = vperm.xlu0 %2309, %v2287
    %v2311 = vpop.permute.xlu0 %2310
    %v2312 = vlaneseq
    %v2313 = vshrl.u32 %v2312, 7
    %v2314 = vadd.s32 %v2313, 32
    %2315 = vset.pattern.permute.xlu0 %v2314
    %2316 = vperm.xlu0 %2315, %v2287
    %v2317 = vpop.permute.xlu0 %2316
    %v2318 = vlaneseq
    %v2319 = vshrl.u32 %v2318, 7
    %v2320 = vadd.s32 %v2319, 40
    %2321 = vset.pattern.permute.xlu0 %v2320
    %2322 = vperm.xlu0 %2321, %v2287
    %v2323 = vpop.permute.xlu0 %2322
    %v2324 = vlaneseq
    %v2325 = vshrl.u32 %v2324, 7
    %v2326 = vadd.s32 %v2325, 48
    %2327 = vset.pattern.permute.xlu0 %v2326
    %2328 = vperm.xlu0 %2327, %v2287
    %v2329 = vpop.permute.xlu0 %2328
    %v2330 = vlaneseq
    %v2331 = vshrl.u32 %v2330, 7
    %v2332 = vadd.s32 %v2331, 56
    %2333 = vset.pattern.permute.xlu0 %v2332
    %2334 = vperm.xlu0 %2333, %v2287
    %v2335 = vpop.permute.xlu0 %2334
    %v2336 = vlaneseq
    %v2337 = vshrl.u32 %v2336, 7
    %v2338 = vadd.s32 %v2337, 64
    %2339 = vset.pattern.permute.xlu0 %v2338
    %2340 = vperm.xlu0 %2339, %v2287
    %v2341 = vpop.permute.xlu0 %2340
    %v2342 = vlaneseq
    %v2343 = vshrl.u32 %v2342, 7
    %v2344 = vadd.s32 %v2343, 72
    %2345 = vset.pattern.permute.xlu0 %v2344
    %2346 = vperm.xlu0 %2345, %v2287
    %v2347 = vpop.permute.xlu0 %2346
    %v2348 = vlaneseq
    %v2349 = vshrl.u32 %v2348, 7
    %v2350 = vadd.s32 %v2349, 80
    %2351 = vset.pattern.permute.xlu0 %v2350
    %2352 = vperm.xlu0 %2351, %v2287
    %v2353 = vpop.permute.xlu0 %2352
    %v2354 = vlaneseq
    %v2355 = vshrl.u32 %v2354, 7
    %v2356 = vadd.s32 %v2355, 88
    %2357 = vset.pattern.permute.xlu0 %v2356
    %2358 = vperm.xlu0 %2357, %v2287
    %v2359 = vpop.permute.xlu0 %2358
    %v2360 = vlaneseq
    %v2361 = vshrl.u32 %v2360, 7
    %v2362 = vadd.s32 %v2361, 96
    %2363 = vset.pattern.permute.xlu0 %v2362
    %2364 = vperm.xlu0 %2363, %v2287
    %v2365 = vpop.permute.xlu0 %2364
    %v2366 = vlaneseq
    %v2367 = vshrl.u32 %v2366, 7
    %v2368 = vadd.s32 %v2367, 104
    %2369 = vset.pattern.permute.xlu0 %v2368
    %2370 = vperm.xlu0 %2369, %v2287
    %v2371 = vpop.permute.xlu0 %2370
    %v2372 = vlaneseq
    %v2373 = vshrl.u32 %v2372, 7
    %v2374 = vadd.s32 %v2373, 112
    %2375 = vset.pattern.permute.xlu0 %v2374
    %2376 = vperm.xlu0 %2375, %v2287
    %v2377 = vpop.permute.xlu0 %2376
    %v2378 = vlaneseq
    %v2379 = vshrl.u32 %v2378, 7
    %v2380 = vadd.s32 %v2379, 120
    %2381 = vset.pattern.permute.xlu0 %v2380
    %2382 = vperm.xlu0 %2381, %v2287
    %v2383 = vpop.permute.xlu0 %2382
    %v2384 = vperm.slane %v1794, 6
    %v2385 = vlaneseq
    %v2386 = vshrl.u32 %v2385, 7
    %2388 = vset.pattern.permute.xlu0 %v2386
    %2389 = vperm.xlu0 %2388, %v2384
    %v2390 = vpop.permute.xlu0 %2389
    %v2391 = vlaneseq
    %v2392 = vshrl.u32 %v2391, 7
    %v2393 = vadd.s32 %v2392, 8
    %2394 = vset.pattern.permute.xlu0 %v2393
    %2395 = vperm.xlu0 %2394, %v2384
    %v2396 = vpop.permute.xlu0 %2395
    %v2397 = vlaneseq
    %v2398 = vshrl.u32 %v2397, 7
    %v2399 = vadd.s32 %v2398, 16
    %2400 = vset.pattern.permute.xlu0 %v2399
    %2401 = vperm.xlu0 %2400, %v2384
    %v2402 = vpop.permute.xlu0 %2401
    %v2403 = vlaneseq
    %v2404 = vshrl.u32 %v2403, 7
    %v2405 = vadd.s32 %v2404, 24
    %2406 = vset.pattern.permute.xlu0 %v2405
    %2407 = vperm.xlu0 %2406, %v2384
    %v2408 = vpop.permute.xlu0 %2407
    %v2409 = vlaneseq
    %v2410 = vshrl.u32 %v2409, 7
    %v2411 = vadd.s32 %v2410, 32
    %2412 = vset.pattern.permute.xlu0 %v2411
    %2413 = vperm.xlu0 %2412, %v2384
    %v2414 = vpop.permute.xlu0 %2413
    %v2415 = vlaneseq
    %v2416 = vshrl.u32 %v2415, 7
    %v2417 = vadd.s32 %v2416, 40
    %2418 = vset.pattern.permute.xlu0 %v2417
    %2419 = vperm.xlu0 %2418, %v2384
    %v2420 = vpop.permute.xlu0 %2419
    %v2421 = vlaneseq
    %v2422 = vshrl.u32 %v2421, 7
    %v2423 = vadd.s32 %v2422, 48
    %2424 = vset.pattern.permute.xlu0 %v2423
    %2425 = vperm.xlu0 %2424, %v2384
    %v2426 = vpop.permute.xlu0 %2425
    %v2427 = vlaneseq
    %v2428 = vshrl.u32 %v2427, 7
    %v2429 = vadd.s32 %v2428, 56
    %2430 = vset.pattern.permute.xlu0 %v2429
    %2431 = vperm.xlu0 %2430, %v2384
    %v2432 = vpop.permute.xlu0 %2431
    %v2433 = vlaneseq
    %v2434 = vshrl.u32 %v2433, 7
    %v2435 = vadd.s32 %v2434, 64
    %2436 = vset.pattern.permute.xlu0 %v2435
    %2437 = vperm.xlu0 %2436, %v2384
    %v2438 = vpop.permute.xlu0 %2437
    %v2439 = vlaneseq
    %v2440 = vshrl.u32 %v2439, 7
    %v2441 = vadd.s32 %v2440, 72
    %2442 = vset.pattern.permute.xlu0 %v2441
    %2443 = vperm.xlu0 %2442, %v2384
    %v2444 = vpop.permute.xlu0 %2443
    %v2445 = vlaneseq
    %v2446 = vshrl.u32 %v2445, 7
    %v2447 = vadd.s32 %v2446, 80
    %2448 = vset.pattern.permute.xlu0 %v2447
    %2449 = vperm.xlu0 %2448, %v2384
    %v2450 = vpop.permute.xlu0 %2449
    %v2451 = vlaneseq
    %v2452 = vshrl.u32 %v2451, 7
    %v2453 = vadd.s32 %v2452, 88
    %2454 = vset.pattern.permute.xlu0 %v2453
    %2455 = vperm.xlu0 %2454, %v2384
    %v2456 = vpop.permute.xlu0 %2455
    %v2457 = vlaneseq
    %v2458 = vshrl.u32 %v2457, 7
    %v2459 = vadd.s32 %v2458, 96
    %2460 = vset.pattern.permute.xlu0 %v2459
    %2461 = vperm.xlu0 %2460, %v2384
    %v2462 = vpop.permute.xlu0 %2461
    %v2463 = vlaneseq
    %v2464 = vshrl.u32 %v2463, 7
    %v2465 = vadd.s32 %v2464, 104
    %2466 = vset.pattern.permute.xlu0 %v2465
    %2467 = vperm.xlu0 %2466, %v2384
    %v2468 = vpop.permute.xlu0 %2467
    %v2469 = vlaneseq
    %v2470 = vshrl.u32 %v2469, 7
    %v2471 = vadd.s32 %v2470, 112
    %2472 = vset.pattern.permute.xlu0 %v2471
    %2473 = vperm.xlu0 %2472, %v2384
    %v2474 = vpop.permute.xlu0 %2473
    %v2475 = vlaneseq
    %v2476 = vshrl.u32 %v2475, 7
    %v2477 = vadd.s32 %v2476, 120
    %2478 = vset.pattern.permute.xlu0 %v2477
    %2479 = vperm.xlu0 %2478, %v2384
    %v2480 = vpop.permute.xlu0 %2479
    %v2481 = vperm.slane %v1794, 7
    %v2482 = vlaneseq
    %v2483 = vshrl.u32 %v2482, 7
    %2485 = vset.pattern.permute.xlu0 %v2483
    %2486 = vperm.xlu0 %2485, %v2481
    %v2487 = vpop.permute.xlu0 %2486
    %v2488 = vlaneseq
    %v2489 = vshrl.u32 %v2488, 7
    %v2490 = vadd.s32 %v2489, 8
    %2491 = vset.pattern.permute.xlu0 %v2490
    %2492 = vperm.xlu0 %2491, %v2481
    %v2493 = vpop.permute.xlu0 %2492
    %v2494 = vlaneseq
    %v2495 = vshrl.u32 %v2494, 7
    %v2496 = vadd.s32 %v2495, 16
    %2497 = vset.pattern.permute.xlu0 %v2496
    %2498 = vperm.xlu0 %2497, %v2481
    %v2499 = vpop.permute.xlu0 %2498
    %v2500 = vlaneseq
    %v2501 = vshrl.u32 %v2500, 7
    %v2502 = vadd.s32 %v2501, 24
    %2503 = vset.pattern.permute.xlu0 %v2502
    %2504 = vperm.xlu0 %2503, %v2481
    %v2505 = vpop.permute.xlu0 %2504
    %v2506 = vlaneseq
    %v2507 = vshrl.u32 %v2506, 7
    %v2508 = vadd.s32 %v2507, 32
    %2509 = vset.pattern.permute.xlu0 %v2508
    %2510 = vperm.xlu0 %2509, %v2481
    %v2511 = vpop.permute.xlu0 %2510
    %v2512 = vlaneseq
    %v2513 = vshrl.u32 %v2512, 7
    %v2514 = vadd.s32 %v2513, 40
    %2515 = vset.pattern.permute.xlu0 %v2514
    %2516 = vperm.xlu0 %2515, %v2481
    %v2517 = vpop.permute.xlu0 %2516
    %v2518 = vlaneseq
    %v2519 = vshrl.u32 %v2518, 7
    %v2520 = vadd.s32 %v2519, 48
    %2521 = vset.pattern.permute.xlu0 %v2520
    %2522 = vperm.xlu0 %2521, %v2481
    %v2523 = vpop.permute.xlu0 %2522
    %v2524 = vlaneseq
    %v2525 = vshrl.u32 %v2524, 7
    %v2526 = vadd.s32 %v2525, 56
    %2527 = vset.pattern.permute.xlu0 %v2526
    %2528 = vperm.xlu0 %2527, %v2481
    %v2529 = vpop.permute.xlu0 %2528
    %v2530 = vlaneseq
    %v2531 = vshrl.u32 %v2530, 7
    %v2532 = vadd.s32 %v2531, 64
    %2533 = vset.pattern.permute.xlu0 %v2532
    %2534 = vperm.xlu0 %2533, %v2481
    %v2535 = vpop.permute.xlu0 %2534
    %v2536 = vlaneseq
    %v2537 = vshrl.u32 %v2536, 7
    %v2538 = vadd.s32 %v2537, 72
    %2539 = vset.pattern.permute.xlu0 %v2538
    %2540 = vperm.xlu0 %2539, %v2481
    %v2541 = vpop.permute.xlu0 %2540
    %v2542 = vlaneseq
    %v2543 = vshrl.u32 %v2542, 7
    %v2544 = vadd.s32 %v2543, 80
    %2545 = vset.pattern.permute.xlu0 %v2544
    %2546 = vperm.xlu0 %2545, %v2481
    %v2547 = vpop.permute.xlu0 %2546
    %v2548 = vlaneseq
    %v2549 = vshrl.u32 %v2548, 7
    %v2550 = vadd.s32 %v2549, 88
    %2551 = vset.pattern.permute.xlu0 %v2550
    %2552 = vperm.xlu0 %2551, %v2481
    %v2553 = vpop.permute.xlu0 %2552
    %v2554 = vlaneseq
    %v2555 = vshrl.u32 %v2554, 7
    %v2556 = vadd.s32 %v2555, 96
    %2557 = vset.pattern.permute.xlu0 %v2556
    %2558 = vperm.xlu0 %2557, %v2481
    %v2559 = vpop.permute.xlu0 %2558
    %v2560 = vlaneseq
    %v2561 = vshrl.u32 %v2560, 7
    %v2562 = vadd.s32 %v2561, 104
    %2563 = vset.pattern.permute.xlu0 %v2562
    %2564 = vperm.xlu0 %2563, %v2481
    %v2565 = vpop.permute.xlu0 %2564
    %v2566 = vlaneseq
    %v2567 = vshrl.u32 %v2566, 7
    %v2568 = vadd.s32 %v2567, 112
    %2569 = vset.pattern.permute.xlu0 %v2568
    %2570 = vperm.xlu0 %2569, %v2481
    %v2571 = vpop.permute.xlu0 %2570
    %v2572 = vlaneseq
    %v2573 = vshrl.u32 %v2572, 7
    %v2574 = vadd.s32 %v2573, 120
    %2575 = vset.pattern.permute.xlu0 %v2574
    %2576 = vperm.xlu0 %2575, %v2481
    %v2577 = vpop.permute.xlu0 %2576
    %v2578 = vmul.f32 %v1808, %v138
    %v2579 = vmul.f32 %v1814, %v139
    %v2580 = vmul.f32 %v1820, %v140
    %v2581 = vmul.f32 %v1826, %v141
    %v2582 = vmul.f32 %v1832, %v142
    %v2583 = vmul.f32 %v1838, %v143
    %v2584 = vmul.f32 %v1844, %v144
    %v2585 = vmul.f32 %v1850, %v145
    %v2586 = vmul.f32 %v1856, %v146
    %v2587 = vmul.f32 %v1862, %v147
    %v2588 = vmul.f32 %v1868, %v148
    %v2589 = vmul.f32 %v1874, %v149
    %v2590 = vmul.f32 %v1880, %v150
    %v2591 = vmul.f32 %v1886, %v151
    %v2592 = vmul.f32 %v1892, %v152
    %v2593 = vmul.f32 %v1898, %v153
    %v2594 = vmul.f32 %v1905, %v154
    %v2595 = vmul.f32 %v1911, %v155
    %v2596 = vmul.f32 %v1917, %v156
    %v2597 = vmul.f32 %v1923, %v157
    %v2598 = vmul.f32 %v1929, %v158
    %v2599 = vmul.f32 %v1935, %v159
    %v2600 = vmul.f32 %v1941, %v160
    %v2601 = vmul.f32 %v1947, %v161
    %v2602 = vmul.f32 %v1953, %v162
    %v2603 = vmul.f32 %v1959, %v163
    %v2604 = vmul.f32 %v1965, %v164
    %v2605 = vmul.f32 %v1971, %v165
    %v2606 = vmul.f32 %v1977, %v166
    %v2607 = vmul.f32 %v1983, %v167
    %v2608 = vmul.f32 %v1989, %v168
    %v2609 = vmul.f32 %v1995, %v169
    %v2610 = vmul.f32 %v2002, %v170
    %v2611 = vmul.f32 %v2008, %v171
    %v2612 = vmul.f32 %v2014, %v172
    %v2613 = vmul.f32 %v2020, %v173
    %v2614 = vmul.f32 %v2026, %v174
    %v2615 = vmul.f32 %v2032, %v175
    %v2616 = vmul.f32 %v2038, %v176
    %v2617 = vmul.f32 %v2044, %v177
    %v2618 = vmul.f32 %v2050, %v178
    %v2619 = vmul.f32 %v2056, %v179
    %v2620 = vmul.f32 %v2062, %v180
    %v2621 = vmul.f32 %v2068, %v181
    %v2622 = vmul.f32 %v2074, %v182
    %v2623 = vmul.f32 %v2080, %v183
    %v2624 = vmul.f32 %v2086, %v184
    %v2625 = vmul.f32 %v2092, %v185
    %v2626 = vmul.f32 %v2099, %v186
    %v2627 = vmul.f32 %v2105, %v187
    %v2628 = vmul.f32 %v2111, %v188
    %v2629 = vmul.f32 %v2117, %v189
    %v2630 = vmul.f32 %v2123, %v190
    %v2631 = vmul.f32 %v2129, %v191
    %v2632 = vmul.f32 %v2135, %v192
    %v2633 = vmul.f32 %v2141, %v193
    %v2634 = vmul.f32 %v2147, %v194
    %v2635 = vmul.f32 %v2153, %v195
    %v2636 = vmul.f32 %v2159, %v196
    %v2637 = vmul.f32 %v2165, %v197
    %v2638 = vmul.f32 %v2171, %v198
    %v2639 = vmul.f32 %v2177, %v199
    %v2640 = vmul.f32 %v2183, %v200
    %v2641 = vmul.f32 %v2189, %v201
    %v2642 = vmul.f32 %v2196, %v202
    %v2643 = vmul.f32 %v2202, %v203
    %v2644 = vmul.f32 %v2208, %v204
    %v2645 = vmul.f32 %v2214, %v205
    %v2646 = vmul.f32 %v2220, %v206
    %v2647 = vmul.f32 %v2226, %v207
    %v2648 = vmul.f32 %v2232, %v208
    %v2649 = vmul.f32 %v2238, %v209
    %v2650 = vmul.f32 %v2244, %v210
    %v2651 = vmul.f32 %v2250, %v211
    %v2652 = vmul.f32 %v2256, %v212
    %v2653 = vmul.f32 %v2262, %v213
    %v2654 = vmul.f32 %v2268, %v214
    %v2655 = vmul.f32 %v2274, %v215
    %v2656 = vmul.f32 %v2280, %v216
    %v2657 = vmul.f32 %v2286, %v217
    %v2658 = vmul.f32 %v2293, %v218
    %v2659 = vmul.f32 %v2299, %v219
    %v2660 = vmul.f32 %v2305, %v220
    %v2661 = vmul.f32 %v2311, %v221
    %v2662 = vmul.f32 %v2317, %v222
    %v2663 = vmul.f32 %v2323, %v223
    %v2664 = vmul.f32 %v2329, %v224
    %v2665 = vmul.f32 %v2335, %v225
    %v2666 = vmul.f32 %v2341, %v226
    %v2667 = vmul.f32 %v2347, %v227
    %v2668 = vmul.f32 %v2353, %v228
    %v2669 = vmul.f32 %v2359, %v229
    %v2670 = vmul.f32 %v2365, %v230
    %v2671 = vmul.f32 %v2371, %v231
    %v2672 = vmul.f32 %v2377, %v232
    %v2673 = vmul.f32 %v2383, %v233
    %v2674 = vmul.f32 %v2390, %v234
    %v2675 = vmul.f32 %v2396, %v235
    %v2676 = vmul.f32 %v2402, %v236
    %v2677 = vmul.f32 %v2408, %v237
    %v2678 = vmul.f32 %v2414, %v238
    %v2679 = vmul.f32 %v2420, %v239
    %v2680 = vmul.f32 %v2426, %v240
    %v2681 = vmul.f32 %v2432, %v241
    %v2682 = vmul.f32 %v2438, %v242
    %v2683 = vmul.f32 %v2444, %v243
    %v2684 = vmul.f32 %v2450, %v244
    %v2685 = vmul.f32 %v2456, %v245
    %v2686 = vmul.f32 %v2462, %v246
    %v2687 = vmul.f32 %v2468, %v247
    %v2688 = vmul.f32 %v2474, %v248
    %v2689 = vmul.f32 %v2480, %v249
    %v2690 = vmul.f32 %v2487, %v250
    %v2691 = vmul.f32 %v2493, %v251
    %v2692 = vmul.f32 %v2499, %v252
    %v2693 = vmul.f32 %v2505, %v253
    %v2694 = vmul.f32 %v2511, %v254
    %v2695 = vmul.f32 %v2517, %v255
    %v2696 = vmul.f32 %v2523, %v256
    %v2697 = vmul.f32 %v2529, %v257
    %v2698 = vmul.f32 %v2535, %v258
    %v2699 = vmul.f32 %v2541, %v259
    %v2700 = vmul.f32 %v2547, %v260
    %v2701 = vmul.f32 %v2553, %v261
    %v2702 = vmul.f32 %v2559, %v262
    %v2703 = vmul.f32 %v2565, %v263
    %v2704 = vmul.f32 %v2571, %v264
    %v2705 = vmul.f32 %v2577, %v265
    %v2706 = vadd.f32 %v2578, %v2579
    %v2707 = vadd.f32 %v2706, %v2580
    %v2708 = vadd.f32 %v2707, %v2581
    %v2709 = vadd.f32 %v2708, %v2582
    %v2710 = vadd.f32 %v2709, %v2583
    %v2711 = vadd.f32 %v2710, %v2584
    %v2712 = vadd.f32 %v2711, %v2585
    %v2713 = vadd.f32 %v2712, %v2586
    %v2714 = vadd.f32 %v2713, %v2587
    %v2715 = vadd.f32 %v2714, %v2588
    %v2716 = vadd.f32 %v2715, %v2589
    %v2717 = vadd.f32 %v2716, %v2590
    %v2718 = vadd.f32 %v2717, %v2591
    %v2719 = vadd.f32 %v2718, %v2592
    %v2720 = vadd.f32 %v2719, %v2593
    %v2721 = vrot.slane %v2720, 4
    %v2722 = vadd.f32 %v2720, %v2721
    %v2723 = vrot.slane %v2722, 2
    %v2724 = vadd.f32 %v2722, %v2723
    %v2725 = vrot.slane %v2724, 1
    %v2726 = vadd.f32 %v2724, %v2725
    %v2727 = vadd.f32 %v2594, %v2595
    %v2728 = vadd.f32 %v2727, %v2596
    %v2729 = vadd.f32 %v2728, %v2597
    %v2730 = vadd.f32 %v2729, %v2598
    %v2731 = vadd.f32 %v2730, %v2599
    %v2732 = vadd.f32 %v2731, %v2600
    %v2733 = vadd.f32 %v2732, %v2601
    %v2734 = vadd.f32 %v2733, %v2602
    %v2735 = vadd.f32 %v2734, %v2603
    %v2736 = vadd.f32 %v2735, %v2604
    %v2737 = vadd.f32 %v2736, %v2605
    %v2738 = vadd.f32 %v2737, %v2606
    %v2739 = vadd.f32 %v2738, %v2607
    %v2740 = vadd.f32 %v2739, %v2608
    %v2741 = vadd.f32 %v2740, %v2609
    %v2742 = vrot.slane %v2741, 4
    %v2743 = vadd.f32 %v2741, %v2742
    %v2744 = vrot.slane %v2743, 2
    %v2745 = vadd.f32 %v2743, %v2744
    %v2746 = vrot.slane %v2745, 1
    %v2747 = vadd.f32 %v2745, %v2746
    %v2748 = vadd.f32 %v2610, %v2611
    %v2749 = vadd.f32 %v2748, %v2612
    %v2750 = vadd.f32 %v2749, %v2613
    %v2751 = vadd.f32 %v2750, %v2614
    %v2752 = vadd.f32 %v2751, %v2615
    %v2753 = vadd.f32 %v2752, %v2616
    %v2754 = vadd.f32 %v2753, %v2617
    %v2755 = vadd.f32 %v2754, %v2618
    %v2756 = vadd.f32 %v2755, %v2619
    %v2757 = vadd.f32 %v2756, %v2620
    %v2758 = vadd.f32 %v2757, %v2621
    %v2759 = vadd.f32 %v2758, %v2622
    %v2760 = vadd.f32 %v2759, %v2623
    %v2761 = vadd.f32 %v2760, %v2624
    %v2762 = vadd.f32 %v2761, %v2625
    %v2763 = vrot.slane %v2762, 4
    %v2764 = vadd.f32 %v2762, %v2763
    %v2765 = vrot.slane %v2764, 2
    %v2766 = vadd.f32 %v2764, %v2765
    %v2767 = vrot.slane %v2766, 1
    %v2768 = vadd.f32 %v2766, %v2767
    %v2769 = vadd.f32 %v2626, %v2627
    %v2770 = vadd.f32 %v2769, %v2628
    %v2771 = vadd.f32 %v2770, %v2629
    %v2772 = vadd.f32 %v2771, %v2630
    %v2773 = vadd.f32 %v2772, %v2631
    %v2774 = vadd.f32 %v2773, %v2632
    %v2775 = vadd.f32 %v2774, %v2633
    %v2776 = vadd.f32 %v2775, %v2634
    %v2777 = vadd.f32 %v2776, %v2635
    %v2778 = vadd.f32 %v2777, %v2636
    %v2779 = vadd.f32 %v2778, %v2637
    %v2780 = vadd.f32 %v2779, %v2638
    %v2781 = vadd.f32 %v2780, %v2639
    %v2782 = vadd.f32 %v2781, %v2640
    %v2783 = vadd.f32 %v2782, %v2641
    %v2784 = vrot.slane %v2783, 4
    %v2785 = vadd.f32 %v2783, %v2784
    %v2786 = vrot.slane %v2785, 2
    %v2787 = vadd.f32 %v2785, %v2786
    %v2788 = vrot.slane %v2787, 1
    %v2789 = vadd.f32 %v2787, %v2788
    %v2790 = vadd.f32 %v2642, %v2643
    %v2791 = vadd.f32 %v2790, %v2644
    %v2792 = vadd.f32 %v2791, %v2645
    %v2793 = vadd.f32 %v2792, %v2646
    %v2794 = vadd.f32 %v2793, %v2647
    %v2795 = vadd.f32 %v2794, %v2648
    %v2796 = vadd.f32 %v2795, %v2649
    %v2797 = vadd.f32 %v2796, %v2650
    %v2798 = vadd.f32 %v2797, %v2651
    %v2799 = vadd.f32 %v2798, %v2652
    %v2800 = vadd.f32 %v2799, %v2653
    %v2801 = vadd.f32 %v2800, %v2654
    %v2802 = vadd.f32 %v2801, %v2655
    %v2803 = vadd.f32 %v2802, %v2656
    %v2804 = vadd.f32 %v2803, %v2657
    %v2805 = vrot.slane %v2804, 4
    %v2806 = vadd.f32 %v2804, %v2805
    %v2807 = vrot.slane %v2806, 2
    %v2808 = vadd.f32 %v2806, %v2807
    %v2809 = vrot.slane %v2808, 1
    %v2810 = vadd.f32 %v2808, %v2809
    %v2811 = vadd.f32 %v2658, %v2659
    %v2812 = vadd.f32 %v2811, %v2660
    %v2813 = vadd.f32 %v2812, %v2661
    %v2814 = vadd.f32 %v2813, %v2662
    %v2815 = vadd.f32 %v2814, %v2663
    %v2816 = vadd.f32 %v2815, %v2664
    %v2817 = vadd.f32 %v2816, %v2665
    %v2818 = vadd.f32 %v2817, %v2666
    %v2819 = vadd.f32 %v2818, %v2667
    %v2820 = vadd.f32 %v2819, %v2668
    %v2821 = vadd.f32 %v2820, %v2669
    %v2822 = vadd.f32 %v2821, %v2670
    %v2823 = vadd.f32 %v2822, %v2671
    %v2824 = vadd.f32 %v2823, %v2672
    %v2825 = vadd.f32 %v2824, %v2673
    %v2826 = vrot.slane %v2825, 4
    %v2827 = vadd.f32 %v2825, %v2826
    %v2828 = vrot.slane %v2827, 2
    %v2829 = vadd.f32 %v2827, %v2828
    %v2830 = vrot.slane %v2829, 1
    %v2831 = vadd.f32 %v2829, %v2830
    %v2832 = vadd.f32 %v2674, %v2675
    %v2833 = vadd.f32 %v2832, %v2676
    %v2834 = vadd.f32 %v2833, %v2677
    %v2835 = vadd.f32 %v2834, %v2678
    %v2836 = vadd.f32 %v2835, %v2679
    %v2837 = vadd.f32 %v2836, %v2680
    %v2838 = vadd.f32 %v2837, %v2681
    %v2839 = vadd.f32 %v2838, %v2682
    %v2840 = vadd.f32 %v2839, %v2683
    %v2841 = vadd.f32 %v2840, %v2684
    %v2842 = vadd.f32 %v2841, %v2685
    %v2843 = vadd.f32 %v2842, %v2686
    %v2844 = vadd.f32 %v2843, %v2687
    %v2845 = vadd.f32 %v2844, %v2688
    %v2846 = vadd.f32 %v2845, %v2689
    %v2847 = vrot.slane %v2846, 4
    %v2848 = vadd.f32 %v2846, %v2847
    %v2849 = vrot.slane %v2848, 2
    %v2850 = vadd.f32 %v2848, %v2849
    %v2851 = vrot.slane %v2850, 1
    %v2852 = vadd.f32 %v2850, %v2851
    %v2853 = vadd.f32 %v2690, %v2691
    %v2854 = vadd.f32 %v2853, %v2692
    %v2855 = vadd.f32 %v2854, %v2693
    %v2856 = vadd.f32 %v2855, %v2694
    %v2857 = vadd.f32 %v2856, %v2695
    %v2858 = vadd.f32 %v2857, %v2696
    %v2859 = vadd.f32 %v2858, %v2697
    %v2860 = vadd.f32 %v2859, %v2698
    %v2861 = vadd.f32 %v2860, %v2699
    %v2862 = vadd.f32 %v2861, %v2700
    %v2863 = vadd.f32 %v2862, %v2701
    %v2864 = vadd.f32 %v2863, %v2702
    %v2865 = vadd.f32 %v2864, %v2703
    %v2866 = vadd.f32 %v2865, %v2704
    %v2867 = vadd.f32 %v2866, %v2705
    %v2868 = vrot.slane %v2867, 4
    %v2869 = vadd.f32 %v2867, %v2868
    %v2870 = vrot.slane %v2869, 2
    %v2871 = vadd.f32 %v2869, %v2870
    %v2872 = vrot.slane %v2871, 1
    %v2873 = vadd.f32 %v2871, %v2872
    %v2874 = vld [vmem:[#allocation5] sm:$0xff]
    %2876 = vset.pattern.permute.xlu0 0
    %2877 = vperm.xlu0 %2876, %v1786
    %v2878 = vpop.permute.xlu0 %2877
    %v2880 = vmul.f32 %v2878, %v2874
    %v2889 = vsel %vm1764, %v2747, %v2726
    %v2890 = vsel %vm1766, %v2768, %v2889
    %v2891 = vsel %vm1768, %v2789, %v2890
    %v2892 = vsel %vm1770, %v2810, %v2891
    %v2893 = vsel %vm1772, %v2831, %v2892
    %v2894 = vsel %vm1774, %v2852, %v2893
    %v2895 = vsel %vm1776, %v2873, %v2894
    %v2897 = vadd.f32 %v2880, %v2895
    %2898 = vst [vmem:[#allocation5] sm:$0xff] %v2897
    %2899 = vst.msk [vmem:[#allocation3] sm:$0xff] %vm1800, %v1783
    %s2900 = sshra.s32 %s1352, 7
    %s2901 = sand.u32 %s1352, 127
    %s2902 = scalar_lea.vmem [#allocation15], %s2900
    %2903 = vst [vmem:[%s2902] sm:$0xff] %v1779
    // Predicated region
    $region46: #{tpu_custom_call.1} parent=1 // pred_check
      %p2904 = pneg %p88
    $region47: #{tpu_custom_call.1} parent=1 // pred_check_branch
      %2906 = sbr.rel (%p2904) target = $region49
    $region48: #{tpu_custom_call.1} parent=1 // pred_region
      %v2907 = vld [vmem:[#allocation4] sm:$0xff]
      %v2908 = vrcp.pop %v2907
      %v2909 = vmul.f32 %v2907, %v2908
      %v2910 = vsub.f32 1.0, %v2909
      %v2911 = vmul.f32 %v2908, %v2910
      %v2912 = vadd.f32 %v2908, %v2911
      %vm2913 = vweird.f32 %v2907
      %vm2914 = vweird.f32 %v2908
      %vm2915 = vmor %vm2913, %vm2914
      %v2916 = vsel %vm2915, %v2908, %v2912
      %v2917 = vand.u32 2147483647, %v2907
      %vm2918 = vcmp.eq.f32.partialorder %v2917, 8.507059e+37
      %v2919 = vand.u32 %v2907, 2147483648
      %v2920 = vor.u32 1.1754944e-38, %v2919
      %v2921 = vsel %vm2918, %v2920, %v2916
      %v2922 = vmul.f32 1.0, %v2921
      %v2923 = vld [vmem:[#allocation15] sm:$0xff]
      %v2924 = vld [vmem:[#allocation3] sm:$0xff]
      %2926 = vset.pattern.permute.xlu0 0
      %2927 = vperm.xlu0 %2926, %v2924
      %v2928 = vpop.permute.xlu0 %2927
      %v2930 = vsub.f32 %v2923, %v2928
      %v2931 = vmul.f32 %v2930, 1.442695
      %v2932 = vpow.pop %v2931
      %2934 = vset.pattern.permute.xlu0 0
      %2935 = vperm.xlu0 %2934, %v2922
      %v2936 = vpop.permute.xlu0 %2935
      %v2938 = vmul.f32 %v2932, %v2936
      %2939 = vst [vmem:[#allocation15] sm:$0xff] %v2938
      %v2940 = vld [vmem:[#allocation5] sm:$0xff]
      %v2941 = vmul.f32 %v2940, %v2936
      %2942 = vst [vmem:[#allocation14] sm:$0xff] %v2941
    $region49: #{tpu_custom_call.1} parent=1 // pred_fallthru
      _
    // Predicated region
    $region50: #{tpu_custom_call.1} parent=1 // pred_check
      _
    $region51: #{tpu_custom_call.1} parent=1 // pred_check_branch
      %2944 = sbr.rel (0) target = $region53
    $region52: #{tpu_custom_call.1} parent=1 // pred_region
      %2946 = vsyncadd [#allocation8], 0
      %s2948 = sshll.u32 [#allocation14], 4
      %s2949 = int_to_ptr.vmem [resolvable:$true] %s2948
      %s2950 = sshll.u32 %s6, 4
      %s2951 = int_to_ptr.hbm [resolvable:$true] %s2950
      %2953 = dma.vmem_to_hbm [thread:$0]  %s2949, 128, %s2951, [#allocation8]
    $region53: #{tpu_custom_call.1} parent=1 // pred_fallthru
      _
    // Predicated region
    $region54: #{tpu_custom_call.1} parent=1 // pred_check
      _
    $region55: #{tpu_custom_call.1} parent=1 // pred_check_branch
      %2955 = sbr.rel (0) target = $region57
    $region56: #{tpu_custom_call.1} parent=1 // pred_region
      %2957 = vsyncadd [#allocation16], 0
      %s2959 = sshll.u32 [#allocation15], 4
      %s2960 = int_to_ptr.vmem [resolvable:$true] %s2959
      %s2961 = sshll.u32 %s7, 4
      %s2962 = int_to_ptr.hbm [resolvable:$true] %s2961
      %2964 = dma.vmem_to_hbm [thread:$0]  %s2960, 128, %s2962, [#allocation16]
    $region57: #{tpu_custom_call.1} parent=1 // pred_fallthru
      _
    // Predicated region
    $region58: #{tpu_custom_call.1} parent=1 // pred_check
      _
    $region59: #{tpu_custom_call.1} parent=1 // pred_check_branch
      %2966 = sbr.rel (0) target = $region61
    $region60: #{tpu_custom_call.1} parent=1 // pred_region
      %2968 = dma.done [#allocation8], 128
    $region61: #{tpu_custom_call.1} parent=1 // pred_fallthru
      _
    // Predicated region
    $region62: #{tpu_custom_call.1} parent=1 // pred_check
      _
    $region63: #{tpu_custom_call.1} parent=1 // pred_check_branch
      %2970 = sbr.rel (0) target = $region65
    $region64: #{tpu_custom_call.1} parent=1 // pred_region
      %2972 = dma.done [#allocation16], 128
    $region65: #{tpu_custom_call.1} parent=1 // pred_fallthru
      _
    %2973 = vsyncpa [#allocation7], 1
    %2974 = vsyncpa [#allocation10], 1
    %2975 = vsyncpa [#allocation13], 1
    %2976 = vsyncpa [#allocation8], 1
    %2977 = vsyncpa [#allocation16], 1

// kernel: tpu_custom_call.1
$region0: #{tpu_custom_call.1}
  #allocation0 [shape = 'u32[]', space=smem, size = 0x4, offset = 0x4, fixed_abs, tag = 'smem constant byte address 0x4 - core index']
  #allocation1 [shape = 'u32[72,128]{1,0:T(1,128)}', space=vmem, size = 0x9000, scoped, tag = 'internal scratch']
  #allocation2 [shape = 'f32[8,128]{1,0:T(8,128)}', space=vmem, size = 0x1000, scoped, tag = 'scratch operand']
  #allocation3 [shape = 'f32[8,1]{1,0:T(8,128)}', space=vmem, size = 0x1000, scoped, tag = 'scratch operand']
  #allocation4 [shape = 'f32[8,1]{1,0:T(8,128)}', space=vmem, size = 0x1000, scoped, tag = 'scratch operand']
  #allocation5 [shape = 'f32[8,128]{1,0:T(8,128)}', space=vmem, size = 0x1000, scoped, tag = 'scratch operand']
  %s0 = inlined_call_operand.hbm [shape: f32[8,128,128], index: 0, kind: input, shape index: {}]
  %s1 = inlined_call_operand.hbm [shape: f32[8,128], index: 1, kind: input, shape index: {}]
  %s2 = inlined_call_operand.hbm [shape: f32[128,128], index: 2, kind: input, shape index: {}]
  %s3 = inlined_call_operand.hbm [shape: f32[128,128], index: 3, kind: input, shape index: {}]
  %s4 = inlined_call_operand.vmem [shape: f32[1,128], index: 4, kind: input, shape index: {}]
  %s5 = inlined_call_operand.vmem [shape: f32[1,128], index: 5, kind: input, shape index: {}]
  %s6 = inlined_call_operand.hbm [shape: f32[8,128], index: 6, kind: output, shape index: {0}]
  %s7 = inlined_call_operand.hbm [shape: f32[8,128], index: 7, kind: output, shape index: {1}]
  %8 = xla_tuple %s6, %s7
  %s9 = sld [smem:[#allocation0]]
  $region66: #{tpu_custom_call.1} parent=0
    _
  %s11 = ssub.s32 1, %s9
  %s12 = scalar_select 0, %s11, %s9
  $region1: #{tpu_custom_call.1} parent=0
    #allocation6 [shape = 'u8[524288]{0}', space=vmem, size = 0x80000, scoped, tag = 'input window, operand 0, single buffered']
    #allocation7 [shape = 's32[1]{0}', space=sflag, size = 0x4, scoped, tag = 'scoped memory for tpu_custom_call.1']
    #allocation8 [shape = 's32[1]{0}', space=sflag, size = 0x4, scoped, tag = 'scoped memory for tpu_custom_call.1']
    #allocation9 [shape = 'u8[4096]{0}', space=vmem, size = 0x1000, scoped, tag = 'input window, operand 1, single buffered']
    #allocation10 [shape = 's32[1]{0}', space=sflag, size = 0x4, scoped, tag = 'scoped memory for tpu_custom_call.1']
    #allocation11 [shape = 'u8[65536]{0}', space=vmem, size = 0x10000, scoped, tag = 'input window, operand 2, single buffered']
    #allocation12 [shape = 'u8[65536]{0}', space=vmem, size = 0x10000, scoped, tag = 'input window, operand 3, single buffered']
    #allocation13 [shape = 's32[1]{0}', space=sflag, size = 0x4, scoped, tag = 'scoped memory for tpu_custom_call.1']
    #allocation14 [shape = 'u8[4096]{0}', space=vmem, size = 0x1000, scoped, tag = 'output window, operand 0, single buffered']
    #allocation15 [shape = 'u8[4096]{0}', space=vmem, size = 0x1000, scoped, tag = 'output window, operand 1, single buffered']
    #allocation16 [shape = 's32[1]{0}', space=sflag, size = 0x4, scoped, tag = 'scoped memory for tpu_custom_call.1']
    %13 = vsyncpa [#allocation7], 0
    %14 = vsyncpa [#allocation10], 0
    %15 = vsyncpa [#allocation13], 0
    %16 = vsyncpa [#allocation8], 0
    %17 = vsyncpa [#allocation16], 0
    // Predicated region
    $region2: #{tpu_custom_call.1} parent=1 // pred_check
      _
    $region3: #{tpu_custom_call.1} parent=1 // pred_check_branch
      %19 = sbr.rel (0) target = $region5
    $region4: #{tpu_custom_call.1} parent=1 // pred_region
      %21 = vsyncadd [#allocation7], 0
      %s22 = sshll.u32 %s0, 4
      %s23 = int_to_ptr.hbm [resolvable:$true] %s22
      %s24 = sshll.u32 [#allocation6], 4
      %s25 = int_to_ptr.vmem [resolvable:$true] %s24
      %30 = dma.hbm_to_vmem [thread:$0]  %s23, 16384, %s25, [#allocation7], 128, 128, 8
    $region5: #{tpu_custom_call.1} parent=1 // pred_fallthru
      _
    // Predicated region
    $region6: #{tpu_custom_call.1} parent=1 // pred_check
      _
    $region7: #{tpu_custom_call.1} parent=1 // pred_check_branch
      %32 = sbr.rel (0) target = $region9
    $region8: #{tpu_custom_call.1} parent=1 // pred_region
      %34 = vsyncadd [#allocation10], 0
      %s36 = sshll.u32 %s1, 4
      %s37 = int_to_ptr.hbm [resolvable:$true] %s36
      %s38 = sshll.u32 [#allocation9], 4
      %s39 = int_to_ptr.vmem [resolvable:$true] %s38
      %41 = dma.hbm_to_vmem [thread:$0]  %s37, 128, %s39, [#allocation10]
    $region9: #{tpu_custom_call.1} parent=1 // pred_fallthru
      _
    // Predicated region
    $region10: #{tpu_custom_call.1} parent=1 // pred_check
      _
    $region11: #{tpu_custom_call.1} parent=1 // pred_check_branch
      %43 = sbr.rel (0) target = $region13
    $region12: #{tpu_custom_call.1} parent=1 // pred_region
      %45 = vsyncadd [#allocation10], 0
      %s46 = sshll.u32 %s2, 4
      %s47 = int_to_ptr.hbm [resolvable:$true] %s46
      %s48 = sshll.u32 [#allocation11], 4
      %s49 = int_to_ptr.vmem [resolvable:$true] %s48
      %54 = dma.hbm_to_vmem [thread:$0]  %s47, 2048, %s49, [#allocation10], 128, 128, 8
    $region13: #{tpu_custom_call.1} parent=1 // pred_fallthru
      _
    // Predicated region
    $region14: #{tpu_custom_call.1} parent=1 // pred_check
      _
    $region15: #{tpu_custom_call.1} parent=1 // pred_check_branch
      %56 = sbr.rel (0) target = $region17
    $region16: #{tpu_custom_call.1} parent=1 // pred_region
      %58 = vsyncadd [#allocation13], 0
      %s59 = sshll.u32 %s3, 4
      %s60 = int_to_ptr.hbm [resolvable:$true] %s59
      %s61 = sshll.u32 [#allocation12], 4
      %s62 = int_to_ptr.vmem [resolvable:$true] %s61
      %67 = dma.hbm_to_vmem [thread:$0]  %s60, 2048, %s62, [#allocation13], 128, 128, 8
    $region17: #{tpu_custom_call.1} parent=1 // pred_fallthru
      _
    // Predicated region
    $region18: #{tpu_custom_call.1} parent=1 // pred_check
      _
    $region19: #{tpu_custom_call.1} parent=1 // pred_check_branch
      %69 = sbr.rel (0) target = $region21
    $region20: #{tpu_custom_call.1} parent=1 // pred_region
      _
    $region21: #{tpu_custom_call.1} parent=1 // pred_fallthru
      _
    // Predicated region
    $region22: #{tpu_custom_call.1} parent=1 // pred_check
      _
    $region23: #{tpu_custom_call.1} parent=1 // pred_check_branch
      %71 = sbr.rel (0) target = $region25
    $region24: #{tpu_custom_call.1} parent=1 // pred_region
      _
    $region25: #{tpu_custom_call.1} parent=1 // pred_fallthru
      _
    // Predicated region
    $region26: #{tpu_custom_call.1} parent=1 // pred_check
      _
    $region27: #{tpu_custom_call.1} parent=1 // pred_check_branch
      %73 = sbr.rel (0) target = $region29
    $region28: #{tpu_custom_call.1} parent=1 // pred_region
      %75 = dma.done [#allocation7], 16384
    $region29: #{tpu_custom_call.1} parent=1 // pred_fallthru
      _
    // Predicated region
    $region30: #{tpu_custom_call.1} parent=1 // pred_check
      _
    $region31: #{tpu_custom_call.1} parent=1 // pred_check_branch
      %77 = sbr.rel (0) target = $region33
    $region32: #{tpu_custom_call.1} parent=1 // pred_region
      %79 = dma.done [#allocation10], 128
    $region33: #{tpu_custom_call.1} parent=1 // pred_fallthru
      _
    // Predicated region
    $region34: #{tpu_custom_call.1} parent=1 // pred_check
      _
    $region35: #{tpu_custom_call.1} parent=1 // pred_check_branch
      %81 = sbr.rel (0) target = $region37
    $region36: #{tpu_custom_call.1} parent=1 // pred_region
      %83 = dma.done [#allocation10], 2048
    $region37: #{tpu_custom_call.1} parent=1 // pred_fallthru
      _
    // Predicated region
    $region38: #{tpu_custom_call.1} parent=1 // pred_check
      _
    $region39: #{tpu_custom_call.1} parent=1 // pred_check_branch
      %85 = sbr.rel (0) target = $region41
    $region40: #{tpu_custom_call.1} parent=1 // pred_region
      %87 = dma.done [#allocation13], 2048
    $region41: #{tpu_custom_call.1} parent=1 // pred_fallthru
      _
    %p88 = scmp.eq.s32.totalorder 0, 0
    // Predicated region
    $region42: #{tpu_custom_call.1} parent=1 // pred_check
      %p89 = pneg %p88
    $region43: #{tpu_custom_call.1} parent=1 // pred_check_branch
      %91 = sbr.rel (%p89) target = $region45
    $region44: #{tpu_custom_call.1} parent=1 // pred_region
      %v92 = vld [vmem:[#allocation9] sm:$0xff]
      %v93 = vld [vmem:[#allocation12] sm:$0xff]
      %v94 = vld [vmem:[#allocation12 + $0x8] sm:$0xff]
      %v95 = vld [vmem:[#allocation12 + $0x10] sm:$0xff]
      %v96 = vld [vmem:[#allocation12 + $0x18] sm:$0xff]
      %v97 = vld [vmem:[#allocation12 + $0x20] sm:$0xff]
      %v98 = vld [vmem:[#allocation12 + $0x28] sm:$0xff]
      %v99 = vld [vmem:[#allocation12 + $0x30] sm:$0xff]
      %v100 = vld [vmem:[#allocation12 + $0x38] sm:$0xff]
      %v101 = vld [vmem:[#allocation12 + $0x40] sm:$0xff]
      %v102 = vld [vmem:[#allocation12 + $0x48] sm:$0xff]
      %v103 = vld [vmem:[#allocation12 + $0x50] sm:$0xff]
      %v104 = vld [vmem:[#allocation12 + $0x58] sm:$0xff]
      %v105 = vld [vmem:[#allocation12 + $0x60] sm:$0xff]
      %v106 = vld [vmem:[#allocation12 + $0x68] sm:$0xff]
      %v107 = vld [vmem:[#allocation12 + $0x70] sm:$0xff]
      %v108 = vld [vmem:[#allocation12 + $0x78] sm:$0xff]
      %v109 = vld [vmem:[%s4] sm:$0x1]
      %v111 = vperm.slane %v109, 0
      %113 = vmatpush.msra.mxu0 %v108
      %114 = vmatpush.msra.mxu0 %v107
      %115 = vmatpush.msra.mxu0 %v106
      %116 = vmatpush.msra.mxu0 %v105
      %117 = vmatpush.msra.mxu0 %v104
      %118 = vmatpush.msra.mxu0 %v103
      %119 = vmatpush.msra.mxu0 %v102
      %120 = vmatpush.msra.mxu0 %v101
      %121 = vmatpush.msra.mxu0 %v100
      %122 = vmatpush.msra.mxu0 %v99
      %123 = vmatpush.msra.mxu0 %v98
      %124 = vmatpush.msra.mxu0 %v97
      %125 = vmatpush.msra.mxu0 %v96
      %126 = vmatpush.msra.mxu0 %v95
      %127 = vmatpush.msra.mxu0 %v94
      %128 = vmatpush.msra.mxu0 %v93
      %129 = vmatmul.f32.gmra.mxu0 %v92
      %v130 = vpop.f32.mrf.mxu0
      %v131 = vadd.f32 %v111, %v130
      %132 = vdwg.mxu0
      %133 = vst [vmem:[#allocation2] sm:$0xff] %v131
      %vm134 = vcmask 7168
      %135 = vst.msk [vmem:[#allocation3] sm:$0xff] %vm134, -1e+30
      %136 = vst.msk [vmem:[#allocation4] sm:$0xff] %vm134, 0.0
      %137 = vst [vmem:[#allocation5] sm:$0xff] 0.0
    $region45: #{tpu_custom_call.1} parent=1 // pred_fallthru
      _
    %v138 = vld [vmem:[#allocation6] sm:$0xff]
    %v139 = vld [vmem:[#allocation6 + $0x8] sm:$0xff]
    %v140 = vld [vmem:[#allocation6 + $0x10] sm:$0xff]
    %v141 = vld [vmem:[#allocation6 + $0x18] sm:$0xff]
    %v142 = vld [vmem:[#allocation6 + $0x20] sm:$0xff]
    %v143 = vld [vmem:[#allocation6 + $0x28] sm:$0xff]
    %v144 = vld [vmem:[#allocation6 + $0x30] sm:$0xff]
    %v145 = vld [vmem:[#allocation6 + $0x38] sm:$0xff]
    %v146 = vld [vmem:[#allocation6 + $0x40] sm:$0xff]
    %v147 = vld [vmem:[#allocation6 + $0x48] sm:$0xff]
    %v148 = vld [vmem:[#allocation6 + $0x50] sm:$0xff]
    %v149 = vld [vmem:[#allocation6 + $0x58] sm:$0xff]
    %v150 = vld [vmem:[#allocation6 + $0x60] sm:$0xff]
    %v151 = vld [vmem:[#allocation6 + $0x68] sm:$0xff]
    %v152 = vld [vmem:[#allocation6 + $0x70] sm:$0xff]
    %v153 = vld [vmem:[#allocation6 + $0x78] sm:$0xff]
    %v154 = vld [vmem:[#allocation6 + $0x80] sm:$0xff]
    %v155 = vld [vmem:[#allocation6 + $0x88] sm:$0xff]
    %v156 = vld [vmem:[#allocation6 + $0x90] sm:$0xff]
    %v157 = vld [vmem:[#allocation6 + $0x98] sm:$0xff]
    %v158 = vld [vmem:[#allocation6 + $0xa0] sm:$0xff]
    %v159 = vld [vmem:[#allocation6 + $0xa8] sm:$0xff]
    %v160 = vld [vmem:[#allocation6 + $0xb0] sm:$0xff]
    %v161 = vld [vmem:[#allocation6 + $0xb8] sm:$0xff]
    %v162 = vld [vmem:[#allocation6 + $0xc0] sm:$0xff]
    %v163 = vld [vmem:[#allocation6 + $0xc8] sm:$0xff]
    %v164 = vld [vmem:[#allocation6 + $0xd0] sm:$0xff]
    %v165 = vld [vmem:[#allocation6 + $0xd8] sm:$0xff]
    %v166 = vld [vmem:[#allocation6 + $0xe0] sm:$0xff]
    %v167 = vld [vmem:[#allocation6 + $0xe8] sm:$0xff]
    %v168 = vld [vmem:[#allocation6 + $0xf0] sm:$0xff]
    %v169 = vld [vmem:[#allocation6 + $0xf8] sm:$0xff]
    %v170 = vld [vmem:[#allocation6 + $0x100] sm:$0xff]
    %v171 = vld [vmem:[#allocation6 + $0x108] sm:$0xff]
    %v172 = vld [vmem:[#allocation6 + $0x110] sm:$0xff]
    %v173 = vld [vmem:[#allocation6 + $0x118] sm:$0xff]
    %v174 = vld [vmem:[#allocation6 + $0x120] sm:$0xff]
    %v175 = vld [vmem:[#allocation6 + $0x128] sm:$0xff]
    %v176 = vld [vmem:[#allocation6 + $0x130] sm:$0xff]
    %v177 = vld [vmem:[#allocation6 + $0x138] sm:$0xff]
    %v178 = vld [vmem:[#allocation6 + $0x140] sm:$0xff]
    %v179 = vld [vmem:[#allocation6 + $0x148] sm:$0xff]
    %v180 = vld [vmem:[#allocation6 + $0x150] sm:$0xff]
    %v181 = vld [vmem:[#allocation6 + $0x158] sm:$0xff]
    %v182 = vld [vmem:[#allocation6 + $0x160] sm:$0xff]
    %v183 = vld [vmem:[#allocation6 + $0x168] sm:$0xff]
    %v184 = vld [vmem:[#allocation6 + $0x170] sm:$0xff]
    %v185 = vld [vmem:[#allocation6 + $0x178] sm:$0xff]
    %v186 = vld [vmem:[#allocation6 + $0x180] sm:$0xff]
    %v187 = vld [vmem:[#allocation6 + $0x188] sm:$0xff]
    %v188 = vld [vmem:[#allocation6 + $0x190] sm:$0xff]
    %v189 = vld [vmem:[#allocation6 + $0x198] sm:$0xff]
    %v190 = vld [vmem:[#allocation6 + $0x1a0] sm:$0xff]
    %v191 = vld [vmem:[#allocation6 + $0x1a8] sm:$0xff]
    %v192 = vld [vmem:[#allocation6 + $0x1b0] sm:$0xff]
    %v193 = vld [vmem:[#allocation6 + $0x1b8] sm:$0xff]
    %v194 = vld [vmem:[#allocation6 + $0x1c0] sm:$0xff]
    %v195 = vld [vmem:[#allocation6 + $0x1c8] sm:$0xff]
    %v196 = vld [vmem:[#allocation6 + $0x1d0] sm:$0xff]
    %v197 = vld [vmem:[#allocation6 + $0x1d8] sm:$0xff]
    %v198 = vld [vmem:[#allocation6 + $0x1e0] sm:$0xff]
    %v199 = vld [vmem:[#allocation6 + $0x1e8] sm:$0xff]
    %v200 = vld [vmem:[#allocation6 + $0x1f0] sm:$0xff]
    %v201 = vld [vmem:[#allocation6 + $0x1f8] sm:$0xff]
    %v202 = vld [vmem:[#allocation6 + $0x200] sm:$0xff]
    %v203 = vld [vmem:[#allocation6 + $0x208] sm:$0xff]
    %v204 = vld [vmem:[#allocation6 + $0x210] sm:$0xff]
    %v205 = vld [vmem:[#allocation6 + $0x218] sm:$0xff]
    %v206 = vld [vmem:[#allocation6 + $0x220] sm:$0xff]
    %v207 = vld [vmem:[#allocation6 + $0x228] sm:$0xff]
    %v208 = vld [vmem:[#allocation6 + $0x230] sm:$0xff]
    %v209 = vld [vmem:[#allocation6 + $0x238] sm:$0xff]
    %v210 = vld [vmem:[#allocation6 + $0x240] sm:$0xff]
    %v211 = vld [vmem:[#allocation6 + $0x248] sm:$0xff]
    %v212 = vld [vmem:[#allocation6 + $0x250] sm:$0xff]
    %v213 = vld [vmem:[#allocation6 + $0x258] sm:$0xff]
    %v214 = vld [vmem:[#allocation6 + $0x260] sm:$0xff]
    %v215 = vld [vmem:[#allocation6 + $0x268] sm:$0xff]
    %v216 = vld [vmem:[#allocation6 + $0x270] sm:$0xff]
    %v217 = vld [vmem:[#allocation6 + $0x278] sm:$0xff]
    %v218 = vld [vmem:[#allocation6 + $0x280] sm:$0xff]
    %v219 = vld [vmem:[#allocation6 + $0x288] sm:$0xff]
    %v220 = vld [vmem:[#allocation6 + $0x290] sm:$0xff]
    %v221 = vld [vmem:[#allocation6 + $0x298] sm:$0xff]
    %v222 = vld [vmem:[#allocation6 + $0x2a0] sm:$0xff]
    %v223 = vld [vmem:[#allocation6 + $0x2a8] sm:$0xff]
    %v224 = vld [vmem:[#allocation6 + $0x2b0] sm:$0xff]
    %v225 = vld [vmem:[#allocation6 + $0x2b8] sm:$0xff]
    %v226 = vld [vmem:[#allocation6 + $0x2c0] sm:$0xff]
    %v227 = vld [vmem:[#allocation6 + $0x2c8] sm:$0xff]
    %v228 = vld [vmem:[#allocation6 + $0x2d0] sm:$0xff]
    %v229 = vld [vmem:[#allocation6 + $0x2d8] sm:$0xff]
    %v230 = vld [vmem:[#allocation6 + $0x2e0] sm:$0xff]
    %v231 = vld [vmem:[#allocation6 + $0x2e8] sm:$0xff]
    %v232 = vld [vmem:[#allocation6 + $0x2f0] sm:$0xff]
    %v233 = vld [vmem:[#allocation6 + $0x2f8] sm:$0xff]
    %v234 = vld [vmem:[#allocation6 + $0x300] sm:$0xff]
    %v235 = vld [vmem:[#allocation6 + $0x308] sm:$0xff]
    %v236 = vld [vmem:[#allocation6 + $0x310] sm:$0xff]
    %v237 = vld [vmem:[#allocation6 + $0x318] sm:$0xff]
    %v238 = vld [vmem:[#allocation6 + $0x320] sm:$0xff]
    %v239 = vld [vmem:[#allocation6 + $0x328] sm:$0xff]
    %v240 = vld [vmem:[#allocation6 + $0x330] sm:$0xff]
    %v241 = vld [vmem:[#allocation6 + $0x338] sm:$0xff]
    %v242 = vld [vmem:[#allocation6 + $0x340] sm:$0xff]
    %v243 = vld [vmem:[#allocation6 + $0x348] sm:$0xff]
    %v244 = vld [vmem:[#allocation6 + $0x350] sm:$0xff]
    %v245 = vld [vmem:[#allocation6 + $0x358] sm:$0xff]
    %v246 = vld [vmem:[#allocation6 + $0x360] sm:$0xff]
    %v247 = vld [vmem:[#allocation6 + $0x368] sm:$0xff]
    %v248 = vld [vmem:[#allocation6 + $0x370] sm:$0xff]
    %v249 = vld [vmem:[#allocation6 + $0x378] sm:$0xff]
    %v250 = vld [vmem:[#allocation6 + $0x380] sm:$0xff]
    %v251 = vld [vmem:[#allocation6 + $0x388] sm:$0xff]
    %v252 = vld [vmem:[#allocation6 + $0x390] sm:$0xff]
    %v253 = vld [vmem:[#allocation6 + $0x398] sm:$0xff]
    %v254 = vld [vmem:[#allocation6 + $0x3a0] sm:$0xff]
    %v255 = vld [vmem:[#allocation6 + $0x3a8] sm:$0xff]
    %v256 = vld [vmem:[#allocation6 + $0x3b0] sm:$0xff]
    %v257 = vld [vmem:[#allocation6 + $0x3b8] sm:$0xff]
    %v258 = vld [vmem:[#allocation6 + $0x3c0] sm:$0xff]
    %v259 = vld [vmem:[#allocation6 + $0x3c8] sm:$0xff]
    %v260 = vld [vmem:[#allocation6 + $0x3d0] sm:$0xff]
    %v261 = vld [vmem:[#allocation6 + $0x3d8] sm:$0xff]
    %v262 = vld [vmem:[#allocation6 + $0x3e0] sm:$0xff]
    %v263 = vld [vmem:[#allocation6 + $0x3e8] sm:$0xff]
    %v264 = vld [vmem:[#allocation6 + $0x3f0] sm:$0xff]
    %v265 = vld [vmem:[#allocation6 + $0x3f8] sm:$0xff]
    %v266 = vld [vmem:[#allocation11] sm:$0xff]
    %v267 = vld [vmem:[#allocation11 + $0x8] sm:$0xff]
    %v268 = vld [vmem:[#allocation11 + $0x10] sm:$0xff]
    %v269 = vld [vmem:[#allocation11 + $0x18] sm:$0xff]
    %v270 = vld [vmem:[#allocation11 + $0x20] sm:$0xff]
    %v271 = vld [vmem:[#allocation11 + $0x28] sm:$0xff]
    %v272 = vld [vmem:[#allocation11 + $0x30] sm:$0xff]
    %v273 = vld [vmem:[#allocation11 + $0x38] sm:$0xff]
    %v274 = vld [vmem:[#allocation11 + $0x40] sm:$0xff]
    %v275 = vld [vmem:[#allocation11 + $0x48] sm:$0xff]
    %v276 = vld [vmem:[#allocation11 + $0x50] sm:$0xff]
    %v277 = vld [vmem:[#allocation11 + $0x58] sm:$0xff]
    %v278 = vld [vmem:[#allocation11 + $0x60] sm:$0xff]
    %v279 = vld [vmem:[#allocation11 + $0x68] sm:$0xff]
    %v280 = vld [vmem:[#allocation11 + $0x70] sm:$0xff]
    %v281 = vld [vmem:[#allocation11 + $0x78] sm:$0xff]
    %282 = vmatpush.msra.mxu0 %v281
    %283 = vmatpush.msra.mxu0 %v280
    %284 = vmatpush.msra.mxu0 %v279
    %285 = vmatpush.msra.mxu0 %v278
    %286 = vmatpush.msra.mxu0 %v277
    %287 = vmatpush.msra.mxu0 %v276
    %288 = vmatpush.msra.mxu0 %v275
    %289 = vmatpush.msra.mxu0 %v274
    %290 = vmatpush.msra.mxu0 %v273
    %291 = vmatpush.msra.mxu0 %v272
    %292 = vmatpush.msra.mxu0 %v271
    %293 = vmatpush.msra.mxu0 %v270
    %294 = vmatpush.msra.mxu0 %v269
    %295 = vmatpush.msra.mxu0 %v268
    %296 = vmatpush.msra.mxu0 %v267
    %297 = vmatpush.msra.mxu0 %v266
    %298 = vmatmul.f32.gmra.mxu0 %v138
    %v299 = vpop.f32.mrf.mxu0
    %v300 = vadd.f32 0.0, %v299
    %301 = vmatmul.f32.gmra.mxu0 %v139
    %v302 = vpop.f32.mrf.mxu0
    %v303 = vadd.f32 0.0, %v302
    %304 = vmatmul.f32.gmra.mxu0 %v140
    %v305 = vpop.f32.mrf.mxu0
    %v306 = vadd.f32 0.0, %v305
    %307 = vmatmul.f32.gmra.mxu0 %v141
    %v308 = vpop.f32.mrf.mxu0
    %v309 = vadd.f32 0.0, %v308
    %310 = vmatmul.f32.gmra.mxu0 %v142
    %v311 = vpop.f32.mrf.mxu0
    %v312 = vadd.f32 0.0, %v311
    %313 = vmatmul.f32.gmra.mxu0 %v143
    %v314 = vpop.f32.mrf.mxu0
    %v315 = vadd.f32 0.0, %v314
    %316 = vmatmul.f32.gmra.mxu0 %v144
    %v317 = vpop.f32.mrf.mxu0
    %v318 = vadd.f32 0.0, %v317
    %319 = vmatmul.f32.gmra.mxu0 %v145
    %v320 = vpop.f32.mrf.mxu0
    %v321 = vadd.f32 0.0, %v320
    %322 = vmatmul.f32.gmra.mxu0 %v146
    %v323 = vpop.f32.mrf.mxu0
    %v324 = vadd.f32 0.0, %v323
    %325 = vmatmul.f32.gmra.mxu0 %v147
    %v326 = vpop.f32.mrf.mxu0
    %v327 = vadd.f32 0.0, %v326
    %328 = vmatmul.f32.gmra.mxu0 %v148
    %v329 = vpop.f32.mrf.mxu0
    %v330 = vadd.f32 0.0, %v329
    %331 = vmatmul.f32.gmra.mxu0 %v149
    %v332 = vpop.f32.mrf.mxu0
    %v333 = vadd.f32 0.0, %v332
    %334 = vmatmul.f32.gmra.mxu0 %v150
    %v335 = vpop.f32.mrf.mxu0
    %v336 = vadd.f32 0.0, %v335
    %337 = vmatmul.f32.gmra.mxu0 %v151
    %v338 = vpop.f32.mrf.mxu0
    %v339 = vadd.f32 0.0, %v338
    %340 = vmatmul.f32.gmra.mxu0 %v152
    %v341 = vpop.f32.mrf.mxu0
    %v342 = vadd.f32 0.0, %v341
    %343 = vmatmul.f32.gmra.mxu0 %v153
    %v344 = vpop.f32.mrf.mxu0
    %v345 = vadd.f32 0.0, %v344
    %346 = vmatmul.f32.gmra.mxu0 %v154
    %v347 = vpop.f32.mrf.mxu0
    %v348 = vadd.f32 0.0, %v347
    %349 = vmatmul.f32.gmra.mxu0 %v155
    %v350 = vpop.f32.mrf.mxu0
    %v351 = vadd.f32 0.0, %v350
    %352 = vmatmul.f32.gmra.mxu0 %v156
    %v353 = vpop.f32.mrf.mxu0
    %v354 = vadd.f32 0.0, %v353
    %355 = vmatmul.f32.gmra.mxu0 %v157
    %v356 = vpop.f32.mrf.mxu0
    %v357 = vadd.f32 0.0, %v356
    %358 = vmatmul.f32.gmra.mxu0 %v158
    %v359 = vpop.f32.mrf.mxu0
    %v360 = vadd.f32 0.0, %v359
    %361 = vmatmul.f32.gmra.mxu0 %v159
    %v362 = vpop.f32.mrf.mxu0
    %v363 = vadd.f32 0.0, %v362
    %364 = vmatmul.f32.gmra.mxu0 %v160
    %v365 = vpop.f32.mrf.mxu0
    %v366 = vadd.f32 0.0, %v365
    %367 = vmatmul.f32.gmra.mxu0 %v161
    %v368 = vpop.f32.mrf.mxu0
    %v369 = vadd.f32 0.0, %v368
    %370 = vmatmul.f32.gmra.mxu0 %v162
    %v371 = vpop.f32.mrf.mxu0
    %v372 = vadd.f32 0.0, %v371
    %373 = vmatmul.f32.gmra.mxu0 %v163
    %v374 = vpop.f32.mrf.mxu0
    %v375 = vadd.f32 0.0, %v374
    %376 = vmatmul.f32.gmra.mxu0 %v164
    %v377 = vpop.f32.mrf.mxu0
    %v378 = vadd.f32 0.0, %v377
    %379 = vmatmul.f32.gmra.mxu0 %v165
    %v380 = vpop.f32.mrf.mxu0
    %v381 = vadd.f32 0.0, %v380
    %382 = vmatmul.f32.gmra.mxu0 %v166
    %v383 = vpop.f32.mrf.mxu0
    %v384 = vadd.f32 0.0, %v383
    %385 = vmatmul.f32.gmra.mxu0 %v167
    %v386 = vpop.f32.mrf.mxu0
    %v387 = vadd.f32 0.0, %v386
    %388 = vmatmul.f32.gmra.mxu0 %v168
    %v389 = vpop.f32.mrf.mxu0
    %v390 = vadd.f32 0.0, %v389
    %391 = vmatmul.f32.gmra.mxu0 %v169
    %v392 = vpop.f32.mrf.mxu0
    %v393 = vadd.f32 0.0, %v392
    %394 = vmatmul.f32.gmra.mxu0 %v170
    %v395 = vpop.f32.mrf.mxu0
    %v396 = vadd.f32 0.0, %v395
    %397 = vmatmul.f32.gmra.mxu0 %v171
    %v398 = vpop.f32.mrf.mxu0
    %v399 = vadd.f32 0.0, %v398
    %400 = vmatmul.f32.gmra.mxu0 %v172
    %v401 = vpop.f32.mrf.mxu0
    %v402 = vadd.f32 0.0, %v401
    %403 = vmatmul.f32.gmra.mxu0 %v173
    %v404 = vpop.f32.mrf.mxu0
    %v405 = vadd.f32 0.0, %v404
    %406 = vmatmul.f32.gmra.mxu0 %v174
    %v407 = vpop.f32.mrf.mxu0
    %v408 = vadd.f32 0.0, %v407
    %409 = vmatmul.f32.gmra.mxu0 %v175
    %v410 = vpop.f32.mrf.mxu0
    %v411 = vadd.f32 0.0, %v410
    %412 = vmatmul.f32.gmra.mxu0 %v176
    %v413 = vpop.f32.mrf.mxu0
    %v414 = vadd.f32 0.0, %v413
    %415 = vmatmul.f32.gmra.mxu0 %v177
    %v416 = vpop.f32.mrf.mxu0
    %v417 = vadd.f32 0.0, %v416
    %418 = vmatmul.f32.gmra.mxu0 %v178
    %v419 = vpop.f32.mrf.mxu0
    %v420 = vadd.f32 0.0, %v419
    %421 = vmatmul.f32.gmra.mxu0 %v179
    %v422 = vpop.f32.mrf.mxu0
    %v423 = vadd.f32 0.0, %v422
    %424 = vmatmul.f32.gmra.mxu0 %v180
    %v425 = vpop.f32.mrf.mxu0
    %v426 = vadd.f32 0.0, %v425
    %427 = vmatmul.f32.gmra.mxu0 %v181
    %v428 = vpop.f32.mrf.mxu0
    %v429 = vadd.f32 0.0, %v428
    %430 = vmatmul.f32.gmra.mxu0 %v182
    %v431 = vpop.f32.mrf.mxu0
    %v432 = vadd.f32 0.0, %v431
    %433 = vmatmul.f32.gmra.mxu0 %v183
    %v434 = vpop.f32.mrf.mxu0
    %v435 = vadd.f32 0.0, %v434
    %436 = vmatmul.f32.gmra.mxu0 %v184
    %v437 = vpop.f32.mrf.mxu0
    %v438 = vadd.f32 0.0, %v437
    %439 = vmatmul.f32.gmra.mxu0 %v185
    %v440 = vpop.f32.mrf.mxu0
    %v441 = vadd.f32 0.0, %v440
    %442 = vmatmul.f32.gmra.mxu0 %v186
    %v443 = vpop.f32.mrf.mxu0
    %v444 = vadd.f32 0.0, %v443
    %445 = vmatmul.f32.gmra.mxu0 %v187
    %v446 = vpop.f32.mrf.mxu0
    %v447 = vadd.f32 0.0, %v446
    %448 = vmatmul.f32.gmra.mxu0 %v188
    %v449 = vpop.f32.mrf.mxu0
    %v450 = vadd.f32 0.0, %v449
    %451 = vmatmul.f32.gmra.mxu0 %v189
    %v452 = vpop.f32.mrf.mxu0
    %v453 = vadd.f32 0.0, %v452
    %454 = vmatmul.f32.gmra.mxu0 %v190
    %v455 = vpop.f32.mrf.mxu0
    %v456 = vadd.f32 0.0, %v455
    %457 = vmatmul.f32.gmra.mxu0 %v191
    %v458 = vpop.f32.mrf.mxu0
    %v459 = vadd.f32 0.0, %v458
    %460 = vmatmul.f32.gmra.mxu0 %v192
    %v461 = vpop.f32.mrf.mxu0
    %v462 = vadd.f32 0.0, %v461
    %463 = vmatmul.f32.gmra.mxu0 %v193
    %v464 = vpop.f32.mrf.mxu0
    %v465 = vadd.f32 0.0, %v464
    %466 = vmatmul.f32.gmra.mxu0 %v194
    %v467 = vpop.f32.mrf.mxu0
    %v468 = vadd.f32 0.0, %v467
    %469 = vmatmul.f32.gmra.mxu0 %v195
    %v470 = vpop.f32.mrf.mxu0
    %v471 = vadd.f32 0.0, %v470
    %472 = vmatmul.f32.gmra.mxu0 %v196
    %v473 = vpop.f32.mrf.mxu0
    %v474 = vadd.f32 0.0, %v473
    %475 = vmatmul.f32.gmra.mxu0 %v197
    %v476 = vpop.f32.mrf.mxu0
    %v477 = vadd.f32 0.0, %v476
    %478 = vmatmul.f32.gmra.mxu0 %v198
    %v479 = vpop.f32.mrf.mxu0
    %v480 = vadd.f32 0.0, %v479
    %481 = vmatmul.f32.gmra.mxu0 %v199
    %v482 = vpop.f32.mrf.mxu0
    %v483 = vadd.f32 0.0, %v482
    %484 = vmatmul.f32.gmra.mxu0 %v200
    %v485 = vpop.f32.mrf.mxu0
    %v486 = vadd.f32 0.0, %v485
    %487 = vmatmul.f32.gmra.mxu0 %v201
    %v488 = vpop.f32.mrf.mxu0
    %v489 = vadd.f32 0.0, %v488
    %490 = vmatmul.f32.gmra.mxu0 %v202
    %v491 = vpop.f32.mrf.mxu0
    %v492 = vadd.f32 0.0, %v491
    %493 = vmatmul.f32.gmra.mxu0 %v203
    %v494 = vpop.f32.mrf.mxu0
    %v495 = vadd.f32 0.0, %v494
    %496 = vmatmul.f32.gmra.mxu0 %v204
    %v497 = vpop.f32.mrf.mxu0
    %v498 = vadd.f32 0.0, %v497
    %499 = vmatmul.f32.gmra.mxu0 %v205
    %v500 = vpop.f32.mrf.mxu0
    %v501 = vadd.f32 0.0, %v500
    %502 = vmatmul.f32.gmra.mxu0 %v206
    %v503 = vpop.f32.mrf.mxu0
    %v504 = vadd.f32 0.0, %v503
    %505 = vmatmul.f32.gmra.mxu0 %v207
    %v506 = vpop.f32.mrf.mxu0
    %v507 = vadd.f32 0.0, %v506
    %508 = vmatmul.f32.gmra.mxu0 %v208
    %v509 = vpop.f32.mrf.mxu0
    %v510 = vadd.f32 0.0, %v509
    %511 = vmatmul.f32.gmra.mxu0 %v209
    %v512 = vpop.f32.mrf.mxu0
    %v513 = vadd.f32 0.0, %v512
    %514 = vmatmul.f32.gmra.mxu0 %v210
    %v515 = vpop.f32.mrf.mxu0
    %v516 = vadd.f32 0.0, %v515
    %517 = vmatmul.f32.gmra.mxu0 %v211
    %v518 = vpop.f32.mrf.mxu0
    %v519 = vadd.f32 0.0, %v518
    %520 = vmatmul.f32.gmra.mxu0 %v212
    %v521 = vpop.f32.mrf.mxu0
    %v522 = vadd.f32 0.0, %v521
    %523 = vmatmul.f32.gmra.mxu0 %v213
    %v524 = vpop.f32.mrf.mxu0
    %v525 = vadd.f32 0.0, %v524
    %526 = vmatmul.f32.gmra.mxu0 %v214
    %v527 = vpop.f32.mrf.mxu0
    %v528 = vadd.f32 0.0, %v527
    %529 = vmatmul.f32.gmra.mxu0 %v215
    %v530 = vpop.f32.mrf.mxu0
    %v531 = vadd.f32 0.0, %v530
    %532 = vmatmul.f32.gmra.mxu0 %v216
    %v533 = vpop.f32.mrf.mxu0
    %v534 = vadd.f32 0.0, %v533
    %535 = vmatmul.f32.gmra.mxu0 %v217
    %v536 = vpop.f32.mrf.mxu0
    %v537 = vadd.f32 0.0, %v536
    %538 = vmatmul.f32.gmra.mxu0 %v218
    %v539 = vpop.f32.mrf.mxu0
    %v540 = vadd.f32 0.0, %v539
    %541 = vmatmul.f32.gmra.mxu0 %v219
    %v542 = vpop.f32.mrf.mxu0
    %v543 = vadd.f32 0.0, %v542
    %544 = vmatmul.f32.gmra.mxu0 %v220
    %v545 = vpop.f32.mrf.mxu0
    %v546 = vadd.f32 0.0, %v545
    %547 = vmatmul.f32.gmra.mxu0 %v221
    %v548 = vpop.f32.mrf.mxu0
    %v549 = vadd.f32 0.0, %v548
    %550 = vmatmul.f32.gmra.mxu0 %v222
    %v551 = vpop.f32.mrf.mxu0
    %v552 = vadd.f32 0.0, %v551
    %553 = vmatmul.f32.gmra.mxu0 %v223
    %v554 = vpop.f32.mrf.mxu0
    %v555 = vadd.f32 0.0, %v554
    %556 = vmatmul.f32.gmra.mxu0 %v224
    %v557 = vpop.f32.mrf.mxu0
    %v558 = vadd.f32 0.0, %v557
    %559 = vmatmul.f32.gmra.mxu0 %v225
    %v560 = vpop.f32.mrf.mxu0
    %v561 = vadd.f32 0.0, %v560
    %562 = vmatmul.f32.gmra.mxu0 %v226
    %v563 = vpop.f32.mrf.mxu0
    %v564 = vadd.f32 0.0, %v563
    %565 = vmatmul.f32.gmra.mxu0 %v227
    %v566 = vpop.f32.mrf.mxu0
    %v567 = vadd.f32 0.0, %v566
    %568 = vmatmul.f32.gmra.mxu0 %v228
    %v569 = vpop.f32.mrf.mxu0
    %v570 = vadd.f32 0.0, %v569
    %571 = vmatmul.f32.gmra.mxu0 %v229
    %v572 = vpop.f32.mrf.mxu0
    %v573 = vadd.f32 0.0, %v572
    %574 = vmatmul.f32.gmra.mxu0 %v230
    %v575 = vpop.f32.mrf.mxu0
    %v576 = vadd.f32 0.0, %v575
    %577 = vmatmul.f32.gmra.mxu0 %v231
    %v578 = vpop.f32.mrf.mxu0
    %v579 = vadd.f32 0.0, %v578
    %580 = vmatmul.f32.gmra.mxu0 %v232
    %v581 = vpop.f32.mrf.mxu0
    %v582 = vadd.f32 0.0, %v581
    %583 = vmatmul.f32.gmra.mxu0 %v233
    %v584 = vpop.f32.mrf.mxu0
    %v585 = vadd.f32 0.0, %v584
    %586 = vmatmul.f32.gmra.mxu0 %v234
    %v587 = vpop.f32.mrf.mxu0
    %v588 = vadd.f32 0.0, %v587
    %589 = vmatmul.f32.gmra.mxu0 %v235
    %v590 = vpop.f32.mrf.mxu0
    %v591 = vadd.f32 0.0, %v590
    %592 = vmatmul.f32.gmra.mxu0 %v236
    %v593 = vpop.f32.mrf.mxu0
    %v594 = vadd.f32 0.0, %v593
    %595 = vmatmul.f32.gmra.mxu0 %v237
    %v596 = vpop.f32.mrf.mxu0
    %v597 = vadd.f32 0.0, %v596
    %598 = vmatmul.f32.gmra.mxu0 %v238
    %v599 = vpop.f32.mrf.mxu0
    %v600 = vadd.f32 0.0, %v599
    %601 = vmatmul.f32.gmra.mxu0 %v239
    %v602 = vpop.f32.mrf.mxu0
    %v603 = vadd.f32 0.0, %v602
    %604 = vmatmul.f32.gmra.mxu0 %v240
    %v605 = vpop.f32.mrf.mxu0
    %v606 = vadd.f32 0.0, %v605
    %607 = vmatmul.f32.gmra.mxu0 %v241
    %v608 = vpop.f32.mrf.mxu0
    %v609 = vadd.f32 0.0, %v608
    %610 = vmatmul.f32.gmra.mxu0 %v242
    %v611 = vpop.f32.mrf.mxu0
    %v612 = vadd.f32 0.0, %v611
    %613 = vmatmul.f32.gmra.mxu0 %v243
    %v614 = vpop.f32.mrf.mxu0
    %v615 = vadd.f32 0.0, %v614
    %616 = vmatmul.f32.gmra.mxu0 %v244
    %v617 = vpop.f32.mrf.mxu0
    %v618 = vadd.f32 0.0, %v617
    %619 = vmatmul.f32.gmra.mxu0 %v245
    %v620 = vpop.f32.mrf.mxu0
    %v621 = vadd.f32 0.0, %v620
    %622 = vmatmul.f32.gmra.mxu0 %v246
    %v623 = vpop.f32.mrf.mxu0
    %v624 = vadd.f32 0.0, %v623
    %625 = vmatmul.f32.gmra.mxu0 %v247
    %v626 = vpop.f32.mrf.mxu0
    %v627 = vadd.f32 0.0, %v626
    %628 = vmatmul.f32.gmra.mxu0 %v248
    %v629 = vpop.f32.mrf.mxu0
    %v630 = vadd.f32 0.0, %v629
    %631 = vmatmul.f32.gmra.mxu0 %v249
    %v632 = vpop.f32.mrf.mxu0
    %v633 = vadd.f32 0.0, %v632
    %634 = vmatmul.f32.gmra.mxu0 %v250
    %v635 = vpop.f32.mrf.mxu0
    %v636 = vadd.f32 0.0, %v635
    %637 = vmatmul.f32.gmra.mxu0 %v251
    %v638 = vpop.f32.mrf.mxu0
    %v639 = vadd.f32 0.0, %v638
    %640 = vmatmul.f32.gmra.mxu0 %v252
    %v641 = vpop.f32.mrf.mxu0
    %v642 = vadd.f32 0.0, %v641
    %643 = vmatmul.f32.gmra.mxu0 %v253
    %v644 = vpop.f32.mrf.mxu0
    %v645 = vadd.f32 0.0, %v644
    %646 = vmatmul.f32.gmra.mxu0 %v254
    %v647 = vpop.f32.mrf.mxu0
    %v648 = vadd.f32 0.0, %v647
    %649 = vmatmul.f32.gmra.mxu0 %v255
    %v650 = vpop.f32.mrf.mxu0
    %v651 = vadd.f32 0.0, %v650
    %652 = vmatmul.f32.gmra.mxu0 %v256
    %v653 = vpop.f32.mrf.mxu0
    %v654 = vadd.f32 0.0, %v653
    %655 = vmatmul.f32.gmra.mxu0 %v257
    %v656 = vpop.f32.mrf.mxu0
    %v657 = vadd.f32 0.0, %v656
    %658 = vmatmul.f32.gmra.mxu0 %v258
    %v659 = vpop.f32.mrf.mxu0
    %v660 = vadd.f32 0.0, %v659
    %661 = vmatmul.f32.gmra.mxu0 %v259
    %v662 = vpop.f32.mrf.mxu0
    %v663 = vadd.f32 0.0, %v662
    %664 = vmatmul.f32.gmra.mxu0 %v260
    %v665 = vpop.f32.mrf.mxu0
    %v666 = vadd.f32 0.0, %v665
    %667 = vmatmul.f32.gmra.mxu0 %v261
    %v668 = vpop.f32.mrf.mxu0
    %v669 = vadd.f32 0.0, %v668
    %670 = vmatmul.f32.gmra.mxu0 %v262
    %v671 = vpop.f32.mrf.mxu0
    %v672 = vadd.f32 0.0, %v671
    %673 = vmatmul.f32.gmra.mxu0 %v263
    %v674 = vpop.f32.mrf.mxu0
    %v675 = vadd.f32 0.0, %v674
    %676 = vmatmul.f32.gmra.mxu0 %v264
    %v677 = vpop.f32.mrf.mxu0
    %v678 = vadd.f32 0.0, %v677
    %679 = vmatmul.f32.gmra.mxu0 %v265
    %v680 = vpop.f32.mrf.mxu0
    %v681 = vadd.f32 0.0, %v680
    %682 = vdwg.mxu0
    %v683 = vld [vmem:[#allocation2] sm:$0xff]
    %v685 = vrot.slane %v683, 1
    %v686 = vrot.slane %v683, 2
    %v687 = vrot.slane %v683, 3
    %v688 = vrot.slane %v683, 4
    %v689 = vrot.slane %v683, 5
    %v690 = vrot.slane %v683, 6
    %v691 = vrot.slane %v683, 7
    %v692 = vperm.slane %v683, 0
    %v693 = vperm.slane %v685, 0
    %v694 = vperm.slane %v686, 0
    %v695 = vperm.slane %v687, 0
    %v696 = vperm.slane %v688, 0
    %v697 = vperm.slane %v689, 0
    %v698 = vperm.slane %v690, 0
    %v699 = vperm.slane %v691, 0
    %v708 = vadd.f32 %v300, %v692
    %v709 = vadd.f32 %v303, %v692
    %v710 = vadd.f32 %v306, %v692
    %v711 = vadd.f32 %v309, %v692
    %v712 = vadd.f32 %v312, %v692
    %v713 = vadd.f32 %v315, %v692
    %v714 = vadd.f32 %v318, %v692
    %v715 = vadd.f32 %v321, %v692
    %v716 = vadd.f32 %v324, %v692
    %v717 = vadd.f32 %v327, %v692
    %v718 = vadd.f32 %v330, %v692
    %v719 = vadd.f32 %v333, %v692
    %v720 = vadd.f32 %v336, %v692
    %v721 = vadd.f32 %v339, %v692
    %v722 = vadd.f32 %v342, %v692
    %v723 = vadd.f32 %v345, %v692
    %v724 = vadd.f32 %v348, %v693
    %v725 = vadd.f32 %v351, %v693
    %v726 = vadd.f32 %v354, %v693
    %v727 = vadd.f32 %v357, %v693
    %v728 = vadd.f32 %v360, %v693
    %v729 = vadd.f32 %v363, %v693
    %v730 = vadd.f32 %v366, %v693
    %v731 = vadd.f32 %v369, %v693
    %v732 = vadd.f32 %v372, %v693
    %v733 = vadd.f32 %v375, %v693
    %v734 = vadd.f32 %v378, %v693
    %v735 = vadd.f32 %v381, %v693
    %v736 = vadd.f32 %v384, %v693
    %v737 = vadd.f32 %v387, %v693
    %v738 = vadd.f32 %v390, %v693
    %v739 = vadd.f32 %v393, %v693
    %v740 = vadd.f32 %v396, %v694
    %v741 = vadd.f32 %v399, %v694
    %v742 = vadd.f32 %v402, %v694
    %v743 = vadd.f32 %v405, %v694
    %v744 = vadd.f32 %v408, %v694
    %v745 = vadd.f32 %v411, %v694
    %v746 = vadd.f32 %v414, %v694
    %v747 = vadd.f32 %v417, %v694
    %v748 = vadd.f32 %v420, %v694
    %v749 = vadd.f32 %v423, %v694
    %v750 = vadd.f32 %v426, %v694
    %v751 = vadd.f32 %v429, %v694
    %v752 = vadd.f32 %v432, %v694
    %v753 = vadd.f32 %v435, %v694
    %v754 = vadd.f32 %v438, %v694
    %v755 = vadd.f32 %v441, %v694
    %v756 = vadd.f32 %v444, %v695
    %v757 = vadd.f32 %v447, %v695
    %v758 = vadd.f32 %v450, %v695
    %v759 = vadd.f32 %v453, %v695
    %v760 = vadd.f32 %v456, %v695
    %v761 = vadd.f32 %v459, %v695
    %v762 = vadd.f32 %v462, %v695
    %v763 = vadd.f32 %v465, %v695
    %v764 = vadd.f32 %v468, %v695
    %v765 = vadd.f32 %v471, %v695
    %v766 = vadd.f32 %v474, %v695
    %v767 = vadd.f32 %v477, %v695
    %v768 = vadd.f32 %v480, %v695
    %v769 = vadd.f32 %v483, %v695
    %v770 = vadd.f32 %v486, %v695
    %v771 = vadd.f32 %v489, %v695
    %v772 = vadd.f32 %v492, %v696
    %v773 = vadd.f32 %v495, %v696
    %v774 = vadd.f32 %v498, %v696
    %v775 = vadd.f32 %v501, %v696
    %v776 = vadd.f32 %v504, %v696
    %v777 = vadd.f32 %v507, %v696
    %v778 = vadd.f32 %v510, %v696
    %v779 = vadd.f32 %v513, %v696
    %v780 = vadd.f32 %v516, %v696
    %v781 = vadd.f32 %v519, %v696
    %v782 = vadd.f32 %v522, %v696
    %v783 = vadd.f32 %v525, %v696
    %v784 = vadd.f32 %v528, %v696
    %v785 = vadd.f32 %v531, %v696
    %v786 = vadd.f32 %v534, %v696
    %v787 = vadd.f32 %v537, %v696
    %v788 = vadd.f32 %v540, %v697
    %v789 = vadd.f32 %v543, %v697
    %v790 = vadd.f32 %v546, %v697
    %v791 = vadd.f32 %v549, %v697
    %v792 = vadd.f32 %v552, %v697
    %v793 = vadd.f32 %v555, %v697
    %v794 = vadd.f32 %v558, %v697
    %v795 = vadd.f32 %v561, %v697
    %v796 = vadd.f32 %v564, %v697
    %v797 = vadd.f32 %v567, %v697
    %v798 = vadd.f32 %v570, %v697
    %v799 = vadd.f32 %v573, %v697
    %v800 = vadd.f32 %v576, %v697
    %v801 = vadd.f32 %v579, %v697
    %v802 = vadd.f32 %v582, %v697
    %v803 = vadd.f32 %v585, %v697
    %v804 = vadd.f32 %v588, %v698
    %v805 = vadd.f32 %v591, %v698
    %v806 = vadd.f32 %v594, %v698
    %v807 = vadd.f32 %v597, %v698
    %v808 = vadd.f32 %v600, %v698
    %v809 = vadd.f32 %v603, %v698
    %v810 = vadd.f32 %v606, %v698
    %v811 = vadd.f32 %v609, %v698
    %v812 = vadd.f32 %v612, %v698
    %v813 = vadd.f32 %v615, %v698
    %v814 = vadd.f32 %v618, %v698
    %v815 = vadd.f32 %v621, %v698
    %v816 = vadd.f32 %v624, %v698
    %v817 = vadd.f32 %v627, %v698
    %v818 = vadd.f32 %v630, %v698
    %v819 = vadd.f32 %v633, %v698
    %v820 = vadd.f32 %v636, %v699
    %v821 = vadd.f32 %v639, %v699
    %v822 = vadd.f32 %v642, %v699
    %v823 = vadd.f32 %v645, %v699
    %v824 = vadd.f32 %v648, %v699
    %v825 = vadd.f32 %v651, %v699
    %v826 = vadd.f32 %v654, %v699
    %v827 = vadd.f32 %v657, %v699
    %v828 = vadd.f32 %v660, %v699
    %v829 = vadd.f32 %v663, %v699
    %v830 = vadd.f32 %v666, %v699
    %v831 = vadd.f32 %v669, %v699
    %v832 = vadd.f32 %v672, %v699
    %v833 = vadd.f32 %v675, %v699
    %v834 = vadd.f32 %v678, %v699
    %v835 = vadd.f32 %v681, %v699
    %v836 = vtanh.pop %v708
    %v837 = vtanh.pop %v709
    %v838 = vtanh.pop %v710
    %v839 = vtanh.pop %v711
    %v840 = vtanh.pop %v712
    %v841 = vtanh.pop %v713
    %v842 = vtanh.pop %v714
    %v843 = vtanh.pop %v715
    %v844 = vtanh.pop %v716
    %v845 = vtanh.pop %v717
    %v846 = vtanh.pop %v718
    %v847 = vtanh.pop %v719
    %v848 = vtanh.pop %v720
    %v849 = vtanh.pop %v721
    %v850 = vtanh.pop %v722
    %v851 = vtanh.pop %v723
    %v852 = vtanh.pop %v724
    %v853 = vtanh.pop %v725
    %v854 = vtanh.pop %v726
    %v855 = vtanh.pop %v727
    %v856 = vtanh.pop %v728
    %v857 = vtanh.pop %v729
    %v858 = vtanh.pop %v730
    %v859 = vtanh.pop %v731
    %v860 = vtanh.pop %v732
    %v861 = vtanh.pop %v733
    %v862 = vtanh.pop %v734
    %v863 = vtanh.pop %v735
    %v864 = vtanh.pop %v736
    %v865 = vtanh.pop %v737
    %v866 = vtanh.pop %v738
    %v867 = vtanh.pop %v739
    %v868 = vtanh.pop %v740
    %v869 = vtanh.pop %v741
    %v870 = vtanh.pop %v742
    %v871 = vtanh.pop %v743
    %v872 = vtanh.pop %v744
    %v873 = vtanh.pop %v745
    %v874 = vtanh.pop %v746
    %v875 = vtanh.pop %v747
    %v876 = vtanh.pop %v748
    %v877 = vtanh.pop %v749
    %v878 = vtanh.pop %v750
    %v879 = vtanh.pop %v751
    %v880 = vtanh.pop %v752
    %v881 = vtanh.pop %v753
    %v882 = vtanh.pop %v754
    %v883 = vtanh.pop %v755
    %v884 = vtanh.pop %v756
    %v885 = vtanh.pop %v757
    %v886 = vtanh.pop %v758
    %v887 = vtanh.pop %v759
    %v888 = vtanh.pop %v760
    %v889 = vtanh.pop %v761
    %v890 = vtanh.pop %v762
    %v891 = vtanh.pop %v763
    %v892 = vtanh.pop %v764
    %v893 = vtanh.pop %v765
    %v894 = vtanh.pop %v766
    %v895 = vtanh.pop %v767
    %v896 = vtanh.pop %v768
    %v897 = vtanh.pop %v769
    %v898 = vtanh.pop %v770
    %v899 = vtanh.pop %v771
    %v900 = vtanh.pop %v772
    %v901 = vtanh.pop %v773
    %v902 = vtanh.pop %v774
    %v903 = vtanh.pop %v775
    %v904 = vtanh.pop %v776
    %v905 = vtanh.pop %v777
    %v906 = vtanh.pop %v778
    %v907 = vtanh.pop %v779
    %v908 = vtanh.pop %v780
    %v909 = vtanh.pop %v781
    %v910 = vtanh.pop %v782
    %v911 = vtanh.pop %v783
    %v912 = vtanh.pop %v784
    %v913 = vtanh.pop %v785
    %v914 = vtanh.pop %v786
    %v915 = vtanh.pop %v787
    %v916 = vtanh.pop %v788
    %v917 = vtanh.pop %v789
    %v918 = vtanh.pop %v790
    %v919 = vtanh.pop %v791
    %v920 = vtanh.pop %v792
    %v921 = vtanh.pop %v793
    %v922 = vtanh.pop %v794
    %v923 = vtanh.pop %v795
    %v924 = vtanh.pop %v796
    %v925 = vtanh.pop %v797
    %v926 = vtanh.pop %v798
    %v927 = vtanh.pop %v799
    %v928 = vtanh.pop %v800
    %v929 = vtanh.pop %v801
    %v930 = vtanh.pop %v802
    %v931 = vtanh.pop %v803
    %v932 = vtanh.pop %v804
    %v933 = vtanh.pop %v805
    %v934 = vtanh.pop %v806
    %v935 = vtanh.pop %v807
    %v936 = vtanh.pop %v808
    %v937 = vtanh.pop %v809
    %v938 = vtanh.pop %v810
    %v939 = vtanh.pop %v811
    %v940 = vtanh.pop %v812
    %v941 = vtanh.pop %v813
    %v942 = vtanh.pop %v814
    %v943 = vtanh.pop %v815
    %v944 = vtanh.pop %v816
    %v945 = vtanh.pop %v817
    %v946 = vtanh.pop %v818
    %v947 = vtanh.pop %v819
    %v948 = vtanh.pop %v820
    %v949 = vtanh.pop %v821
    %v950 = vtanh.pop %v822
    %v951 = vtanh.pop %v823
    %v952 = vtanh.pop %v824
    %v953 = vtanh.pop %v825
    %v954 = vtanh.pop %v826
    %v955 = vtanh.pop %v827
    %v956 = vtanh.pop %v828
    %v957 = vtanh.pop %v829
    %v958 = vtanh.pop %v830
    %v959 = vtanh.pop %v831
    %v960 = vtanh.pop %v832
    %v961 = vtanh.pop %v833
    %v962 = vtanh.pop %v834
    %v963 = vtanh.pop %v835
    %v964 = vld [vmem:[%s5] sm:$0x1]
    %v966 = vperm.slane %v964, 0
    %v968 = vmul.f32 %v836, %v966
    %v969 = vmul.f32 %v837, %v966
    %v970 = vmul.f32 %v838, %v966
    %v971 = vmul.f32 %v839, %v966
    %v972 = vmul.f32 %v840, %v966
    %v973 = vmul.f32 %v841, %v966
    %v974 = vmul.f32 %v842, %v966
    %v975 = vmul.f32 %v843, %v966
    %v976 = vmul.f32 %v844, %v966
    %v977 = vmul.f32 %v845, %v966
    %v978 = vmul.f32 %v846, %v966
    %v979 = vmul.f32 %v847, %v966
    %v980 = vmul.f32 %v848, %v966
    %v981 = vmul.f32 %v849, %v966
    %v982 = vmul.f32 %v850, %v966
    %v983 = vmul.f32 %v851, %v966
    %v984 = vmul.f32 %v852, %v966
    %v985 = vmul.f32 %v853, %v966
    %v986 = vmul.f32 %v854, %v966
    %v987 = vmul.f32 %v855, %v966
    %v988 = vmul.f32 %v856, %v966
    %v989 = vmul.f32 %v857, %v966
    %v990 = vmul.f32 %v858, %v966
    %v991 = vmul.f32 %v859, %v966
    %v992 = vmul.f32 %v860, %v966
    %v993 = vmul.f32 %v861, %v966
    %v994 = vmul.f32 %v862, %v966
    %v995 = vmul.f32 %v863, %v966
    %v996 = vmul.f32 %v864, %v966
    %v997 = vmul.f32 %v865, %v966
    %v998 = vmul.f32 %v866, %v966
    %v999 = vmul.f32 %v867, %v966
    %v1000 = vmul.f32 %v868, %v966
    %v1001 = vmul.f32 %v869, %v966
    %v1002 = vmul.f32 %v870, %v966
    %v1003 = vmul.f32 %v871, %v966
    %v1004 = vmul.f32 %v872, %v966
    %v1005 = vmul.f32 %v873, %v966
    %v1006 = vmul.f32 %v874, %v966
    %v1007 = vmul.f32 %v875, %v966
    %v1008 = vmul.f32 %v876, %v966
    %v1009 = vmul.f32 %v877, %v966
    %v1010 = vmul.f32 %v878, %v966
    %v1011 = vmul.f32 %v879, %v966
    %v1012 = vmul.f32 %v880, %v966
    %v1013 = vmul.f32 %v881, %v966
    %v1014 = vmul.f32 %v882, %v966
    %v1015 = vmul.f32 %v883, %v966
    %v1016 = vmul.f32 %v884, %v966
    %v1017 = vmul.f32 %v885, %v966
    %v1018 = vmul.f32 %v886, %v966
    %v1019 = vmul.f32 %v887, %v966
    %v1020 = vmul.f32 %v888, %v966
    %v1021 = vmul.f32 %v889, %v966
    %v1022 = vmul.f32 %v890, %v966
    %v1023 = vmul.f32 %v891, %v966
    %v1024 = vmul.f32 %v892, %v966
    %v1025 = vmul.f32 %v893, %v966
    %v1026 = vmul.f32 %v894, %v966
    %v1027 = vmul.f32 %v895, %v966
    %v1028 = vmul.f32 %v896, %v966
    %v1029 = vmul.f32 %v897, %v966
    %v1030 = vmul.f32 %v898, %v966
    %v1031 = vmul.f32 %v899, %v966
    %v1032 = vmul.f32 %v900, %v966
    %v1033 = vmul.f32 %v901, %v966
    %v1034 = vmul.f32 %v902, %v966
    %v1035 = vmul.f32 %v903, %v966
    %v1036 = vmul.f32 %v904, %v966
    %v1037 = vmul.f32 %v905, %v966
    %v1038 = vmul.f32 %v906, %v966
    %v1039 = vmul.f32 %v907, %v966
    %v1040 = vmul.f32 %v908, %v966
    %v1041 = vmul.f32 %v909, %v966
    %v1042 = vmul.f32 %v910, %v966
    %v1043 = vmul.f32 %v911, %v966
    %v1044 = vmul.f32 %v912, %v966
    %v1045 = vmul.f32 %v913, %v966
    %v1046 = vmul.f32 %v914, %v966
    %v1047 = vmul.f32 %v915, %v966
    %v1048 = vmul.f32 %v916, %v966
    %v1049 = vmul.f32 %v917, %v966
    %v1050 = vmul.f32 %v918, %v966
    %v1051 = vmul.f32 %v919, %v966
    %v1052 = vmul.f32 %v920, %v966
    %v1053 = vmul.f32 %v921, %v966
    %v1054 = vmul.f32 %v922, %v966
    %v1055 = vmul.f32 %v923, %v966
    %v1056 = vmul.f32 %v924, %v966
    %v1057 = vmul.f32 %v925, %v966
    %v1058 = vmul.f32 %v926, %v966
    %v1059 = vmul.f32 %v927, %v966
    %v1060 = vmul.f32 %v928, %v966
    %v1061 = vmul.f32 %v929, %v966
    %v1062 = vmul.f32 %v930, %v966
    %v1063 = vmul.f32 %v931, %v966
    %v1064 = vmul.f32 %v932, %v966
    %v1065 = vmul.f32 %v933, %v966
    %v1066 = vmul.f32 %v934, %v966
    %v1067 = vmul.f32 %v935, %v966
    %v1068 = vmul.f32 %v936, %v966
    %v1069 = vmul.f32 %v937, %v966
    %v1070 = vmul.f32 %v938, %v966
    %v1071 = vmul.f32 %v939, %v966
    %v1072 = vmul.f32 %v940, %v966
    %v1073 = vmul.f32 %v941, %v966
    %v1074 = vmul.f32 %v942, %v966
    %v1075 = vmul.f32 %v943, %v966
    %v1076 = vmul.f32 %v944, %v966
    %v1077 = vmul.f32 %v945, %v966
    %v1078 = vmul.f32 %v946, %v966
    %v1079 = vmul.f32 %v947, %v966
    %v1080 = vmul.f32 %v948, %v966
    %v1081 = vmul.f32 %v949, %v966
    %v1082 = vmul.f32 %v950, %v966
    %v1083 = vmul.f32 %v951, %v966
    %v1084 = vmul.f32 %v952, %v966
    %v1085 = vmul.f32 %v953, %v966
    %v1086 = vmul.f32 %v954, %v966
    %v1087 = vmul.f32 %v955, %v966
    %v1088 = vmul.f32 %v956, %v966
    %v1089 = vmul.f32 %v957, %v966
    %v1090 = vmul.f32 %v958, %v966
    %v1091 = vmul.f32 %v959, %v966
    %v1092 = vmul.f32 %v960, %v966
    %v1093 = vmul.f32 %v961, %v966
    %v1094 = vmul.f32 %v962, %v966
    %v1095 = vmul.f32 %v963, %v966
    %1096 = vadd.xlane.f32.xlu0 %v968
    %v1097 = vpop.xlane.xlu0 %1096
    %1098 = vadd.xlane.f32.xlu0 %v969
    %v1099 = vpop.xlane.xlu0 %1098
    %1100 = vadd.xlane.f32.xlu0 %v970
    %v1101 = vpop.xlane.xlu0 %1100
    %1102 = vadd.xlane.f32.xlu0 %v971
    %v1103 = vpop.xlane.xlu0 %1102
    %1104 = vadd.xlane.f32.xlu0 %v972
    %v1105 = vpop.xlane.xlu0 %1104
    %1106 = vadd.xlane.f32.xlu0 %v973
    %v1107 = vpop.xlane.xlu0 %1106
    %1108 = vadd.xlane.f32.xlu0 %v974
    %v1109 = vpop.xlane.xlu0 %1108
    %1110 = vadd.xlane.f32.xlu0 %v975
    %v1111 = vpop.xlane.xlu0 %1110
    %1112 = vadd.xlane.f32.xlu0 %v976
    %v1113 = vpop.xlane.xlu0 %1112
    %1114 = vadd.xlane.f32.xlu0 %v977
    %v1115 = vpop.xlane.xlu0 %1114
    %1116 = vadd.xlane.f32.xlu0 %v978
    %v1117 = vpop.xlane.xlu0 %1116
    %1118 = vadd.xlane.f32.xlu0 %v979
    %v1119 = vpop.xlane.xlu0 %1118
    %1120 = vadd.xlane.f32.xlu0 %v980
    %v1121 = vpop.xlane.xlu0 %1120
    %1122 = vadd.xlane.f32.xlu0 %v981
    %v1123 = vpop.xlane.xlu0 %1122
    %1124 = vadd.xlane.f32.xlu0 %v982
    %v1125 = vpop.xlane.xlu0 %1124
    %1126 = vadd.xlane.f32.xlu0 %v983
    %v1127 = vpop.xlane.xlu0 %1126
    %1128 = vadd.xlane.f32.xlu0 %v984
    %v1129 = vpop.xlane.xlu0 %1128
    %1130 = vadd.xlane.f32.xlu0 %v985
    %v1131 = vpop.xlane.xlu0 %1130
    %1132 = vadd.xlane.f32.xlu0 %v986
    %v1133 = vpop.xlane.xlu0 %1132
    %1134 = vadd.xlane.f32.xlu0 %v987
    %v1135 = vpop.xlane.xlu0 %1134
    %1136 = vadd.xlane.f32.xlu0 %v988
    %v1137 = vpop.xlane.xlu0 %1136
    %1138 = vadd.xlane.f32.xlu0 %v989
    %v1139 = vpop.xlane.xlu0 %1138
    %1140 = vadd.xlane.f32.xlu0 %v990
    %v1141 = vpop.xlane.xlu0 %1140
    %1142 = vadd.xlane.f32.xlu0 %v991
    %v1143 = vpop.xlane.xlu0 %1142
    %1144 = vadd.xlane.f32.xlu0 %v992
    %v1145 = vpop.xlane.xlu0 %1144
    %1146 = vadd.xlane.f32.xlu0 %v993
    %v1147 = vpop.xlane.xlu0 %1146
    %1148 = vadd.xlane.f32.xlu0 %v994
    %v1149 = vpop.xlane.xlu0 %1148
    %1150 = vadd.xlane.f32.xlu0 %v995
    %v1151 = vpop.xlane.xlu0 %1150
    %1152 = vadd.xlane.f32.xlu0 %v996
    %v1153 = vpop.xlane.xlu0 %1152
    %1154 = vadd.xlane.f32.xlu0 %v997
    %v1155 = vpop.xlane.xlu0 %1154
    %1156 = vadd.xlane.f32.xlu0 %v998
    %v1157 = vpop.xlane.xlu0 %1156
    %1158 = vadd.xlane.f32.xlu0 %v999
    %v1159 = vpop.xlane.xlu0 %1158
    %1160 = vadd.xlane.f32.xlu0 %v1000
    %v1161 = vpop.xlane.xlu0 %1160
    %1162 = vadd.xlane.f32.xlu0 %v1001
    %v1163 = vpop.xlane.xlu0 %1162
    %1164 = vadd.xlane.f32.xlu0 %v1002
    %v1165 = vpop.xlane.xlu0 %1164
    %1166 = vadd.xlane.f32.xlu0 %v1003
    %v1167 = vpop.xlane.xlu0 %1166
    %1168 = vadd.xlane.f32.xlu0 %v1004
    %v1169 = vpop.xlane.xlu0 %1168
    %1170 = vadd.xlane.f32.xlu0 %v1005
    %v1171 = vpop.xlane.xlu0 %1170
    %1172 = vadd.xlane.f32.xlu0 %v1006
    %v1173 = vpop.xlane.xlu0 %1172
    %1174 = vadd.xlane.f32.xlu0 %v1007
    %v1175 = vpop.xlane.xlu0 %1174
    %1176 = vadd.xlane.f32.xlu0 %v1008
    %v1177 = vpop.xlane.xlu0 %1176
    %1178 = vadd.xlane.f32.xlu0 %v1009
    %v1179 = vpop.xlane.xlu0 %1178
    %1180 = vadd.xlane.f32.xlu0 %v1010
    %v1181 = vpop.xlane.xlu0 %1180
    %1182 = vadd.xlane.f32.xlu0 %v1011
    %v1183 = vpop.xlane.xlu0 %1182
    %1184 = vadd.xlane.f32.xlu0 %v1012
    %v1185 = vpop.xlane.xlu0 %1184
    %1186 = vadd.xlane.f32.xlu0 %v1013
    %v1187 = vpop.xlane.xlu0 %1186
    %1188 = vadd.xlane.f32.xlu0 %v1014
    %v1189 = vpop.xlane.xlu0 %1188
    %1190 = vadd.xlane.f32.xlu0 %v1015
    %v1191 = vpop.xlane.xlu0 %1190
    %1192 = vadd.xlane.f32.xlu0 %v1016
    %v1193 = vpop.xlane.xlu0 %1192
    %1194 = vadd.xlane.f32.xlu0 %v1017
    %v1195 = vpop.xlane.xlu0 %1194
    %1196 = vadd.xlane.f32.xlu0 %v1018
    %v1197 = vpop.xlane.xlu0 %1196
    %1198 = vadd.xlane.f32.xlu0 %v1019
    %v1199 = vpop.xlane.xlu0 %1198
    %1200 = vadd.xlane.f32.xlu0 %v1020
    %v1201 = vpop.xlane.xlu0 %1200
    %1202 = vadd.xlane.f32.xlu0 %v1021
    %v1203 = vpop.xlane.xlu0 %1202
    %1204 = vadd.xlane.f32.xlu0 %v1022
    %v1205 = vpop.xlane.xlu0 %1204
    %1206 = vadd.xlane.f32.xlu0 %v1023
    %v1207 = vpop.xlane.xlu0 %1206
    %1208 = vadd.xlane.f32.xlu0 %v1024
    %v1209 = vpop.xlane.xlu0 %1208
    %1210 = vadd.xlane.f32.xlu0 %v1025
    %v1211 = vpop.xlane.xlu0 %1210
    %1212 = vadd.xlane.f32.xlu0 %v1026
    %v1213 = vpop.xlane.xlu0 %1212
    %1214 = vadd.xlane.f32.xlu0 %v1027
    %v1215 = vpop.xlane.xlu0 %1214
    %1216 = vadd.xlane.f32.xlu0 %v1028
    %v1217 = vpop.xlane.xlu0 %1216
    %1218 = vadd.xlane.f32.xlu0 %v1029
    %v1219 = vpop.xlane.xlu0 %1218
    %1220 = vadd.xlane.f32.xlu0 %v1030
    %v1221 = vpop.xlane.xlu0 %1220
    %1222 = vadd.xlane.f32.xlu0 %v1031
    %v1223 = vpop.xlane.xlu0 %1222
    %1224 = vadd.xlane.f32.xlu0 %v1032
    %v1225 = vpop.xlane.xlu0 %1224
    %1226 = vadd.xlane.f32.xlu0 %v1033
    %v1227 = vpop.xlane.xlu0 %1226
    %1228 = vadd.xlane.f32.xlu0 %v1034
    %v1229 = vpop.xlane.xlu0 %1228
    %1230 = vadd.xlane.f32.xlu0 %v1035
    %v1231 = vpop.xlane.xlu0 %1230
    %1232 = vadd.xlane.f32.xlu0 %v1036
    %v1233 = vpop.xlane.xlu0 %1232
    %1234 = vadd.xlane.f32.xlu0 %v1037
    %v1235 = vpop.xlane.xlu0 %1234
    %1236 = vadd.xlane.f32.xlu0 %v1038
    %v1237 = vpop.xlane.xlu0 %1236
    %1238 = vadd.xlane.f32.xlu0 %v1039
    %v1239 = vpop.xlane.xlu0 %1238
    %1240 = vadd.xlane.f32.xlu0 %v1040
    %v1241 = vpop.xlane.xlu0 %1240
    %1242 = vadd.xlane.f32.xlu0 %v1041
    %v1243 = vpop.xlane.xlu0 %1242
    %1244 = vadd.xlane.f32.xlu0 %v1042
    %v1245 = vpop.xlane.xlu0 %1244
    %1246 = vadd.xlane.f32.xlu0 %v1043
    %v1247 = vpop.xlane.xlu0 %1246
    %1248 = vadd.xlane.f32.xlu0 %v1044
    %v1249 = vpop.xlane.xlu0 %1248
    %1250 = vadd.xlane.f32.xlu0 %v1045
    %v1251 = vpop.xlane.xlu0 %1250
    %1252 = vadd.xlane.f32.xlu0 %v1046
    %v1253 = vpop.xlane.xlu0 %1252
    %1254 = vadd.xlane.f32.xlu0 %v1047
    %v1255 = vpop.xlane.xlu0 %1254
    %1256 = vadd.xlane.f32.xlu0 %v1048
    %v1257 = vpop.xlane.xlu0 %1256
    %1258 = vadd.xlane.f32.xlu0 %v1049
    %v1259 = vpop.xlane.xlu0 %1258
    %1260 = vadd.xlane.f32.xlu0 %v1050
    %v1261 = vpop.xlane.xlu0 %1260
    %1262 = vadd.xlane.f32.xlu0 %v1051
    %v1263 = vpop.xlane.xlu0 %1262
    %1264 = vadd.xlane.f32.xlu0 %v1052
    %v1265 = vpop.xlane.xlu0 %1264
    %1266 = vadd.xlane.f32.xlu0 %v1053
    %v1267 = vpop.xlane.xlu0 %1266
    %1268 = vadd.xlane.f32.xlu0 %v1054
    %v1269 = vpop.xlane.xlu0 %1268
    %1270 = vadd.xlane.f32.xlu0 %v1055
    %v1271 = vpop.xlane.xlu0 %1270
    %1272 = vadd.xlane.f32.xlu0 %v1056
    %v1273 = vpop.xlane.xlu0 %1272
    %1274 = vadd.xlane.f32.xlu0 %v1057
    %v1275 = vpop.xlane.xlu0 %1274
    %1276 = vadd.xlane.f32.xlu0 %v1058
    %v1277 = vpop.xlane.xlu0 %1276
    %1278 = vadd.xlane.f32.xlu0 %v1059
    %v1279 = vpop.xlane.xlu0 %1278
    %1280 = vadd.xlane.f32.xlu0 %v1060
    %v1281 = vpop.xlane.xlu0 %1280
    %1282 = vadd.xlane.f32.xlu0 %v1061
    %v1283 = vpop.xlane.xlu0 %1282
    %1284 = vadd.xlane.f32.xlu0 %v1062
    %v1285 = vpop.xlane.xlu0 %1284
    %1286 = vadd.xlane.f32.xlu0 %v1063
    %v1287 = vpop.xlane.xlu0 %1286
    %1288 = vadd.xlane.f32.xlu0 %v1064
    %v1289 = vpop.xlane.xlu0 %1288
    %1290 = vadd.xlane.f32.xlu0 %v1065
    %v1291 = vpop.xlane.xlu0 %1290
    %1292 = vadd.xlane.f32.xlu0 %v1066
    %v1293 = vpop.xlane.xlu0 %1292
    %1294 = vadd.xlane.f32.xlu0 %v1067
    %v1295 = vpop.xlane.xlu0 %1294
    %1296 = vadd.xlane.f32.xlu0 %v1068
    %v1297 = vpop.xlane.xlu0 %1296
    %1298 = vadd.xlane.f32.xlu0 %v1069
    %v1299 = vpop.xlane.xlu0 %1298
    %1300 = vadd.xlane.f32.xlu0 %v1070
    %v1301 = vpop.xlane.xlu0 %1300
    %1302 = vadd.xlane.f32.xlu0 %v1071
    %v1303 = vpop.xlane.xlu0 %1302
    %1304 = vadd.xlane.f32.xlu0 %v1072
    %v1305 = vpop.xlane.xlu0 %1304
    %1306 = vadd.xlane.f32.xlu0 %v1073
    %v1307 = vpop.xlane.xlu0 %1306
    %1308 = vadd.xlane.f32.xlu0 %v1074
    %v1309 = vpop.xlane.xlu0 %1308
    %1310 = vadd.xlane.f32.xlu0 %v1075
    %v1311 = vpop.xlane.xlu0 %1310
    %1312 = vadd.xlane.f32.xlu0 %v1076
    %v1313 = vpop.xlane.xlu0 %1312
    %1314 = vadd.xlane.f32.xlu0 %v1077
    %v1315 = vpop.xlane.xlu0 %1314
    %1316 = vadd.xlane.f32.xlu0 %v1078
    %v1317 = vpop.xlane.xlu0 %1316
    %1318 = vadd.xlane.f32.xlu0 %v1079
    %v1319 = vpop.xlane.xlu0 %1318
    %1320 = vadd.xlane.f32.xlu0 %v1080
    %v1321 = vpop.xlane.xlu0 %1320
    %1322 = vadd.xlane.f32.xlu0 %v1081
    %v1323 = vpop.xlane.xlu0 %1322
    %1324 = vadd.xlane.f32.xlu0 %v1082
    %v1325 = vpop.xlane.xlu0 %1324
    %1326 = vadd.xlane.f32.xlu0 %v1083
    %v1327 = vpop.xlane.xlu0 %1326
    %1328 = vadd.xlane.f32.xlu0 %v1084
    %v1329 = vpop.xlane.xlu0 %1328
    %1330 = vadd.xlane.f32.xlu0 %v1085
    %v1331 = vpop.xlane.xlu0 %1330
    %1332 = vadd.xlane.f32.xlu0 %v1086
    %v1333 = vpop.xlane.xlu0 %1332
    %1334 = vadd.xlane.f32.xlu0 %v1087
    %v1335 = vpop.xlane.xlu0 %1334
    %1336 = vadd.xlane.f32.xlu0 %v1088
    %v1337 = vpop.xlane.xlu0 %1336
    %1338 = vadd.xlane.f32.xlu0 %v1089
    %v1339 = vpop.xlane.xlu0 %1338
    %1340 = vadd.xlane.f32.xlu0 %v1090
    %v1341 = vpop.xlane.xlu0 %1340
    %1342 = vadd.xlane.f32.xlu0 %v1091
    %v1343 = vpop.xlane.xlu0 %1342
    %1344 = vadd.xlane.f32.xlu0 %v1092
    %v1345 = vpop.xlane.xlu0 %1344
    %1346 = vadd.xlane.f32.xlu0 %v1093
    %v1347 = vpop.xlane.xlu0 %1346
    %1348 = vadd.xlane.f32.xlu0 %v1094
    %v1349 = vpop.xlane.xlu0 %1348
    %1350 = vadd.xlane.f32.xlu0 %v1095
    %v1351 = vpop.xlane.xlu0 %1350
    %s1352 = smul.u32 0, 128
    %v1353 = vlaneseq
    %v1354 = vand.u32 %v1353, 127
    %v1355 = vstv %s1352
    %v1356 = vadd.s32 %v1355, %v1354
    %vm1357 = vcmp.lt.s32.totalorder %v1356, 8
    %v1486 = vperm.slane %v1097, %v1354
    %v1487 = vadd.s32 %v1354, 4294967288
    %v1488 = vperm.slane %v1099, %v1487
    %vm1489 = vcmask 130112
    %v1490 = vsel %vm1489, %v1488, %v1486
    %v1491 = vadd.s32 %v1354, 4294967280
    %v1492 = vperm.slane %v1101, %v1491
    %vm1493 = vcmask 195712
    %v1494 = vsel %vm1493, %v1492, %v1490
    %v1495 = vadd.s32 %v1354, 4294967272
    %v1496 = vperm.slane %v1103, %v1495
    %vm1497 = vcmask 261312
    %v1498 = vsel %vm1497, %v1496, %v1494
    %v1499 = vadd.s32 %v1354, 4294967264
    %v1500 = vperm.slane %v1105, %v1499
    %vm1501 = vcmask 326912
    %v1502 = vsel %vm1501, %v1500, %v1498
    %v1503 = vadd.s32 %v1354, 4294967256
    %v1504 = vperm.slane %v1107, %v1503
    %vm1505 = vcmask 392512
    %v1506 = vsel %vm1505, %v1504, %v1502
    %v1507 = vadd.s32 %v1354, 4294967248
    %v1508 = vperm.slane %v1109, %v1507
    %vm1509 = vcmask 458112
    %v1510 = vsel %vm1509, %v1508, %v1506
    %v1511 = vadd.s32 %v1354, 4294967240
    %v1512 = vperm.slane %v1111, %v1511
    %vm1513 = vcmask 523712
    %v1514 = vsel %vm1513, %v1512, %v1510
    %v1515 = vadd.s32 %v1354, 4294967232
    %v1516 = vperm.slane %v1113, %v1515
    %vm1517 = vcmask 589312
    %v1518 = vsel %vm1517, %v1516, %v1514
    %v1519 = vadd.s32 %v1354, 4294967224
    %v1520 = vperm.slane %v1115, %v1519
    %vm1521 = vcmask 654912
    %v1522 = vsel %vm1521, %v1520, %v1518
    %v1523 = vadd.s32 %v1354, 4294967216
    %v1524 = vperm.slane %v1117, %v1523
    %vm1525 = vcmask 720512
    %v1526 = vsel %vm1525, %v1524, %v1522
    %v1527 = vadd.s32 %v1354, 4294967208
    %v1528 = vperm.slane %v1119, %v1527
    %vm1529 = vcmask 786112
    %v1530 = vsel %vm1529, %v1528, %v1526
    %v1531 = vadd.s32 %v1354, 4294967200
    %v1532 = vperm.slane %v1121, %v1531
    %vm1533 = vcmask 851712
    %v1534 = vsel %vm1533, %v1532, %v1530
    %v1535 = vadd.s32 %v1354, 4294967192
    %v1536 = vperm.slane %v1123, %v1535
    %vm1537 = vcmask 917312
    %v1538 = vsel %vm1537, %v1536, %v1534
    %v1539 = vadd.s32 %v1354, 4294967184
    %v1540 = vperm.slane %v1125, %v1539
    %vm1541 = vcmask 982912
    %v1542 = vsel %vm1541, %v1540, %v1538
    %v1543 = vadd.s32 %v1354, 4294967176
    %v1544 = vperm.slane %v1127, %v1543
    %vm1545 = vcmask 1048512
    %v1546 = vsel %vm1545, %v1544, %v1542
    %v1547 = vperm.slane %v1129, %v1354
    %v1548 = vperm.slane %v1131, %v1487
    %v1549 = vsel %vm1489, %v1548, %v1547
    %v1550 = vperm.slane %v1133, %v1491
    %v1551 = vsel %vm1493, %v1550, %v1549
    %v1552 = vperm.slane %v1135, %v1495
    %v1553 = vsel %vm1497, %v1552, %v1551
    %v1554 = vperm.slane %v1137, %v1499
    %v1555 = vsel %vm1501, %v1554, %v1553
    %v1556 = vperm.slane %v1139, %v1503
    %v1557 = vsel %vm1505, %v1556, %v1555
    %v1558 = vperm.slane %v1141, %v1507
    %v1559 = vsel %vm1509, %v1558, %v1557
    %v1560 = vperm.slane %v1143, %v1511
    %v1561 = vsel %vm1513, %v1560, %v1559
    %v1562 = vperm.slane %v1145, %v1515
    %v1563 = vsel %vm1517, %v1562, %v1561
    %v1564 = vperm.slane %v1147, %v1519
    %v1565 = vsel %vm1521, %v1564, %v1563
    %v1566 = vperm.slane %v1149, %v1523
    %v1567 = vsel %vm1525, %v1566, %v1565
    %v1568 = vperm.slane %v1151, %v1527
    %v1569 = vsel %vm1529, %v1568, %v1567
    %v1570 = vperm.slane %v1153, %v1531
    %v1571 = vsel %vm1533, %v1570, %v1569
    %v1572 = vperm.slane %v1155, %v1535
    %v1573 = vsel %vm1537, %v1572, %v1571
    %v1574 = vperm.slane %v1157, %v1539
    %v1575 = vsel %vm1541, %v1574, %v1573
    %v1576 = vperm.slane %v1159, %v1543
    %v1577 = vsel %vm1545, %v1576, %v1575
    %v1578 = vperm.slane %v1161, %v1354
    %v1579 = vperm.slane %v1163, %v1487
    %v1580 = vsel %vm1489, %v1579, %v1578
    %v1581 = vperm.slane %v1165, %v1491
    %v1582 = vsel %vm1493, %v1581, %v1580
    %v1583 = vperm.slane %v1167, %v1495
    %v1584 = vsel %vm1497, %v1583, %v1582
    %v1585 = vperm.slane %v1169, %v1499
    %v1586 = vsel %vm1501, %v1585, %v1584
    %v1587 = vperm.slane %v1171, %v1503
    %v1588 = vsel %vm1505, %v1587, %v1586
    %v1589 = vperm.slane %v1173, %v1507
    %v1590 = vsel %vm1509, %v1589, %v1588
    %v1591 = vperm.slane %v1175, %v1511
    %v1592 = vsel %vm1513, %v1591, %v1590
    %v1593 = vperm.slane %v1177, %v1515
    %v1594 = vsel %vm1517, %v1593, %v1592
    %v1595 = vperm.slane %v1179, %v1519
    %v1596 = vsel %vm1521, %v1595, %v1594
    %v1597 = vperm.slane %v1181, %v1523
    %v1598 = vsel %vm1525, %v1597, %v1596
    %v1599 = vperm.slane %v1183, %v1527
    %v1600 = vsel %vm1529, %v1599, %v1598
    %v1601 = vperm.slane %v1185, %v1531
    %v1602 = vsel %vm1533, %v1601, %v1600
    %v1603 = vperm.slane %v1187, %v1535
    %v1604 = vsel %vm1537, %v1603, %v1602
    %v1605 = vperm.slane %v1189, %v1539
    %v1606 = vsel %vm1541, %v1605, %v1604
    %v1607 = vperm.slane %v1191, %v1543
    %v1608 = vsel %vm1545, %v1607, %v1606
    %v1609 = vperm.slane %v1193, %v1354
    %v1610 = vperm.slane %v1195, %v1487
    %v1611 = vsel %vm1489, %v1610, %v1609
    %v1612 = vperm.slane %v1197, %v1491
    %v1613 = vsel %vm1493, %v1612, %v1611
    %v1614 = vperm.slane %v1199, %v1495
    %v1615 = vsel %vm1497, %v1614, %v1613
    %v1616 = vperm.slane %v1201, %v1499
    %v1617 = vsel %vm1501, %v1616, %v1615
    %v1618 = vperm.slane %v1203, %v1503
    %v1619 = vsel %vm1505, %v1618, %v1617
    %v1620 = vperm.slane %v1205, %v1507
    %v1621 = vsel %vm1509, %v1620, %v1619
    %v1622 = vperm.slane %v1207, %v1511
    %v1623 = vsel %vm1513, %v1622, %v1621
    %v1624 = vperm.slane %v1209, %v1515
    %v1625 = vsel %vm1517, %v1624, %v1623
    %v1626 = vperm.slane %v1211, %v1519
    %v1627 = vsel %vm1521, %v1626, %v1625
    %v1628 = vperm.slane %v1213, %v1523
    %v1629 = vsel %vm1525, %v1628, %v1627
    %v1630 = vperm.slane %v1215, %v1527
    %v1631 = vsel %vm1529, %v1630, %v1629
    %v1632 = vperm.slane %v1217, %v1531
    %v1633 = vsel %vm1533, %v1632, %v1631
    %v1634 = vperm.slane %v1219, %v1535
    %v1635 = vsel %vm1537, %v1634, %v1633
    %v1636 = vperm.slane %v1221, %v1539
    %v1637 = vsel %vm1541, %v1636, %v1635
    %v1638 = vperm.slane %v1223, %v1543
    %v1639 = vsel %vm1545, %v1638, %v1637
    %v1640 = vperm.slane %v1225, %v1354
    %v1641 = vperm.slane %v1227, %v1487
    %v1642 = vsel %vm1489, %v1641, %v1640
    %v1643 = vperm.slane %v1229, %v1491
    %v1644 = vsel %vm1493, %v1643, %v1642
    %v1645 = vperm.slane %v1231, %v1495
    %v1646 = vsel %vm1497, %v1645, %v1644
    %v1647 = vperm.slane %v1233, %v1499
    %v1648 = vsel %vm1501, %v1647, %v1646
    %v1649 = vperm.slane %v1235, %v1503
    %v1650 = vsel %vm1505, %v1649, %v1648
    %v1651 = vperm.slane %v1237, %v1507
    %v1652 = vsel %vm1509, %v1651, %v1650
    %v1653 = vperm.slane %v1239, %v1511
    %v1654 = vsel %vm1513, %v1653, %v1652
    %v1655 = vperm.slane %v1241, %v1515
    %v1656 = vsel %vm1517, %v1655, %v1654
    %v1657 = vperm.slane %v1243, %v1519
    %v1658 = vsel %vm1521, %v1657, %v1656
    %v1659 = vperm.slane %v1245, %v1523
    %v1660 = vsel %vm1525, %v1659, %v1658
    %v1661 = vperm.slane %v1247, %v1527
    %v1662 = vsel %vm1529, %v1661, %v1660
    %v1663 = vperm.slane %v1249, %v1531
    %v1664 = vsel %vm1533, %v1663, %v1662
    %v1665 = vperm.slane %v1251, %v1535
    %v1666 = vsel %vm1537, %v1665, %v1664
    %v1667 = vperm.slane %v1253, %v1539
    %v1668 = vsel %vm1541, %v1667, %v1666
    %v1669 = vperm.slane %v1255, %v1543
    %v1670 = vsel %vm1545, %v1669, %v1668
    %v1671 = vperm.slane %v1257, %v1354
    %v1672 = vperm.slane %v1259, %v1487
    %v1673 = vsel %vm1489, %v1672, %v1671
    %v1674 = vperm.slane %v1261, %v1491
    %v1675 = vsel %vm1493, %v1674, %v1673
    %v1676 = vperm.slane %v1263, %v1495
    %v1677 = vsel %vm1497, %v1676, %v1675
    %v1678 = vperm.slane %v1265, %v1499
    %v1679 = vsel %vm1501, %v1678, %v1677
    %v1680 = vperm.slane %v1267, %v1503
    %v1681 = vsel %vm1505, %v1680, %v1679
    %v1682 = vperm.slane %v1269, %v1507
    %v1683 = vsel %vm1509, %v1682, %v1681
    %v1684 = vperm.slane %v1271, %v1511
    %v1685 = vsel %vm1513, %v1684, %v1683
    %v1686 = vperm.slane %v1273, %v1515
    %v1687 = vsel %vm1517, %v1686, %v1685
    %v1688 = vperm.slane %v1275, %v1519
    %v1689 = vsel %vm1521, %v1688, %v1687
    %v1690 = vperm.slane %v1277, %v1523
    %v1691 = vsel %vm1525, %v1690, %v1689
    %v1692 = vperm.slane %v1279, %v1527
    %v1693 = vsel %vm1529, %v1692, %v1691
    %v1694 = vperm.slane %v1281, %v1531
    %v1695 = vsel %vm1533, %v1694, %v1693
    %v1696 = vperm.slane %v1283, %v1535
    %v1697 = vsel %vm1537, %v1696, %v1695
    %v1698 = vperm.slane %v1285, %v1539
    %v1699 = vsel %vm1541, %v1698, %v1697
    %v1700 = vperm.slane %v1287, %v1543
    %v1701 = vsel %vm1545, %v1700, %v1699
    %v1702 = vperm.slane %v1289, %v1354
    %v1703 = vperm.slane %v1291, %v1487
    %v1704 = vsel %vm1489, %v1703, %v1702
    %v1705 = vperm.slane %v1293, %v1491
    %v1706 = vsel %vm1493, %v1705, %v1704
    %v1707 = vperm.slane %v1295, %v1495
    %v1708 = vsel %vm1497, %v1707, %v1706
    %v1709 = vperm.slane %v1297, %v1499
    %v1710 = vsel %vm1501, %v1709, %v1708
    %v1711 = vperm.slane %v1299, %v1503
    %v1712 = vsel %vm1505, %v1711, %v1710
    %v1713 = vperm.slane %v1301, %v1507
    %v1714 = vsel %vm1509, %v1713, %v1712
    %v1715 = vperm.slane %v1303, %v1511
    %v1716 = vsel %vm1513, %v1715, %v1714
    %v1717 = vperm.slane %v1305, %v1515
    %v1718 = vsel %vm1517, %v1717, %v1716
    %v1719 = vperm.slane %v1307, %v1519
    %v1720 = vsel %vm1521, %v1719, %v1718
    %v1721 = vperm.slane %v1309, %v1523
    %v1722 = vsel %vm1525, %v1721, %v1720
    %v1723 = vperm.slane %v1311, %v1527
    %v1724 = vsel %vm1529, %v1723, %v1722
    %v1725 = vperm.slane %v1313, %v1531
    %v1726 = vsel %vm1533, %v1725, %v1724
    %v1727 = vperm.slane %v1315, %v1535
    %v1728 = vsel %vm1537, %v1727, %v1726
    %v1729 = vperm.slane %v1317, %v1539
    %v1730 = vsel %vm1541, %v1729, %v1728
    %v1731 = vperm.slane %v1319, %v1543
    %v1732 = vsel %vm1545, %v1731, %v1730
    %v1733 = vperm.slane %v1321, %v1354
    %v1734 = vperm.slane %v1323, %v1487
    %v1735 = vsel %vm1489, %v1734, %v1733
    %v1736 = vperm.slane %v1325, %v1491
    %v1737 = vsel %vm1493, %v1736, %v1735
    %v1738 = vperm.slane %v1327, %v1495
    %v1739 = vsel %vm1497, %v1738, %v1737
    %v1740 = vperm.slane %v1329, %v1499
    %v1741 = vsel %vm1501, %v1740, %v1739
    %v1742 = vperm.slane %v1331, %v1503
    %v1743 = vsel %vm1505, %v1742, %v1741
    %v1744 = vperm.slane %v1333, %v1507
    %v1745 = vsel %vm1509, %v1744, %v1743
    %v1746 = vperm.slane %v1335, %v1511
    %v1747 = vsel %vm1513, %v1746, %v1745
    %v1748 = vperm.slane %v1337, %v1515
    %v1749 = vsel %vm1517, %v1748, %v1747
    %v1750 = vperm.slane %v1339, %v1519
    %v1751 = vsel %vm1521, %v1750, %v1749
    %v1752 = vperm.slane %v1341, %v1523
    %v1753 = vsel %vm1525, %v1752, %v1751
    %v1754 = vperm.slane %v1343, %v1527
    %v1755 = vsel %vm1529, %v1754, %v1753
    %v1756 = vperm.slane %v1345, %v1531
    %v1757 = vsel %vm1533, %v1756, %v1755
    %v1758 = vperm.slane %v1347, %v1535
    %v1759 = vsel %vm1537, %v1758, %v1757
    %v1760 = vperm.slane %v1349, %v1539
    %v1761 = vsel %vm1541, %v1760, %v1759
    %v1762 = vperm.slane %v1351, %v1543
    %v1763 = vsel %vm1545, %v1762, %v1761
    %vm1764 = vcmask 1041409
    %v1765 = vsel %vm1764, %v1577, %v1546
    %vm1766 = vcmask 1042434
    %v1767 = vsel %vm1766, %v1608, %v1765
    %vm1768 = vcmask 1043459
    %v1769 = vsel %vm1768, %v1639, %v1767
    %vm1770 = vcmask 1044484
    %v1771 = vsel %vm1770, %v1670, %v1769
    %vm1772 = vcmask 1045509
    %v1773 = vsel %vm1772, %v1701, %v1771
    %vm1774 = vcmask 1046534
    %v1775 = vsel %vm1774, %v1732, %v1773
    %vm1776 = vcmask 1047559
    %v1777 = vsel %vm1776, %v1763, %v1775
    %v1779 = vsel %vm1357, %v1777, -1e+30
    %1780 = vmax.xlane.f32.xlu0 %v1779
    %v1781 = vpop.xlane.xlu0 %1780
    %v1782 = vld [vmem:[#allocation3] sm:$0xff]
    %v1783 = vmax.f32 %v1782, %v1781
    %v1784 = vsub.f32 %v1782, %v1783
    %v1785 = vmul.f32 %v1784, 1.442695
    %v1786 = vpow.pop %v1785
    %1788 = vset.pattern.permute.xlu0 0
    %1789 = vperm.xlu0 %1788, %v1783
    %v1790 = vpop.permute.xlu0 %1789
    %v1792 = vsub.f32 %v1779, %v1790
    %v1793 = vmul.f32 %v1792, 1.442695
    %v1794 = vpow.pop %v1793
    %v1795 = vld [vmem:[#allocation4] sm:$0xff]
    %v1796 = vmul.f32 %v1786, %v1795
    %1797 = vadd.xlane.f32.xlu0 %v1794
    %v1798 = vpop.xlane.xlu0 %1797
    %v1799 = vadd.f32 %v1796, %v1798
    %vm1800 = vcmask 7168
    %1801 = vst.msk [vmem:[#allocation4] sm:$0xff] %vm1800, %v1799
    %v1802 = vperm.slane %v1794, 0
    %v1803 = vlaneseq
    %v1804 = vshrl.u32 %v1803, 7
    %1806 = vset.pattern.permute.xlu0 %v1804
    %1807 = vperm.xlu0 %1806, %v1802
    %v1808 = vpop.permute.xlu0 %1807
    %v1809 = vlaneseq
    %v1810 = vshrl.u32 %v1809, 7
    %v1811 = vadd.s32 %v1810, 8
    %1812 = vset.pattern.permute.xlu0 %v1811
    %1813 = vperm.xlu0 %1812, %v1802
    %v1814 = vpop.permute.xlu0 %1813
    %v1815 = vlaneseq
    %v1816 = vshrl.u32 %v1815, 7
    %v1817 = vadd.s32 %v1816, 16
    %1818 = vset.pattern.permute.xlu0 %v1817
    %1819 = vperm.xlu0 %1818, %v1802
    %v1820 = vpop.permute.xlu0 %1819
    %v1821 = vlaneseq
    %v1822 = vshrl.u32 %v1821, 7
    %v1823 = vadd.s32 %v1822, 24
    %1824 = vset.pattern.permute.xlu0 %v1823
    %1825 = vperm.xlu0 %1824, %v1802
    %v1826 = vpop.permute.xlu0 %1825
    %v1827 = vlaneseq
    %v1828 = vshrl.u32 %v1827, 7
    %v1829 = vadd.s32 %v1828, 32
    %1830 = vset.pattern.permute.xlu0 %v1829
    %1831 = vperm.xlu0 %1830, %v1802
    %v1832 = vpop.permute.xlu0 %1831
    %v1833 = vlaneseq
    %v1834 = vshrl.u32 %v1833, 7
    %v1835 = vadd.s32 %v1834, 40
    %1836 = vset.pattern.permute.xlu0 %v1835
    %1837 = vperm.xlu0 %1836, %v1802
    %v1838 = vpop.permute.xlu0 %1837
    %v1839 = vlaneseq
    %v1840 = vshrl.u32 %v1839, 7
    %v1841 = vadd.s32 %v1840, 48
    %1842 = vset.pattern.permute.xlu0 %v1841
    %1843 = vperm.xlu0 %1842, %v1802
    %v1844 = vpop.permute.xlu0 %1843
    %v1845 = vlaneseq
    %v1846 = vshrl.u32 %v1845, 7
    %v1847 = vadd.s32 %v1846, 56
    %1848 = vset.pattern.permute.xlu0 %v1847
    %1849 = vperm.xlu0 %1848, %v1802
    %v1850 = vpop.permute.xlu0 %1849
    %v1851 = vlaneseq
    %v1852 = vshrl.u32 %v1851, 7
    %v1853 = vadd.s32 %v1852, 64
    %1854 = vset.pattern.permute.xlu0 %v1853
    %1855 = vperm.xlu0 %1854, %v1802
    %v1856 = vpop.permute.xlu0 %1855
    %v1857 = vlaneseq
    %v1858 = vshrl.u32 %v1857, 7
    %v1859 = vadd.s32 %v1858, 72
    %1860 = vset.pattern.permute.xlu0 %v1859
    %1861 = vperm.xlu0 %1860, %v1802
    %v1862 = vpop.permute.xlu0 %1861
    %v1863 = vlaneseq
    %v1864 = vshrl.u32 %v1863, 7
    %v1865 = vadd.s32 %v1864, 80
    %1866 = vset.pattern.permute.xlu0 %v1865
    %1867 = vperm.xlu0 %1866, %v1802
    %v1868 = vpop.permute.xlu0 %1867
    %v1869 = vlaneseq
    %v1870 = vshrl.u32 %v1869, 7
    %v1871 = vadd.s32 %v1870, 88
    %1872 = vset.pattern.permute.xlu0 %v1871
    %1873 = vperm.xlu0 %1872, %v1802
    %v1874 = vpop.permute.xlu0 %1873
    %v1875 = vlaneseq
    %v1876 = vshrl.u32 %v1875, 7
    %v1877 = vadd.s32 %v1876, 96
    %1878 = vset.pattern.permute.xlu0 %v1877
    %1879 = vperm.xlu0 %1878, %v1802
    %v1880 = vpop.permute.xlu0 %1879
    %v1881 = vlaneseq
    %v1882 = vshrl.u32 %v1881, 7
    %v1883 = vadd.s32 %v1882, 104
    %1884 = vset.pattern.permute.xlu0 %v1883
    %1885 = vperm.xlu0 %1884, %v1802
    %v1886 = vpop.permute.xlu0 %1885
    %v1887 = vlaneseq
    %v1888 = vshrl.u32 %v1887, 7
    %v1889 = vadd.s32 %v1888, 112
    %1890 = vset.pattern.permute.xlu0 %v1889
    %1891 = vperm.xlu0 %1890, %v1802
    %v1892 = vpop.permute.xlu0 %1891
    %v1893 = vlaneseq
    %v1894 = vshrl.u32 %v1893, 7
    %v1895 = vadd.s32 %v1894, 120
    %1896 = vset.pattern.permute.xlu0 %v1895
    %1897 = vperm.xlu0 %1896, %v1802
    %v1898 = vpop.permute.xlu0 %1897
    %v1899 = vperm.slane %v1794, 1
    %v1900 = vlaneseq
    %v1901 = vshrl.u32 %v1900, 7
    %1903 = vset.pattern.permute.xlu0 %v1901
    %1904 = vperm.xlu0 %1903, %v1899
    %v1905 = vpop.permute.xlu0 %1904
    %v1906 = vlaneseq
    %v1907 = vshrl.u32 %v1906, 7
    %v1908 = vadd.s32 %v1907, 8
    %1909 = vset.pattern.permute.xlu0 %v1908
    %1910 = vperm.xlu0 %1909, %v1899
    %v1911 = vpop.permute.xlu0 %1910
    %v1912 = vlaneseq
    %v1913 = vshrl.u32 %v1912, 7
    %v1914 = vadd.s32 %v1913, 16
    %1915 = vset.pattern.permute.xlu0 %v1914
    %1916 = vperm.xlu0 %1915, %v1899
    %v1917 = vpop.permute.xlu0 %1916
    %v1918 = vlaneseq
    %v1919 = vshrl.u32 %v1918, 7
    %v1920 = vadd.s32 %v1919, 24
    %1921 = vset.pattern.permute.xlu0 %v1920
    %1922 = vperm.xlu0 %1921, %v1899
    %v1923 = vpop.permute.xlu0 %1922
    %v1924 = vlaneseq
    %v1925 = vshrl.u32 %v1924, 7
    %v1926 = vadd.s32 %v1925, 32
    %1927 = vset.pattern.permute.xlu0 %v1926
    %1928 = vperm.xlu0 %1927, %v1899
    %v1929 = vpop.permute.xlu0 %1928
    %v1930 = vlaneseq
    %v1931 = vshrl.u32 %v1930, 7
    %v1932 = vadd.s32 %v1931, 40
    %1933 = vset.pattern.permute.xlu0 %v1932
    %1934 = vperm.xlu0 %1933, %v1899
    %v1935 = vpop.permute.xlu0 %1934
    %v1936 = vlaneseq
    %v1937 = vshrl.u32 %v1936, 7
    %v1938 = vadd.s32 %v1937, 48
    %1939 = vset.pattern.permute.xlu0 %v1938
    %1940 = vperm.xlu0 %1939, %v1899
    %v1941 = vpop.permute.xlu0 %1940
    %v1942 = vlaneseq
    %v1943 = vshrl.u32 %v1942, 7
    %v1944 = vadd.s32 %v1943, 56
    %1945 = vset.pattern.permute.xlu0 %v1944
    %1946 = vperm.xlu0 %1945, %v1899
    %v1947 = vpop.permute.xlu0 %1946
    %v1948 = vlaneseq
    %v1949 = vshrl.u32 %v1948, 7
    %v1950 = vadd.s32 %v1949, 64
    %1951 = vset.pattern.permute.xlu0 %v1950
    %1952 = vperm.xlu0 %1951, %v1899
    %v1953 = vpop.permute.xlu0 %1952
    %v1954 = vlaneseq
    %v1955 = vshrl.u32 %v1954, 7
    %v1956 = vadd.s32 %v1955, 72
    %1957 = vset.pattern.permute.xlu0 %v1956
    %1958 = vperm.xlu0 %1957, %v1899
    %v1959 = vpop.permute.xlu0 %1958
    %v1960 = vlaneseq
    %v1961 = vshrl.u32 %v1960, 7
    %v1962 = vadd.s32 %v1961, 80
    %1963 = vset.pattern.permute.xlu0 %v1962
    %1964 = vperm.xlu0 %1963, %v1899
    %v1965 = vpop.permute.xlu0 %1964
    %v1966 = vlaneseq
    %v1967 = vshrl.u32 %v1966, 7
    %v1968 = vadd.s32 %v1967, 88
    %1969 = vset.pattern.permute.xlu0 %v1968
    %1970 = vperm.xlu0 %1969, %v1899
    %v1971 = vpop.permute.xlu0 %1970
    %v1972 = vlaneseq
    %v1973 = vshrl.u32 %v1972, 7
    %v1974 = vadd.s32 %v1973, 96
    %1975 = vset.pattern.permute.xlu0 %v1974
    %1976 = vperm.xlu0 %1975, %v1899
    %v1977 = vpop.permute.xlu0 %1976
    %v1978 = vlaneseq
    %v1979 = vshrl.u32 %v1978, 7
    %v1980 = vadd.s32 %v1979, 104
    %1981 = vset.pattern.permute.xlu0 %v1980
    %1982 = vperm.xlu0 %1981, %v1899
    %v1983 = vpop.permute.xlu0 %1982
    %v1984 = vlaneseq
    %v1985 = vshrl.u32 %v1984, 7
    %v1986 = vadd.s32 %v1985, 112
    %1987 = vset.pattern.permute.xlu0 %v1986
    %1988 = vperm.xlu0 %1987, %v1899
    %v1989 = vpop.permute.xlu0 %1988
    %v1990 = vlaneseq
    %v1991 = vshrl.u32 %v1990, 7
    %v1992 = vadd.s32 %v1991, 120
    %1993 = vset.pattern.permute.xlu0 %v1992
    %1994 = vperm.xlu0 %1993, %v1899
    %v1995 = vpop.permute.xlu0 %1994
    %v1996 = vperm.slane %v1794, 2
    %v1997 = vlaneseq
    %v1998 = vshrl.u32 %v1997, 7
    %2000 = vset.pattern.permute.xlu0 %v1998
    %2001 = vperm.xlu0 %2000, %v1996
    %v2002 = vpop.permute.xlu0 %2001
    %v2003 = vlaneseq
    %v2004 = vshrl.u32 %v2003, 7
    %v2005 = vadd.s32 %v2004, 8
    %2006 = vset.pattern.permute.xlu0 %v2005
    %2007 = vperm.xlu0 %2006, %v1996
    %v2008 = vpop.permute.xlu0 %2007
    %v2009 = vlaneseq
    %v2010 = vshrl.u32 %v2009, 7
    %v2011 = vadd.s32 %v2010, 16
    %2012 = vset.pattern.permute.xlu0 %v2011
    %2013 = vperm.xlu0 %2012, %v1996
    %v2014 = vpop.permute.xlu0 %2013
    %v2015 = vlaneseq
    %v2016 = vshrl.u32 %v2015, 7
    %v2017 = vadd.s32 %v2016, 24
    %2018 = vset.pattern.permute.xlu0 %v2017
    %2019 = vperm.xlu0 %2018, %v1996
    %v2020 = vpop.permute.xlu0 %2019
    %v2021 = vlaneseq
    %v2022 = vshrl.u32 %v2021, 7
    %v2023 = vadd.s32 %v2022, 32
    %2024 = vset.pattern.permute.xlu0 %v2023
    %2025 = vperm.xlu0 %2024, %v1996
    %v2026 = vpop.permute.xlu0 %2025
    %v2027 = vlaneseq
    %v2028 = vshrl.u32 %v2027, 7
    %v2029 = vadd.s32 %v2028, 40
    %2030 = vset.pattern.permute.xlu0 %v2029
    %2031 = vperm.xlu0 %2030, %v1996
    %v2032 = vpop.permute.xlu0 %2031
    %v2033 = vlaneseq
    %v2034 = vshrl.u32 %v2033, 7
    %v2035 = vadd.s32 %v2034, 48
    %2036 = vset.pattern.permute.xlu0 %v2035
    %2037 = vperm.xlu0 %2036, %v1996
    %v2038 = vpop.permute.xlu0 %2037
    %v2039 = vlaneseq
    %v2040 = vshrl.u32 %v2039, 7
    %v2041 = vadd.s32 %v2040, 56
    %2042 = vset.pattern.permute.xlu0 %v2041
    %2043 = vperm.xlu0 %2042, %v1996
    %v2044 = vpop.permute.xlu0 %2043
    %v2045 = vlaneseq
    %v2046 = vshrl.u32 %v2045, 7
    %v2047 = vadd.s32 %v2046, 64
    %2048 = vset.pattern.permute.xlu0 %v2047
    %2049 = vperm.xlu0 %2048, %v1996
    %v2050 = vpop.permute.xlu0 %2049
    %v2051 = vlaneseq
    %v2052 = vshrl.u32 %v2051, 7
    %v2053 = vadd.s32 %v2052, 72
    %2054 = vset.pattern.permute.xlu0 %v2053
    %2055 = vperm.xlu0 %2054, %v1996
    %v2056 = vpop.permute.xlu0 %2055
    %v2057 = vlaneseq
    %v2058 = vshrl.u32 %v2057, 7
    %v2059 = vadd.s32 %v2058, 80
    %2060 = vset.pattern.permute.xlu0 %v2059
    %2061 = vperm.xlu0 %2060, %v1996
    %v2062 = vpop.permute.xlu0 %2061
    %v2063 = vlaneseq
    %v2064 = vshrl.u32 %v2063, 7
    %v2065 = vadd.s32 %v2064, 88
    %2066 = vset.pattern.permute.xlu0 %v2065
    %2067 = vperm.xlu0 %2066, %v1996
    %v2068 = vpop.permute.xlu0 %2067
    %v2069 = vlaneseq
    %v2070 = vshrl.u32 %v2069, 7
    %v2071 = vadd.s32 %v2070, 96
    %2072 = vset.pattern.permute.xlu0 %v2071
    %2073 = vperm.xlu0 %2072, %v1996
    %v2074 = vpop.permute.xlu0 %2073
    %v2075 = vlaneseq
    %v2076 = vshrl.u32 %v2075, 7
    %v2077 = vadd.s32 %v2076, 104
    %2078 = vset.pattern.permute.xlu0 %v2077
    %2079 = vperm.xlu0 %2078, %v1996
    %v2080 = vpop.permute.xlu0 %2079
    %v2081 = vlaneseq
    %v2082 = vshrl.u32 %v2081, 7
    %v2083 = vadd.s32 %v2082, 112
    %2084 = vset.pattern.permute.xlu0 %v2083
    %2085 = vperm.xlu0 %2084, %v1996
    %v2086 = vpop.permute.xlu0 %2085
    %v2087 = vlaneseq
    %v2088 = vshrl.u32 %v2087, 7
    %v2089 = vadd.s32 %v2088, 120
    %2090 = vset.pattern.permute.xlu0 %v2089
    %2091 = vperm.xlu0 %2090, %v1996
    %v2092 = vpop.permute.xlu0 %2091
    %v2093 = vperm.slane %v1794, 3
    %v2094 = vlaneseq
    %v2095 = vshrl.u32 %v2094, 7
    %2097 = vset.pattern.permute.xlu0 %v2095
    %2098 = vperm.xlu0 %2097, %v2093
    %v2099 = vpop.permute.xlu0 %2098
    %v2100 = vlaneseq
    %v2101 = vshrl.u32 %v2100, 7
    %v2102 = vadd.s32 %v2101, 8
    %2103 = vset.pattern.permute.xlu0 %v2102
    %2104 = vperm.xlu0 %2103, %v2093
    %v2105 = vpop.permute.xlu0 %2104
    %v2106 = vlaneseq
    %v2107 = vshrl.u32 %v2106, 7
    %v2108 = vadd.s32 %v2107, 16
    %2109 = vset.pattern.permute.xlu0 %v2108
    %2110 = vperm.xlu0 %2109, %v2093
    %v2111 = vpop.permute.xlu0 %2110
    %v2112 = vlaneseq
    %v2113 = vshrl.u32 %v2112, 7
    %v2114 = vadd.s32 %v2113, 24
    %2115 = vset.pattern.permute.xlu0 %v2114
    %2116 = vperm.xlu0 %2115, %v2093
    %v2117 = vpop.permute.xlu0 %2116
    %v2118 = vlaneseq
    %v2119 = vshrl.u32 %v2118, 7
    %v2120 = vadd.s32 %v2119, 32
    %2121 = vset.pattern.permute.xlu0 %v2120
    %2122 = vperm.xlu0 %2121, %v2093
    %v2123 = vpop.permute.xlu0 %2122
    %v2124 = vlaneseq
    %v2125 = vshrl.u32 %v2124, 7
    %v2126 = vadd.s32 %v2125, 40
    %2127 = vset.pattern.permute.xlu0 %v2126
    %2128 = vperm.xlu0 %2127, %v2093
    %v2129 = vpop.permute.xlu0 %2128
    %v2130 = vlaneseq
    %v2131 = vshrl.u32 %v2130, 7
    %v2132 = vadd.s32 %v2131, 48
    %2133 = vset.pattern.permute.xlu0 %v2132
    %2134 = vperm.xlu0 %2133, %v2093
    %v2135 = vpop.permute.xlu0 %2134
    %v2136 = vlaneseq
    %v2137 = vshrl.u32 %v2136, 7
    %v2138 = vadd.s32 %v2137, 56
    %2139 = vset.pattern.permute.xlu0 %v2138
    %2140 = vperm.xlu0 %2139, %v2093
    %v2141 = vpop.permute.xlu0 %2140
    %v2142 = vlaneseq
    %v2143 = vshrl.u32 %v2142, 7
    %v2144 = vadd.s32 %v2143, 64
    %2145 = vset.pattern.permute.xlu0 %v2144
    %2146 = vperm.xlu0 %2145, %v2093
    %v2147 = vpop.permute.xlu0 %2146
    %v2148 = vlaneseq
    %v2149 = vshrl.u32 %v2148, 7
    %v2150 = vadd.s32 %v2149, 72
    %2151 = vset.pattern.permute.xlu0 %v2150
    %2152 = vperm.xlu0 %2151, %v2093
    %v2153 = vpop.permute.xlu0 %2152
    %v2154 = vlaneseq
    %v2155 = vshrl.u32 %v2154, 7
    %v2156 = vadd.s32 %v2155, 80
    %2157 = vset.pattern.permute.xlu0 %v2156
    %2158 = vperm.xlu0 %2157, %v2093
    %v2159 = vpop.permute.xlu0 %2158
    %v2160 = vlaneseq
    %v2161 = vshrl.u32 %v2160, 7
    %v2162 = vadd.s32 %v2161, 88
    %2163 = vset.pattern.permute.xlu0 %v2162
    %2164 = vperm.xlu0 %2163, %v2093
    %v2165 = vpop.permute.xlu0 %2164
    %v2166 = vlaneseq
    %v2167 = vshrl.u32 %v2166, 7
    %v2168 = vadd.s32 %v2167, 96
    %2169 = vset.pattern.permute.xlu0 %v2168
    %2170 = vperm.xlu0 %2169, %v2093
    %v2171 = vpop.permute.xlu0 %2170
    %v2172 = vlaneseq
    %v2173 = vshrl.u32 %v2172, 7
    %v2174 = vadd.s32 %v2173, 104
    %2175 = vset.pattern.permute.xlu0 %v2174
    %2176 = vperm.xlu0 %2175, %v2093
    %v2177 = vpop.permute.xlu0 %2176
    %v2178 = vlaneseq
    %v2179 = vshrl.u32 %v2178, 7
    %v2180 = vadd.s32 %v2179, 112
    %2181 = vset.pattern.permute.xlu0 %v2180
    %2182 = vperm.xlu0 %2181, %v2093
    %v2183 = vpop.permute.xlu0 %2182
    %v2184 = vlaneseq
    %v2185 = vshrl.u32 %v2184, 7
    %v2186 = vadd.s32 %v2185, 120
    %2187 = vset.pattern.permute.xlu0 %v2186
    %2188 = vperm.xlu0 %2187, %v2093
    %v2189 = vpop.permute.xlu0 %2188
    %v2190 = vperm.slane %v1794, 4
    %v2191 = vlaneseq
    %v2192 = vshrl.u32 %v2191, 7
    %2194 = vset.pattern.permute.xlu0 %v2192
    %2195 = vperm.xlu0 %2194, %v2190
    %v2196 = vpop.permute.xlu0 %2195
    %v2197 = vlaneseq
    %v2198 = vshrl.u32 %v2197, 7
    %v2199 = vadd.s32 %v2198, 8
    %2200 = vset.pattern.permute.xlu0 %v2199
    %2201 = vperm.xlu0 %2200, %v2190
    %v2202 = vpop.permute.xlu0 %2201
    %v2203 = vlaneseq
    %v2204 = vshrl.u32 %v2203, 7
    %v2205 = vadd.s32 %v2204, 16
    %2206 = vset.pattern.permute.xlu0 %v2205
    %2207 = vperm.xlu0 %2206, %v2190
    %v2208 = vpop.permute.xlu0 %2207
    %v2209 = vlaneseq
    %v2210 = vshrl.u32 %v2209, 7
    %v2211 = vadd.s32 %v2210, 24
    %2212 = vset.pattern.permute.xlu0 %v2211
    %2213 = vperm.xlu0 %2212, %v2190
    %v2214 = vpop.permute.xlu0 %2213
    %v2215 = vlaneseq
    %v2216 = vshrl.u32 %v2215, 7
    %v2217 = vadd.s32 %v2216, 32
    %2218 = vset.pattern.permute.xlu0 %v2217
    %2219 = vperm.xlu0 %2218, %v2190
    %v2220 = vpop.permute.xlu0 %2219
    %v2221 = vlaneseq
    %v2222 = vshrl.u32 %v2221, 7
    %v2223 = vadd.s32 %v2222, 40
    %2224 = vset.pattern.permute.xlu0 %v2223
    %2225 = vperm.xlu0 %2224, %v2190
    %v2226 = vpop.permute.xlu0 %2225
    %v2227 = vlaneseq
    %v2228 = vshrl.u32 %v2227, 7
    %v2229 = vadd.s32 %v2228, 48
    %2230 = vset.pattern.permute.xlu0 %v2229
    %2231 = vperm.xlu0 %2230, %v2190
    %v2232 = vpop.permute.xlu0 %2231
    %v2233 = vlaneseq
    %v2234 = vshrl.u32 %v2233, 7
    %v2235 = vadd.s32 %v2234, 56
    %2236 = vset.pattern.permute.xlu0 %v2235
    %2237 = vperm.xlu0 %2236, %v2190
    %v2238 = vpop.permute.xlu0 %2237
    %v2239 = vlaneseq
    %v2240 = vshrl.u32 %v2239, 7
    %v2241 = vadd.s32 %v2240, 64
    %2242 = vset.pattern.permute.xlu0 %v2241
    %2243 = vperm.xlu0 %2242, %v2190
    %v2244 = vpop.permute.xlu0 %2243
    %v2245 = vlaneseq
    %v2246 = vshrl.u32 %v2245, 7
    %v2247 = vadd.s32 %v2246, 72
    %2248 = vset.pattern.permute.xlu0 %v2247
    %2249 = vperm.xlu0 %2248, %v2190
    %v2250 = vpop.permute.xlu0 %2249
    %v2251 = vlaneseq
    %v2252 = vshrl.u32 %v2251, 7
    %v2253 = vadd.s32 %v2252, 80
    %2254 = vset.pattern.permute.xlu0 %v2253
    %2255 = vperm.xlu0 %2254, %v2190
    %v2256 = vpop.permute.xlu0 %2255
    %v2257 = vlaneseq
    %v2258 = vshrl.u32 %v2257, 7
    %v2259 = vadd.s32 %v2258, 88
    %2260 = vset.pattern.permute.xlu0 %v2259
    %2261 = vperm.xlu0 %2260, %v2190
    %v2262 = vpop.permute.xlu0 %2261
    %v2263 = vlaneseq
    %v2264 = vshrl.u32 %v2263, 7
    %v2265 = vadd.s32 %v2264, 96
    %2266 = vset.pattern.permute.xlu0 %v2265
    %2267 = vperm.xlu0 %2266, %v2190
    %v2268 = vpop.permute.xlu0 %2267
    %v2269 = vlaneseq
    %v2270 = vshrl.u32 %v2269, 7
    %v2271 = vadd.s32 %v2270, 104
    %2272 = vset.pattern.permute.xlu0 %v2271
    %2273 = vperm.xlu0 %2272, %v2190
    %v2274 = vpop.permute.xlu0 %2273
    %v2275 = vlaneseq
    %v2276 = vshrl.u32 %v2275, 7
    %v2277 = vadd.s32 %v2276, 112
    %2278 = vset.pattern.permute.xlu0 %v2277
    %2279 = vperm.xlu0 %2278, %v2190
    %v2280 = vpop.permute.xlu0 %2279
    %v2281 = vlaneseq
    %v2282 = vshrl.u32 %v2281, 7
    %v2283 = vadd.s32 %v2282, 120
    %2284 = vset.pattern.permute.xlu0 %v2283
    %2285 = vperm.xlu0 %2284, %v2190
    %v2286 = vpop.permute.xlu0 %2285
    %v2287 = vperm.slane %v1794, 5
    %v2288 = vlaneseq
    %v2289 = vshrl.u32 %v2288, 7
    %2291 = vset.pattern.permute.xlu0 %v2289
    %2292 = vperm.xlu0 %2291, %v2287
    %v2293 = vpop.permute.xlu0 %2292
    %v2294 = vlaneseq
    %v2295 = vshrl.u32 %v2294, 7
    %v2296 = vadd.s32 %v2295, 8
    %2297 = vset.pattern.permute.xlu0 %v2296
    %2298 = vperm.xlu0 %2297, %v2287
    %v2299 = vpop.permute.xlu0 %2298
    %v2300 = vlaneseq
    %v2301 = vshrl.u32 %v2300, 7
    %v2302 = vadd.s32 %v2301, 16
    %2303 = vset.pattern.permute.xlu0 %v2302
    %2304 = vperm.xlu0 %2303, %v2287
    %v2305 = vpop.permute.xlu0 %2304
    %v2306 = vlaneseq
    %v2307 = vshrl.u32 %v2306, 7
    %v2308 = vadd.s32 %v2307, 24
    %2309 = vset.pattern.permute.xlu0 %v2308
    %2310 = vperm.xlu0 %2309, %v2287
    %v2311 = vpop.permute.xlu0 %2310
    %v2312 = vlaneseq
    %v2313 = vshrl.u32 %v2312, 7
    %v2314 = vadd.s32 %v2313, 32
    %2315 = vset.pattern.permute.xlu0 %v2314
    %2316 = vperm.xlu0 %2315, %v2287
    %v2317 = vpop.permute.xlu0 %2316
    %v2318 = vlaneseq
    %v2319 = vshrl.u32 %v2318, 7
    %v2320 = vadd.s32 %v2319, 40
    %2321 = vset.pattern.permute.xlu0 %v2320
    %2322 = vperm.xlu0 %2321, %v2287
    %v2323 = vpop.permute.xlu0 %2322
    %v2324 = vlaneseq
    %v2325 = vshrl.u32 %v2324, 7
    %v2326 = vadd.s32 %v2325, 48
    %2327 = vset.pattern.permute.xlu0 %v2326
    %2328 = vperm.xlu0 %2327, %v2287
    %v2329 = vpop.permute.xlu0 %2328
    %v2330 = vlaneseq
    %v2331 = vshrl.u32 %v2330, 7
    %v2332 = vadd.s32 %v2331, 56
    %2333 = vset.pattern.permute.xlu0 %v2332
    %2334 = vperm.xlu0 %2333, %v2287
    %v2335 = vpop.permute.xlu0 %2334
    %v2336 = vlaneseq
    %v2337 = vshrl.u32 %v2336, 7
    %v2338 = vadd.s32 %v2337, 64
    %2339 = vset.pattern.permute.xlu0 %v2338
    %2340 = vperm.xlu0 %2339, %v2287
    %v2341 = vpop.permute.xlu0 %2340
    %v2342 = vlaneseq
    %v2343 = vshrl.u32 %v2342, 7
    %v2344 = vadd.s32 %v2343, 72
    %2345 = vset.pattern.permute.xlu0 %v2344
    %2346 = vperm.xlu0 %2345, %v2287
    %v2347 = vpop.permute.xlu0 %2346
    %v2348 = vlaneseq
    %v2349 = vshrl.u32 %v2348, 7
    %v2350 = vadd.s32 %v2349, 80
    %2351 = vset.pattern.permute.xlu0 %v2350
    %2352 = vperm.xlu0 %2351, %v2287
    %v2353 = vpop.permute.xlu0 %2352
    %v2354 = vlaneseq
    %v2355 = vshrl.u32 %v2354, 7
    %v2356 = vadd.s32 %v2355, 88
    %2357 = vset.pattern.permute.xlu0 %v2356
    %2358 = vperm.xlu0 %2357, %v2287
    %v2359 = vpop.permute.xlu0 %2358
    %v2360 = vlaneseq
    %v2361 = vshrl.u32 %v2360, 7
    %v2362 = vadd.s32 %v2361, 96
    %2363 = vset.pattern.permute.xlu0 %v2362
    %2364 = vperm.xlu0 %2363, %v2287
    %v2365 = vpop.permute.xlu0 %2364
    %v2366 = vlaneseq
    %v2367 = vshrl.u32 %v2366, 7
    %v2368 = vadd.s32 %v2367, 104
    %2369 = vset.pattern.permute.xlu0 %v2368
    %2370 = vperm.xlu0 %2369, %v2287
    %v2371 = vpop.permute.xlu0 %2370
    %v2372 = vlaneseq
    %v2373 = vshrl.u32 %v2372, 7
    %v2374 = vadd.s32 %v2373, 112
    %2375 = vset.pattern.permute.xlu0 %v2374
    %2376 = vperm.xlu0 %2375, %v2287
    %v2377 = vpop.permute.xlu0 %2376
    %v2378 = vlaneseq
    %v2379 = vshrl.u32 %v2378, 7
    %v2380 = vadd.s32 %v2379, 120
    %2381 = vset.pattern.permute.xlu0 %v2380
    %2382 = vperm.xlu0 %2381, %v2287
    %v2383 = vpop.permute.xlu0 %2382
    %v2384 = vperm.slane %v1794, 6
    %v2385 = vlaneseq
    %v2386 = vshrl.u32 %v2385, 7
    %2388 = vset.pattern.permute.xlu0 %v2386
    %2389 = vperm.xlu0 %2388, %v2384
    %v2390 = vpop.permute.xlu0 %2389
    %v2391 = vlaneseq
    %v2392 = vshrl.u32 %v2391, 7
    %v2393 = vadd.s32 %v2392, 8
    %2394 = vset.pattern.permute.xlu0 %v2393
    %2395 = vperm.xlu0 %2394, %v2384
    %v2396 = vpop.permute.xlu0 %2395
    %v2397 = vlaneseq
    %v2398 = vshrl.u32 %v2397, 7
    %v2399 = vadd.s32 %v2398, 16
    %2400 = vset.pattern.permute.xlu0 %v2399
    %2401 = vperm.xlu0 %2400, %v2384
    %v2402 = vpop.permute.xlu0 %2401
    %v2403 = vlaneseq
    %v2404 = vshrl.u32 %v2403, 7
    %v2405 = vadd.s32 %v2404, 24
    %2406 = vset.pattern.permute.xlu0 %v2405
    %2407 = vperm.xlu0 %2406, %v2384
    %v2408 = vpop.permute.xlu0 %2407
    %v2409 = vlaneseq
    %v2410 = vshrl.u32 %v2409, 7
    %v2411 = vadd.s32 %v2410, 32
    %2412 = vset.pattern.permute.xlu0 %v2411
    %2413 = vperm.xlu0 %2412, %v2384
    %v2414 = vpop.permute.xlu0 %2413
    %v2415 = vlaneseq
    %v2416 = vshrl.u32 %v2415, 7
    %v2417 = vadd.s32 %v2416, 40
    %2418 = vset.pattern.permute.xlu0 %v2417
    %2419 = vperm.xlu0 %2418, %v2384
    %v2420 = vpop.permute.xlu0 %2419
    %v2421 = vlaneseq
    %v2422 = vshrl.u32 %v2421, 7
    %v2423 = vadd.s32 %v2422, 48
    %2424 = vset.pattern.permute.xlu0 %v2423
    %2425 = vperm.xlu0 %2424, %v2384
    %v2426 = vpop.permute.xlu0 %2425
    %v2427 = vlaneseq
    %v2428 = vshrl.u32 %v2427, 7
    %v2429 = vadd.s32 %v2428, 56
    %2430 = vset.pattern.permute.xlu0 %v2429
    %2431 = vperm.xlu0 %2430, %v2384
    %v2432 = vpop.permute.xlu0 %2431
    %v2433 = vlaneseq
    %v2434 = vshrl.u32 %v2433, 7
    %v2435 = vadd.s32 %v2434, 64
    %2436 = vset.pattern.permute.xlu0 %v2435
    %2437 = vperm.xlu0 %2436, %v2384
    %v2438 = vpop.permute.xlu0 %2437
    %v2439 = vlaneseq
    %v2440 = vshrl.u32 %v2439, 7
    %v2441 = vadd.s32 %v2440, 72
    %2442 = vset.pattern.permute.xlu0 %v2441
    %2443 = vperm.xlu0 %2442, %v2384
    %v2444 = vpop.permute.xlu0 %2443
    %v2445 = vlaneseq
    %v2446 = vshrl.u32 %v2445, 7
    %v2447 = vadd.s32 %v2446, 80
    %2448 = vset.pattern.permute.xlu0 %v2447
    %2449 = vperm.xlu0 %2448, %v2384
    %v2450 = vpop.permute.xlu0 %2449
    %v2451 = vlaneseq
    %v2452 = vshrl.u32 %v2451, 7
    %v2453 = vadd.s32 %v2452, 88
    %2454 = vset.pattern.permute.xlu0 %v2453
    %2455 = vperm.xlu0 %2454, %v2384
    %v2456 = vpop.permute.xlu0 %2455
    %v2457 = vlaneseq
    %v2458 = vshrl.u32 %v2457, 7
    %v2459 = vadd.s32 %v2458, 96
    %2460 = vset.pattern.permute.xlu0 %v2459
    %2461 = vperm.xlu0 %2460, %v2384
    %v2462 = vpop.permute.xlu0 %2461
    %v2463 = vlaneseq
    %v2464 = vshrl.u32 %v2463, 7
    %v2465 = vadd.s32 %v2464, 104
    %2466 = vset.pattern.permute.xlu0 %v2465
    %2467 = vperm.xlu0 %2466, %v2384
    %v2468 = vpop.permute.xlu0 %2467
    %v2469 = vlaneseq
    %v2470 = vshrl.u32 %v2469, 7
    %v2471 = vadd.s32 %v2470, 112
    %2472 = vset.pattern.permute.xlu0 %v2471
    %2473 = vperm.xlu0 %2472, %v2384
    %v2474 = vpop.permute.xlu0 %2473
    %v2475 = vlaneseq
    %v2476 = vshrl.u32 %v2475, 7
    %v2477 = vadd.s32 %v2476, 120
    %2478 = vset.pattern.permute.xlu0 %v2477
    %2479 = vperm.xlu0 %2478, %v2384
    %v2480 = vpop.permute.xlu0 %2479
    %v2481 = vperm.slane %v1794, 7
    %v2482 = vlaneseq
    %v2483 = vshrl.u32 %v2482, 7
    %2485 = vset.pattern.permute.xlu0 %v2483
    %2486 = vperm.xlu0 %2485, %v2481
    %v2487 = vpop.permute.xlu0 %2486
    %v2488 = vlaneseq
    %v2489 = vshrl.u32 %v2488, 7
    %v2490 = vadd.s32 %v2489, 8
    %2491 = vset.pattern.permute.xlu0 %v2490
    %2492 = vperm.xlu0 %2491, %v2481
    %v2493 = vpop.permute.xlu0 %2492
    %v2494 = vlaneseq
    %v2495 = vshrl.u32 %v2494, 7
    %v2496 = vadd.s32 %v2495, 16
    %2497 = vset.pattern.permute.xlu0 %v2496
    %2498 = vperm.xlu0 %2497, %v2481
    %v2499 = vpop.permute.xlu0 %2498
    %v2500 = vlaneseq
    %v2501 = vshrl.u32 %v2500, 7
    %v2502 = vadd.s32 %v2501, 24
    %2503 = vset.pattern.permute.xlu0 %v2502
    %2504 = vperm.xlu0 %2503, %v2481
    %v2505 = vpop.permute.xlu0 %2504
    %v2506 = vlaneseq
    %v2507 = vshrl.u32 %v2506, 7
    %v2508 = vadd.s32 %v2507, 32
    %2509 = vset.pattern.permute.xlu0 %v2508
    %2510 = vperm.xlu0 %2509, %v2481
    %v2511 = vpop.permute.xlu0 %2510
    %v2512 = vlaneseq
    %v2513 = vshrl.u32 %v2512, 7
    %v2514 = vadd.s32 %v2513, 40
    %2515 = vset.pattern.permute.xlu0 %v2514
    %2516 = vperm.xlu0 %2515, %v2481
    %v2517 = vpop.permute.xlu0 %2516
    %v2518 = vlaneseq
    %v2519 = vshrl.u32 %v2518, 7
    %v2520 = vadd.s32 %v2519, 48
    %2521 = vset.pattern.permute.xlu0 %v2520
    %2522 = vperm.xlu0 %2521, %v2481
    %v2523 = vpop.permute.xlu0 %2522
    %v2524 = vlaneseq
    %v2525 = vshrl.u32 %v2524, 7
    %v2526 = vadd.s32 %v2525, 56
    %2527 = vset.pattern.permute.xlu0 %v2526
    %2528 = vperm.xlu0 %2527, %v2481
    %v2529 = vpop.permute.xlu0 %2528
    %v2530 = vlaneseq
    %v2531 = vshrl.u32 %v2530, 7
    %v2532 = vadd.s32 %v2531, 64
    %2533 = vset.pattern.permute.xlu0 %v2532
    %2534 = vperm.xlu0 %2533, %v2481
    %v2535 = vpop.permute.xlu0 %2534
    %v2536 = vlaneseq
    %v2537 = vshrl.u32 %v2536, 7
    %v2538 = vadd.s32 %v2537, 72
    %2539 = vset.pattern.permute.xlu0 %v2538
    %2540 = vperm.xlu0 %2539, %v2481
    %v2541 = vpop.permute.xlu0 %2540
    %v2542 = vlaneseq
    %v2543 = vshrl.u32 %v2542, 7
    %v2544 = vadd.s32 %v2543, 80
    %2545 = vset.pattern.permute.xlu0 %v2544
    %2546 = vperm.xlu0 %2545, %v2481
    %v2547 = vpop.permute.xlu0 %2546
    %v2548 = vlaneseq
    %v2549 = vshrl.u32 %v2548, 7
    %v2550 = vadd.s32 %v2549, 88
    %2551 = vset.pattern.permute.xlu0 %v2550
    %2552 = vperm.xlu0 %2551, %v2481
    %v2553 = vpop.permute.xlu0 %2552
    %v2554 = vlaneseq
    %v2555 = vshrl.u32 %v2554, 7
    %v2556 = vadd.s32 %v2555, 96
    %2557 = vset.pattern.permute.xlu0 %v2556
    %2558 = vperm.xlu0 %2557, %v2481
    %v2559 = vpop.permute.xlu0 %2558
    %v2560 = vlaneseq
    %v2561 = vshrl.u32 %v2560, 7
    %v2562 = vadd.s32 %v2561, 104
    %2563 = vset.pattern.permute.xlu0 %v2562
    %2564 = vperm.xlu0 %2563, %v2481
    %v2565 = vpop.permute.xlu0 %2564
    %v2566 = vlaneseq
    %v2567 = vshrl.u32 %v2566, 7
    %v2568 = vadd.s32 %v2567, 112
    %2569 = vset.pattern.permute.xlu0 %v2568
    %2570 = vperm.xlu0 %2569, %v2481
    %v2571 = vpop.permute.xlu0 %2570
    %v2572 = vlaneseq
    %v2573 = vshrl.u32 %v2572, 7
    %v2574 = vadd.s32 %v2573, 120
    %2575 = vset.pattern.permute.xlu0 %v2574
    %2576 = vperm.xlu0 %2575, %v2481
    %v2577 = vpop.permute.xlu0 %2576
    %v2578 = vmul.f32 %v1808, %v138
    %v2579 = vmul.f32 %v1814, %v139
    %v2580 = vmul.f32 %v1820, %v140
    %v2581 = vmul.f32 %v1826, %v141
    %v2582 = vmul.f32 %v1832, %v142
    %v2583 = vmul.f32 %v1838, %v143
    %v2584 = vmul.f32 %v1844, %v144
    %v2585 = vmul.f32 %v1850, %v145
    %v2586 = vmul.f32 %v1856, %v146
    %v2587 = vmul.f32 %v1862, %v147
    %v2588 = vmul.f32 %v1868, %v148
    %v2589 = vmul.f32 %v1874, %v149
    %v2590 = vmul.f32 %v1880, %v150
    %v2591 = vmul.f32 %v1886, %v151
    %v2592 = vmul.f32 %v1892, %v152
    %v2593 = vmul.f32 %v1898, %v153
    %v2594 = vmul.f32 %v1905, %v154
    %v2595 = vmul.f32 %v1911, %v155
    %v2596 = vmul.f32 %v1917, %v156
    %v2597 = vmul.f32 %v1923, %v157
    %v2598 = vmul.f32 %v1929, %v158
    %v2599 = vmul.f32 %v1935, %v159
    %v2600 = vmul.f32 %v1941, %v160
    %v2601 = vmul.f32 %v1947, %v161
    %v2602 = vmul.f32 %v1953, %v162
    %v2603 = vmul.f32 %v1959, %v163
    %v2604 = vmul.f32 %v1965, %v164
    %v2605 = vmul.f32 %v1971, %v165
    %v2606 = vmul.f32 %v1977, %v166
    %v2607 = vmul.f32 %v1983, %v167
    %v2608 = vmul.f32 %v1989, %v168
    %v2609 = vmul.f32 %v1995, %v169
    %v2610 = vmul.f32 %v2002, %v170
    %v2611 = vmul.f32 %v2008, %v171
    %v2612 = vmul.f32 %v2014, %v172
    %v2613 = vmul.f32 %v2020, %v173
    %v2614 = vmul.f32 %v2026, %v174
    %v2615 = vmul.f32 %v2032, %v175
    %v2616 = vmul.f32 %v2038, %v176
    %v2617 = vmul.f32 %v2044, %v177
    %v2618 = vmul.f32 %v2050, %v178
    %v2619 = vmul.f32 %v2056, %v179
    %v2620 = vmul.f32 %v2062, %v180
    %v2621 = vmul.f32 %v2068, %v181
    %v2622 = vmul.f32 %v2074, %v182
    %v2623 = vmul.f32 %v2080, %v183
    %v2624 = vmul.f32 %v2086, %v184
    %v2625 = vmul.f32 %v2092, %v185
    %v2626 = vmul.f32 %v2099, %v186
    %v2627 = vmul.f32 %v2105, %v187
    %v2628 = vmul.f32 %v2111, %v188
    %v2629 = vmul.f32 %v2117, %v189
    %v2630 = vmul.f32 %v2123, %v190
    %v2631 = vmul.f32 %v2129, %v191
    %v2632 = vmul.f32 %v2135, %v192
    %v2633 = vmul.f32 %v2141, %v193
    %v2634 = vmul.f32 %v2147, %v194
    %v2635 = vmul.f32 %v2153, %v195
    %v2636 = vmul.f32 %v2159, %v196
    %v2637 = vmul.f32 %v2165, %v197
    %v2638 = vmul.f32 %v2171, %v198
    %v2639 = vmul.f32 %v2177, %v199
    %v2640 = vmul.f32 %v2183, %v200
    %v2641 = vmul.f32 %v2189, %v201
    %v2642 = vmul.f32 %v2196, %v202
    %v2643 = vmul.f32 %v2202, %v203
    %v2644 = vmul.f32 %v2208, %v204
    %v2645 = vmul.f32 %v2214, %v205
    %v2646 = vmul.f32 %v2220, %v206
    %v2647 = vmul.f32 %v2226, %v207
    %v2648 = vmul.f32 %v2232, %v208
    %v2649 = vmul.f32 %v2238, %v209
    %v2650 = vmul.f32 %v2244, %v210
    %v2651 = vmul.f32 %v2250, %v211
    %v2652 = vmul.f32 %v2256, %v212
    %v2653 = vmul.f32 %v2262, %v213
    %v2654 = vmul.f32 %v2268, %v214
    %v2655 = vmul.f32 %v2274, %v215
    %v2656 = vmul.f32 %v2280, %v216
    %v2657 = vmul.f32 %v2286, %v217
    %v2658 = vmul.f32 %v2293, %v218
    %v2659 = vmul.f32 %v2299, %v219
    %v2660 = vmul.f32 %v2305, %v220
    %v2661 = vmul.f32 %v2311, %v221
    %v2662 = vmul.f32 %v2317, %v222
    %v2663 = vmul.f32 %v2323, %v223
    %v2664 = vmul.f32 %v2329, %v224
    %v2665 = vmul.f32 %v2335, %v225
    %v2666 = vmul.f32 %v2341, %v226
    %v2667 = vmul.f32 %v2347, %v227
    %v2668 = vmul.f32 %v2353, %v228
    %v2669 = vmul.f32 %v2359, %v229
    %v2670 = vmul.f32 %v2365, %v230
    %v2671 = vmul.f32 %v2371, %v231
    %v2672 = vmul.f32 %v2377, %v232
    %v2673 = vmul.f32 %v2383, %v233
    %v2674 = vmul.f32 %v2390, %v234
    %v2675 = vmul.f32 %v2396, %v235
    %v2676 = vmul.f32 %v2402, %v236
    %v2677 = vmul.f32 %v2408, %v237
    %v2678 = vmul.f32 %v2414, %v238
    %v2679 = vmul.f32 %v2420, %v239
    %v2680 = vmul.f32 %v2426, %v240
    %v2681 = vmul.f32 %v2432, %v241
    %v2682 = vmul.f32 %v2438, %v242
    %v2683 = vmul.f32 %v2444, %v243
    %v2684 = vmul.f32 %v2450, %v244
    %v2685 = vmul.f32 %v2456, %v245
    %v2686 = vmul.f32 %v2462, %v246
    %v2687 = vmul.f32 %v2468, %v247
    %v2688 = vmul.f32 %v2474, %v248
    %v2689 = vmul.f32 %v2480, %v249
    %v2690 = vmul.f32 %v2487, %v250
    %v2691 = vmul.f32 %v2493, %v251
    %v2692 = vmul.f32 %v2499, %v252
    %v2693 = vmul.f32 %v2505, %v253
    %v2694 = vmul.f32 %v2511, %v254
    %v2695 = vmul.f32 %v2517, %v255
    %v2696 = vmul.f32 %v2523, %v256
    %v2697 = vmul.f32 %v2529, %v257
    %v2698 = vmul.f32 %v2535, %v258
    %v2699 = vmul.f32 %v2541, %v259
    %v2700 = vmul.f32 %v2547, %v260
    %v2701 = vmul.f32 %v2553, %v261
    %v2702 = vmul.f32 %v2559, %v262
    %v2703 = vmul.f32 %v2565, %v263
    %v2704 = vmul.f32 %v2571, %v264
    %v2705 = vmul.f32 %v2577, %v265
    %v2706 = vadd.f32 %v2578, %v2579
    %v2707 = vadd.f32 %v2706, %v2580
    %v2708 = vadd.f32 %v2707, %v2581
    %v2709 = vadd.f32 %v2708, %v2582
    %v2710 = vadd.f32 %v2709, %v2583
    %v2711 = vadd.f32 %v2710, %v2584
    %v2712 = vadd.f32 %v2711, %v2585
    %v2713 = vadd.f32 %v2712, %v2586
    %v2714 = vadd.f32 %v2713, %v2587
    %v2715 = vadd.f32 %v2714, %v2588
    %v2716 = vadd.f32 %v2715, %v2589
    %v2717 = vadd.f32 %v2716, %v2590
    %v2718 = vadd.f32 %v2717, %v2591
    %v2719 = vadd.f32 %v2718, %v2592
    %v2720 = vadd.f32 %v2719, %v2593
    %v2721 = vrot.slane %v2720, 4
    %v2722 = vadd.f32 %v2720, %v2721
    %v2723 = vrot.slane %v2722, 2
    %v2724 = vadd.f32 %v2722, %v2723
    %v2725 = vrot.slane %v2724, 1
    %v2726 = vadd.f32 %v2724, %v2725
    %v2727 = vadd.f32 %v2594, %v2595
    %v2728 = vadd.f32 %v2727, %v2596
    %v2729 = vadd.f32 %v2728, %v2597
    %v2730 = vadd.f32 %v2729, %v2598
    %v2731 = vadd.f32 %v2730, %v2599
    %v2732 = vadd.f32 %v2731, %v2600
    %v2733 = vadd.f32 %v2732, %v2601
    %v2734 = vadd.f32 %v2733, %v2602
    %v2735 = vadd.f32 %v2734, %v2603
    %v2736 = vadd.f32 %v2735, %v2604
    %v2737 = vadd.f32 %v2736, %v2605
    %v2738 = vadd.f32 %v2737, %v2606
    %v2739 = vadd.f32 %v2738, %v2607
    %v2740 = vadd.f32 %v2739, %v2608
    %v2741 = vadd.f32 %v2740, %v2609
    %v2742 = vrot.slane %v2741, 4
    %v2743 = vadd.f32 %v2741, %v2742
    %v2744 = vrot.slane %v2743, 2
    %v2745 = vadd.f32 %v2743, %v2744
    %v2746 = vrot.slane %v2745, 1
    %v2747 = vadd.f32 %v2745, %v2746
    %v2748 = vadd.f32 %v2610, %v2611
    %v2749 = vadd.f32 %v2748, %v2612
    %v2750 = vadd.f32 %v2749, %v2613
    %v2751 = vadd.f32 %v2750, %v2614
    %v2752 = vadd.f32 %v2751, %v2615
    %v2753 = vadd.f32 %v2752, %v2616
    %v2754 = vadd.f32 %v2753, %v2617
    %v2755 = vadd.f32 %v2754, %v2618
    %v2756 = vadd.f32 %v2755, %v2619
    %v2757 = vadd.f32 %v2756, %v2620
    %v2758 = vadd.f32 %v2757, %v2621
    %v2759 = vadd.f32 %v2758, %v2622
    %v2760 = vadd.f32 %v2759, %v2623
    %v2761 = vadd.f32 %v2760, %v2624
    %v2762 = vadd.f32 %v2761, %v2625
    %v2763 = vrot.slane %v2762, 4
    %v2764 = vadd.f32 %v2762, %v2763
    %v2765 = vrot.slane %v2764, 2
    %v2766 = vadd.f32 %v2764, %v2765
    %v2767 = vrot.slane %v2766, 1
    %v2768 = vadd.f32 %v2766, %v2767
    %v2769 = vadd.f32 %v2626, %v2627
    %v2770 = vadd.f32 %v2769, %v2628
    %v2771 = vadd.f32 %v2770, %v2629
    %v2772 = vadd.f32 %v2771, %v2630
    %v2773 = vadd.f32 %v2772, %v2631
    %v2774 = vadd.f32 %v2773, %v2632
    %v2775 = vadd.f32 %v2774, %v2633
    %v2776 = vadd.f32 %v2775, %v2634
    %v2777 = vadd.f32 %v2776, %v2635
    %v2778 = vadd.f32 %v2777, %v2636
    %v2779 = vadd.f32 %v2778, %v2637
    %v2780 = vadd.f32 %v2779, %v2638
    %v2781 = vadd.f32 %v2780, %v2639
    %v2782 = vadd.f32 %v2781, %v2640
    %v2783 = vadd.f32 %v2782, %v2641
    %v2784 = vrot.slane %v2783, 4
    %v2785 = vadd.f32 %v2783, %v2784
    %v2786 = vrot.slane %v2785, 2
    %v2787 = vadd.f32 %v2785, %v2786
    %v2788 = vrot.slane %v2787, 1
    %v2789 = vadd.f32 %v2787, %v2788
    %v2790 = vadd.f32 %v2642, %v2643
    %v2791 = vadd.f32 %v2790, %v2644
    %v2792 = vadd.f32 %v2791, %v2645
    %v2793 = vadd.f32 %v2792, %v2646
    %v2794 = vadd.f32 %v2793, %v2647
    %v2795 = vadd.f32 %v2794, %v2648
    %v2796 = vadd.f32 %v2795, %v2649
    %v2797 = vadd.f32 %v2796, %v2650
    %v2798 = vadd.f32 %v2797, %v2651
    %v2799 = vadd.f32 %v2798, %v2652
    %v2800 = vadd.f32 %v2799, %v2653
    %v2801 = vadd.f32 %v2800, %v2654
    %v2802 = vadd.f32 %v2801, %v2655
    %v2803 = vadd.f32 %v2802, %v2656
    %v2804 = vadd.f32 %v2803, %v2657
    %v2805 = vrot.slane %v2804, 4
    %v2806 = vadd.f32 %v2804, %v2805
    %v2807 = vrot.slane %v2806, 2
    %v2808 = vadd.f32 %v2806, %v2807
    %v2809 = vrot.slane %v2808, 1
    %v2810 = vadd.f32 %v2808, %v2809
    %v2811 = vadd.f32 %v2658, %v2659
    %v2812 = vadd.f32 %v2811, %v2660
    %v2813 = vadd.f32 %v2812, %v2661
    %v2814 = vadd.f32 %v2813, %v2662
    %v2815 = vadd.f32 %v2814, %v2663
    %v2816 = vadd.f32 %v2815, %v2664
    %v2817 = vadd.f32 %v2816, %v2665
    %v2818 = vadd.f32 %v2817, %v2666
    %v2819 = vadd.f32 %v2818, %v2667
    %v2820 = vadd.f32 %v2819, %v2668
    %v2821 = vadd.f32 %v2820, %v2669
    %v2822 = vadd.f32 %v2821, %v2670
    %v2823 = vadd.f32 %v2822, %v2671
    %v2824 = vadd.f32 %v2823, %v2672
    %v2825 = vadd.f32 %v2824, %v2673
    %v2826 = vrot.slane %v2825, 4
    %v2827 = vadd.f32 %v2825, %v2826
    %v2828 = vrot.slane %v2827, 2
    %v2829 = vadd.f32 %v2827, %v2828
    %v2830 = vrot.slane %v2829, 1
    %v2831 = vadd.f32 %v2829, %v2830
    %v2832 = vadd.f32 %v2674, %v2675
    %v2833 = vadd.f32 %v2832, %v2676
    %v2834 = vadd.f32 %v2833, %v2677
    %v2835 = vadd.f32 %v2834, %v2678
    %v2836 = vadd.f32 %v2835, %v2679
    %v2837 = vadd.f32 %v2836, %v2680
    %v2838 = vadd.f32 %v2837, %v2681
    %v2839 = vadd.f32 %v2838, %v2682
    %v2840 = vadd.f32 %v2839, %v2683
    %v2841 = vadd.f32 %v2840, %v2684
    %v2842 = vadd.f32 %v2841, %v2685
    %v2843 = vadd.f32 %v2842, %v2686
    %v2844 = vadd.f32 %v2843, %v2687
    %v2845 = vadd.f32 %v2844, %v2688
    %v2846 = vadd.f32 %v2845, %v2689
    %v2847 = vrot.slane %v2846, 4
    %v2848 = vadd.f32 %v2846, %v2847
    %v2849 = vrot.slane %v2848, 2
    %v2850 = vadd.f32 %v2848, %v2849
    %v2851 = vrot.slane %v2850, 1
    %v2852 = vadd.f32 %v2850, %v2851
    %v2853 = vadd.f32 %v2690, %v2691
    %v2854 = vadd.f32 %v2853, %v2692
    %v2855 = vadd.f32 %v2854, %v2693
    %v2856 = vadd.f32 %v2855, %v2694
    %v2857 = vadd.f32 %v2856, %v2695
    %v2858 = vadd.f32 %v2857, %v2696
    %v2859 = vadd.f32 %v2858, %v2697
    %v2860 = vadd.f32 %v2859, %v2698
    %v2861 = vadd.f32 %v2860, %v2699
    %v2862 = vadd.f32 %v2861, %v2700
    %v2863 = vadd.f32 %v2862, %v2701
    %v2864 = vadd.f32 %v2863, %v2702
    %v2865 = vadd.f32 %v2864, %v2703
    %v2866 = vadd.f32 %v2865, %v2704
    %v2867 = vadd.f32 %v2866, %v2705
    %v2868 = vrot.slane %v2867, 4
    %v2869 = vadd.f32 %v2867, %v2868
    %v2870 = vrot.slane %v2869, 2
    %v2871 = vadd.f32 %v2869, %v2870
    %v2872 = vrot.slane %v2871, 1
    %v2873 = vadd.f32 %v2871, %v2872
    %v2874 = vld [vmem:[#allocation5] sm:$0xff]
    %2876 = vset.pattern.permute.xlu0 0
    %2877 = vperm.xlu0 %2876, %v1786
    %v2878 = vpop.permute.xlu0 %2877
    %v2880 = vmul.f32 %v2878, %v2874
    %v2889 = vsel %vm1764, %v2747, %v2726
    %v2890 = vsel %vm1766, %v2768, %v2889
    %v2891 = vsel %vm1768, %v2789, %v2890
    %v2892 = vsel %vm1770, %v2810, %v2891
    %v2893 = vsel %vm1772, %v2831, %v2892
    %v2894 = vsel %vm1774, %v2852, %v2893
    %v2895 = vsel %vm1776, %v2873, %v2894
    %v2897 = vadd.f32 %v2880, %v2895
    %2898 = vst [vmem:[#allocation5] sm:$0xff] %v2897
    %2899 = vst.msk [vmem:[#allocation3] sm:$0xff] %vm1800, %v1783
    %s2900 = sshra.s32 %s1352, 7
    %s2901 = sand.u32 %s1352, 127
    %s2902 = scalar_lea.vmem [#allocation15], %s2900
    %2903 = vst [vmem:[%s2902] sm:$0xff] %v1779
    // Predicated region
    $region46: #{tpu_custom_call.1} parent=1 // pred_check
      %p2904 = pneg %p88
    $region47: #{tpu_custom_call.1} parent=1 // pred_check_branch
      %2906 = sbr.rel (%p2904) target = $region49
    $region48: #{tpu_custom_call.1} parent=1 // pred_region
      %v2907 = vld [vmem:[#allocation4] sm:$0xff]
      %v2908 = vrcp.pop %v2907
      %v2909 = vmul.f32 %v2907, %v2908
      %v2910 = vsub.f32 1.0, %v2909
      %v2911 = vmul.f32 %v2908, %v2910
      %v2912 = vadd.f32 %v2908, %v2911
      %vm2913 = vweird.f32 %v2907
      %vm2914 = vweird.f32 %v2908
      %vm2915 = vmor %vm2913, %vm2914
      %v2916 = vsel %vm2915, %v2908, %v2912
      %v2917 = vand.u32 2147483647, %v2907
      %vm2918 = vcmp.eq.f32.partialorder %v2917, 8.507059e+37
      %v2919 = vand.u32 %v2907, 2147483648
      %v2920 = vor.u32 1.1754944e-38, %v2919
      %v2921 = vsel %vm2918, %v2920, %v2916
      %v2922 = vmul.f32 1.0, %v2921
      %v2923 = vld [vmem:[#allocation15] sm:$0xff]
      %v2924 = vld [vmem:[#allocation3] sm:$0xff]
      %2926 = vset.pattern.permute.xlu0 0
      %2927 = vperm.xlu0 %2926, %v2924
      %v2928 = vpop.permute.xlu0 %2927
      %v2930 = vsub.f32 %v2923, %v2928
      %v2931 = vmul.f32 %v2930, 1.442695
      %v2932 = vpow.pop %v2931
      %2934 = vset.pattern.permute.xlu0 0
      %2935 = vperm.xlu0 %2934, %v2922
      %v2936 = vpop.permute.xlu0 %2935
      %v2938 = vmul.f32 %v2932, %v2936
      %2939 = vst [vmem:[#allocation15] sm:$0xff] %v2938
      %v2940 = vld [vmem:[#allocation5] sm:$0xff]
      %v2941 = vmul.f32 %v2940, %v2936
      %2942 = vst [vmem:[#allocation14] sm:$0xff] %v2941
    $region49: #{tpu_custom_call.1} parent=1 // pred_fallthru
      _
    // Predicated region
    $region50: #{tpu_custom_call.1} parent=1 // pred_check
      _
    $region51: #{tpu_custom_call.1} parent=1 // pred_check_branch
      %2944 = sbr.rel (0) target = $region53
    $region52: #{tpu_custom_call.1} parent=1 // pred_region
      %2946 = vsyncadd [#allocation8], 0
      %s2948 = sshll.u32 [#allocation14], 4
      %s2949 = int_to_ptr.vmem [resolvable:$true] %s2948
      %s2950 = sshll.u32 %s6, 4
      %s2951 = int_to_ptr.hbm [resolvable:$true] %s2950
      %2953 = dma.vmem_to_hbm [thread:$0]  %s2949, 128, %s2951, [#allocation8]
    $region53: #{tpu_custom_call.1} parent=1 // pred_fallthru
      _
    // Predicated region
    $region54: #{tpu_custom_call.1} parent=1 // pred_check
      _
    $region55: #{tpu_custom_call.1} parent=1 // pred_check_branch
      %2955 = sbr.rel (0) target = $region57
    $region56: #{tpu_custom_call.1} parent=1 // pred_region
      %2957 = vsyncadd [#allocation16], 0
      %s2959 = sshll.u32 [#allocation15], 4
      %s2960 = int_to_ptr.vmem [resolvable:$true] %s2959
      %s2961 = sshll.u32 %s7, 4
      %s2962 = int_to_ptr.hbm [resolvable:$true] %s2961
      %2964 = dma.vmem_to_hbm [thread:$0]  %s2960, 128, %s2962, [#allocation16]
    $region57: #{tpu_custom_call.1} parent=1 // pred_fallthru
      _
    // Predicated region
    $region58: #{tpu_custom_call.1} parent=1 // pred_check
      _
    $region59: #{tpu_custom_call.1} parent=1 // pred_check_branch
      %2966 = sbr.rel (0) target = $region61
    $region60: #{tpu_custom_call.1} parent=1 // pred_region
      %2968 = dma.done [#allocation8], 128
    $region61: #{tpu_custom_call.1} parent=1 // pred_fallthru
      _
    // Predicated region
    $region62: #{tpu_custom_call.1} parent=1 // pred_check
      _
    $region63: #{tpu_custom_call.1} parent=1 // pred_check_branch
      %2970 = sbr.rel (0) target = $region65
    $region64: #{tpu_custom_call.1} parent=1 // pred_region
      %2972 = dma.done [#allocation16], 128
    $region65: #{tpu_custom_call.1} parent=1 // pred_fallthru
      _
    %2973 = vsyncpa [#allocation7], 1
    %2974 = vsyncpa [#allocation10], 1
    %2975 = vsyncpa [#allocation13], 1
    %2976 = vsyncpa [#allocation8], 1
    %2977 = vsyncpa [#allocation16], 1

</llo_original>
